<compile_context>
chip_gen: v5e
topology: v5e:2x2
jax: 0.10.0
libtpu: 0.0.40
codegen_flags: <defaults>
</compile_context>

<pallas_src>
import functools

import jax
import jax.numpy as jnp
from jax.experimental import pallas as pl
from jax.experimental.pallas import tpu as pltpu


def _round_up(x, m):
    return (x + m - 1) // m * m


def _default_num_batch_tiles():
    """One batch tile per TensorCore: 2 on dual-TC v7x, 1 on single-TC v5e/v6e."""
    try:
        kind = jax.devices()[0].device_kind.lower()
    except Exception:
        # Safe either way: 2 "parallel" tiles only cost ~0.35 us extra on a single TC,
        # while 1 tile on v7x would idle a TensorCore.
        return 2
    return 2 if ("v7" in kind or "7x" in kind) else 1


def mlp_kernel(x_ref, w1_ref, b1_ref, w2_ref, b2_ref, o_ref):
    # Cast x to bf16 in-kernel (VPU filler under the MXU) instead of a wrapper pass.
    x = x_ref[...].astype(jnp.bfloat16)
    # Layer 1: bf16 MXU matmul with f32 accumulation, then bias + ReLU on the VPU.
    h = jnp.dot(x, w1_ref[...], preferred_element_type=jnp.float32)
    h = jnp.maximum(h + b1_ref[...], 0.0)                 # (TB, Hp) + (1, Hp)
    # Layer 2: logits. Cast activations back to bf16 to feed the MXU.
    out = jnp.dot(h.astype(jnp.bfloat16), w2_ref[...],
                  preferred_element_type=jnp.float32)
    o_ref[...] = (out + b2_ref[...]).astype(o_ref.dtype)  # (TB, Cp) + (1, Cp)


def prepare_params(w1, b1, w2, b2):
    """One-time weight prep (call at init, NOT per forward).

    Pads the lane (output) dims of each layer to multiples of 128 so both matmul
    outputs are lane-dense, and casts the weights to bf16 for the MXU.  The
    contraction dim of layer 1 stays at input_dim since x is passed unpadded.
    """
    K, H = w1.shape
    C = w2.shape[1]
    Hp = _round_up(H, 128)
    Cp = _round_up(C, 128)
    w1p = jnp.zeros((K, Hp), jnp.bfloat16).at[:, :H].set(w1.astype(jnp.bfloat16))
    b1p = jnp.zeros((1, Hp), jnp.float32).at[:, :H].set(
        jnp.asarray(b1, jnp.float32).reshape(1, H))
    w2p = jnp.zeros((Hp, Cp), jnp.bfloat16).at[:H, :C].set(w2.astype(jnp.bfloat16))
    b2p = jnp.zeros((1, Cp), jnp.float32).at[:, :C].set(
        jnp.asarray(b2, jnp.float32).reshape(1, C))
    return w1p, b1p, w2p, b2p


@functools.partial(
    jax.jit, static_argnames=("num_cls", "num_batch_tiles", "max_batch_tile"))
def classification_net(x, prepared, *, num_cls,
                       num_batch_tiles=None, max_batch_tile=512):
    """Forward pass of ClassificationNet (single hidden layer) as one Pallas kernel.

    x:        (B, input_dim) f32 (unpadded; cast to bf16 inside the kernel)
    prepared: output of prepare_params() — padded bf16 weights + f32 biases
    returns   (B, num_cls) f32 logits.
    """
    # TODO(synk): hidden_dims with >1 entries (deeper stacks) are not fused here;
    # the module's default [500] single-hidden-layer config is what's implemented.
    w1p, b1p, w2p, b2p = prepared
    B, K = x.shape
    Kw, Hp = w1p.shape
    Cp = w2p.shape[1]
    assert K == Kw, f"input_dim mismatch: x has {K}, w1 has {Kw}"

    # Adaptive batch tiling: one tile per TensorCore (capped), rounded to a multiple
    # of 16 rows (bf16 packs 16 sublanes per vreg).  Per-tile VMEM is ~1-2 MiB, far
    # below every generation's limit, so no further shrinking is ever needed.
    n_tiles = (num_batch_tiles if num_batch_tiles is not None
               else _default_num_batch_tiles())
    n_tiles = max(1, int(n_tiles))
    TB = _round_up(min(pl.cdiv(B, n_tiles), max_batch_tile), 16)
    Bp = _round_up(B, TB)
    # Only pad the batch when it doesn't divide the tile (rare); values don't matter,
    # padded rows are sliced away below.
    xp = x if Bp == B else jnp.pad(x, ((0, Bp - B), (0, 0)))

    out = pl.pallas_call(
        mlp_kernel,
        out_shape=jax.ShapeDtypeStruct((Bp, Cp), jnp.float32),
        grid=(Bp // TB,),
        in_specs=[
            # x tile streams over batch; last dim == full input_dim (no 128-pad needed).
            pl.BlockSpec((TB, K), lambda i: (i, 0)),
            # Weights/biases: constant index_map -> fetched once, VMEM-resident across
            # all batch tiles.  (pl.Buffered(1) could trim the idle second buffer, but
            # VMEM headroom here is >30x, so the extra knob isn't worth it.)
            pl.BlockSpec((K, Hp), lambda i: (0, 0)),
            pl.BlockSpec((1, Hp), lambda i: (0, 0)),
            pl.BlockSpec((Hp, Cp), lambda i: (0, 0)),
            pl.BlockSpec((1, Cp), lambda i: (0, 0)),
        ],
        out_specs=pl.BlockSpec((TB, Cp), lambda i: (i, 0)),
        compiler_params=pltpu.CompilerParams(
            # Batch tiles are independent -> parallel (shards over both TCs on v7x).
            dimension_semantics=("parallel",)),
    )(xp, w1p, b1p, w2p, b2p)

    # Slice away batch padding and the zero-logit fake classes.  Under jit this fuses
    # with whatever consumes the logits; callers that want zero copies can consume the
    # padded (Bp, Cp) buffer directly (padded rows hold b2, padded classes hold 0 —
    # mask them before any softmax).
    return out[:B, :num_cls]


def init_params(key, input_dim, hidden_dims, num_cls):
    """Deterministic init mimicking torch.nn.Linear (uniform +/- 1/sqrt(fan_in)).

    Weights stored as (in_features, out_features) — transpose of PyTorch's (out, in)
    storage — mathematically equivalent for y = x @ W + b.
    """
    dims = [input_dim] + list(hidden_dims) + [num_cls]
    params = []
    for i in range(len(dims) - 1):
        fan_in, fan_out = dims[i], dims[i + 1]
        key, kw, kb = jax.random.split(key, 3)
        bound = 1.0 / jnp.sqrt(jnp.float32(fan_in))
        w = jax.random.uniform(kw, (fan_in, fan_out), jnp.float32, -bound, bound)
        b = jax.random.uniform(kb, (1, fan_out), jnp.float32, -bound, bound)
        params.append((w, b))
    return params


def reference_forward(x, params):
    """Pure-JAX reference using the same bf16-input / f32-accumulate matmuls."""
    h = x
    for i, (w, b) in enumerate(params):
        h = jnp.dot(h.astype(jnp.bfloat16), w.astype(jnp.bfloat16),
                    preferred_element_type=jnp.float32) + b
        if i < len(params) - 1:
            h = jnp.maximum(h, 0.0)
    return h


if __name__ == "__main__":
    # Module defaults: input_dim=400, hidden_dims=[500], num_cls=10.
    input_dim, hidden, num_cls = 400, 500, 10
    key = jax.random.PRNGKey(0)
    kx1, kx2, kp = jax.random.split(key, 3)
    params = init_params(kp, input_dim, [hidden], num_cls)
    (w1, b1), (w2, b2) = params
    prepared = jax.block_until_ready(prepare_params(w1, b1, w2, b2))  # one-time prep

    # Case 1: batch=512 — exercises the multi-tile "parallel" path on v7x
    # (2 tiles of 256) and the single 512-row tile on v5e/v6e.
    x1 = jax.random.normal(kx1, (512, input_dim), jnp.float32)
    out1 = jax.block_until_ready(classification_net(x1, prepared, num_cls=num_cls))
    ref1 = reference_forward(x1, params)
    assert out1.shape == (512, num_cls)
    err1 = float(jnp.max(jnp.abs(out1 - ref1)))
    assert jnp.allclose(out1, ref1, atol=2e-2, rtol=2e-2), \
        f"mismatch vs reference (max abs err {err1})"

    # Case 2: ragged batch=100 — exercises adaptive tile sizing + batch padding path.
    x2 = jax.random.normal(kx2, (100, input_dim), jnp.float32)
    out2 = jax.block_until_ready(classification_net(x2, prepared, num_cls=num_cls))
    ref2 = reference_forward(x2, params)
    assert out2.shape == (100, num_cls)
    err2 = float(jnp.max(jnp.abs(out2 - ref2)))
    assert jnp.allclose(out2, ref2, atol=2e-2, rtol=2e-2), \
        f"mismatch vs reference (max abs err {err2})"

    print("KERNEL_OK")
</pallas_src>

<mosaic_0001>
module attributes {stable_mosaic.version = 11 : i64} {
  func.func @mlp_kernel(%arg0: i32, %arg1: memref<512x400xf32, #tpu.memory_space<vmem>>, %arg2: memref<400x512xbf16, #tpu.memory_space<vmem>>, %arg3: memref<1x512xf32, #tpu.memory_space<vmem>>, %arg4: memref<512x128xbf16, #tpu.memory_space<vmem>>, %arg5: memref<1x128xf32, #tpu.memory_space<vmem>>, %arg6: memref<512x128xf32, #tpu.memory_space<vmem>>) attributes {dimension_semantics = [#tpu.dimension_semantics<parallel>], iteration_bounds = array<i64: 1>, scalar_prefetch = 0 : i64, scratch_operands = 0 : i64, tpu.core_type = #tpu.core_type<tc>, window_params = [{transform_indices = @transform_0, window_bounds = array<i64: 512, 400>}, {pipeline_mode = #tpu.pipeline_mode<synchronous>, transform_indices = @transform_1, window_bounds = array<i64: 400, 512>}, {pipeline_mode = #tpu.pipeline_mode<synchronous>, transform_indices = @transform_2, window_bounds = array<i64: 1, 512>}, {pipeline_mode = #tpu.pipeline_mode<synchronous>, transform_indices = @transform_3, window_bounds = array<i64: 512, 128>}, {pipeline_mode = #tpu.pipeline_mode<synchronous>, transform_indices = @transform_4, window_bounds = array<i64: 1, 128>}, {transform_indices = @transform_5, window_bounds = array<i64: 512, 128>}]} {
    %c0 = arith.constant 0 : index
    %c0_0 = arith.constant 0 : index
    %0 = vector.load %arg1[%c0, %c0_0] : memref<512x400xf32, #tpu.memory_space<vmem>>, vector<512x400xf32>
    %1 = arith.truncf %0 : vector<512x400xf32> to vector<512x400xbf16>
    %c0_1 = arith.constant 0 : index
    %c0_2 = arith.constant 0 : index
    %2 = vector.load %arg2[%c0_1, %c0_2] : memref<400x512xbf16, #tpu.memory_space<vmem>>, vector<400x512xbf16>
    %cst = arith.constant dense<0.000000e+00> : vector<512x512xf32>
    %3 = tpu.matmul %1, %2, %cst {dimension_numbers = #tpu.dot_dimension_numbers<[1], [0], [0], [1], [0, 0, 1, 1], [], []>} : vector<512x400xbf16>, vector<400x512xbf16>, vector<512x512xf32> -> vector<512x512xf32>
    %c0_3 = arith.constant 0 : index
    %c0_4 = arith.constant 0 : index
    %4 = vector.load %arg3[%c0_3, %c0_4] : memref<1x512xf32, #tpu.memory_space<vmem>>, vector<1x512xf32>
    %5 = vector.broadcast %4 : vector<1x512xf32> to vector<512x512xf32>
    %6 = arith.addf %3, %5 : vector<512x512xf32>
    %cst_5 = arith.constant 0.000000e+00 : f32
    %7 = vector.broadcast %cst_5 : f32 to vector<512x512xf32>
    %8 = arith.maximumf %6, %7 : vector<512x512xf32>
    %9 = arith.truncf %8 : vector<512x512xf32> to vector<512x512xbf16>
    %c0_6 = arith.constant 0 : index
    %c0_7 = arith.constant 0 : index
    %10 = vector.load %arg4[%c0_6, %c0_7] : memref<512x128xbf16, #tpu.memory_space<vmem>>, vector<512x128xbf16>
    %cst_8 = arith.constant dense<0.000000e+00> : vector<512x128xf32>
    %11 = tpu.matmul %9, %10, %cst_8 {dimension_numbers = #tpu.dot_dimension_numbers<[1], [0], [0], [1], [0, 0, 1, 1], [], []>} : vector<512x512xbf16>, vector<512x128xbf16>, vector<512x128xf32> -> vector<512x128xf32>
    %c0_9 = arith.constant 0 : index
    %c0_10 = arith.constant 0 : index
    %12 = vector.load %arg5[%c0_9, %c0_10] : memref<1x128xf32, #tpu.memory_space<vmem>>, vector<1x128xf32>
    %13 = vector.broadcast %12 : vector<1x128xf32> to vector<512x128xf32>
    %14 = arith.addf %11, %13 : vector<512x128xf32>
    %c0_11 = arith.constant 0 : index
    %c0_12 = arith.constant 0 : index
    %15 = vector.load %arg6[%c0_11, %c0_12] : memref<512x128xf32, #tpu.memory_space<vmem>>, vector<512x128xf32>
    tpu.vector_store %arg6[%c0_11, %c0_12], %14 {strides = array<i32>} : memref<512x128xf32, #tpu.memory_space<vmem>>, vector<512x128xf32>,
    return
  }
  func.func @transform_0(%arg0: i32) -> (i32, i32) {
    %c0_i32 = arith.constant 0 : i32
    %c0_i32_0 = arith.constant 0 : i32
    return %arg0, %c0_i32 : i32, i32
  }
  func.func @transform_1(%arg0: i32) -> (i32, i32) {
    %c0_i32 = arith.constant 0 : i32
    %c0_i32_0 = arith.constant 0 : i32
    %c0_i32_1 = arith.constant 0 : i32
    return %c0_i32, %c0_i32_0 : i32, i32
  }
  func.func @transform_2(%arg0: i32) -> (i32, i32) {
    %c0_i32 = arith.constant 0 : i32
    %c0_i32_0 = arith.constant 0 : i32
    %c0_i32_1 = arith.constant 0 : i32
    return %c0_i32, %c0_i32_0 : i32, i32
  }
  func.func @transform_3(%arg0: i32) -> (i32, i32) {
    %c0_i32 = arith.constant 0 : i32
    %c0_i32_0 = arith.constant 0 : i32
    %c0_i32_1 = arith.constant 0 : i32
    return %c0_i32, %c0_i32_0 : i32, i32
  }
  func.func @transform_4(%arg0: i32) -> (i32, i32) {
    %c0_i32 = arith.constant 0 : i32
    %c0_i32_0 = arith.constant 0 : i32
    %c0_i32_1 = arith.constant 0 : i32
    return %c0_i32, %c0_i32_0 : i32, i32
  }
  func.func @transform_5(%arg0: i32) -> (i32, i32) {
    %c0_i32 = arith.constant 0 : i32
    %c0_i32_0 = arith.constant 0 : i32
    return %arg0, %c0_i32 : i32, i32
  }
}

</mosaic_0001>

<llo_original>
// kernel: classification_net.1
$region0: #{classification_net.1}
  #allocation0 [shape = 'u32[]', space=smem, size = 0x4, offset = 0x4, fixed_abs, tag = 'smem constant byte address 0x4 - core index']
  #allocation1 [shape = 'u32[72,128]{1,0:T(1,128)}', space=vmem, size = 0x9000, scoped, tag = 'internal scratch']
  %s0 = inlined_call_operand.vmem [shape: f32[512,400], index: 0, kind: input, shape index: {}]
  %s1 = inlined_call_operand.vmem [shape: bf16[400,512], index: 1, kind: input, shape index: {}]
  %s2 = inlined_call_operand.vmem [shape: f32[1,512], index: 2, kind: input, shape index: {}]
  %s3 = inlined_call_operand.vmem [shape: bf16[512,128], index: 3, kind: input, shape index: {}]
  %s4 = inlined_call_operand.vmem [shape: f32[1,128], index: 4, kind: input, shape index: {}]
  %s5 = inlined_call_operand.vmem [shape: f32[512,128], index: 5, kind: output, shape index: {}]
  %s6 = sld [smem:[#allocation0]]
  $region30: #{classification_net.1} parent=0
    _
  %s8 = ssub.s32 1, %s6
  %s9 = scalar_select 0, %s8, %s6
  // Predicated region
  $region2: #{classification_net.1} parent=0 // pred_check
    _
  $region3: #{classification_net.1} parent=0 // pred_check_branch
    %11 = sbr.rel (0) target = $region5
  $region4: #{classification_net.1} parent=0 // pred_region
    _
  $region5: #{classification_net.1} parent=0 // pred_fallthru
    _
  // Predicated region
  $region6: #{classification_net.1} parent=0 // pred_check
    _
  $region7: #{classification_net.1} parent=0 // pred_check_branch
    %13 = sbr.rel (0) target = $region9
  $region8: #{classification_net.1} parent=0 // pred_region
    _
  $region9: #{classification_net.1} parent=0 // pred_fallthru
    _
  // Predicated region
  $region10: #{classification_net.1} parent=0 // pred_check
    _
  $region11: #{classification_net.1} parent=0 // pred_check_branch
    %15 = sbr.rel (0) target = $region13
  $region12: #{classification_net.1} parent=0 // pred_region
    _
  $region13: #{classification_net.1} parent=0 // pred_fallthru
    _
  // Predicated region
  $region14: #{classification_net.1} parent=0 // pred_check
    _
  $region15: #{classification_net.1} parent=0 // pred_check_branch
    %17 = sbr.rel (0) target = $region17
  $region16: #{classification_net.1} parent=0 // pred_region
    _
  $region17: #{classification_net.1} parent=0 // pred_fallthru
    _
  // Predicated region
  $region18: #{classification_net.1} parent=0 // pred_check
    _
  $region19: #{classification_net.1} parent=0 // pred_check_branch
    %19 = sbr.rel (0) target = $region21
  $region20: #{classification_net.1} parent=0 // pred_region
    _
  $region21: #{classification_net.1} parent=0 // pred_fallthru
    _
  %v21 = vld [vmem:[%s0] sm:$0xff]
  %v22 = vld [vmem:[%s0 + $0x8] sm:$0xff]
  %v23 = vld [vmem:[%s0 + $0x10] sm:$0xff]
  %v24 = vld [vmem:[%s0 + $0x18] sm:$0xff]
  %v25 = vld [vmem:[%s0 + $0x20] sm:$0xff]
  %v26 = vld [vmem:[%s0 + $0x28] sm:$0xff]
  %v27 = vld [vmem:[%s0 + $0x30] sm:$0xff]
  %v28 = vld [vmem:[%s0 + $0x38] sm:$0xff]
  %v29 = vld [vmem:[%s0 + $0x40] sm:$0xff]
  %v30 = vld [vmem:[%s0 + $0x48] sm:$0xff]
  %v31 = vld [vmem:[%s0 + $0x50] sm:$0xff]
  %v32 = vld [vmem:[%s0 + $0x58] sm:$0xff]
  %v33 = vld [vmem:[%s0 + $0x60] sm:$0xff]
  %v34 = vld [vmem:[%s0 + $0x68] sm:$0xff]
  %v35 = vld [vmem:[%s0 + $0x70] sm:$0xff]
  %v36 = vld [vmem:[%s0 + $0x78] sm:$0xff]
  %v37 = vld [vmem:[%s0 + $0x80] sm:$0xff]
  %v38 = vld [vmem:[%s0 + $0x88] sm:$0xff]
  %v39 = vld [vmem:[%s0 + $0x90] sm:$0xff]
  %v40 = vld [vmem:[%s0 + $0x98] sm:$0xff]
  %v41 = vld [vmem:[%s0 + $0xa0] sm:$0xff]
  %v42 = vld [vmem:[%s0 + $0xa8] sm:$0xff]
  %v43 = vld [vmem:[%s0 + $0xb0] sm:$0xff]
  %v44 = vld [vmem:[%s0 + $0xb8] sm:$0xff]
  %v45 = vld [vmem:[%s0 + $0xc0] sm:$0xff]
  %v46 = vld [vmem:[%s0 + $0xc8] sm:$0xff]
  %v47 = vld [vmem:[%s0 + $0xd0] sm:$0xff]
  %v48 = vld [vmem:[%s0 + $0xd8] sm:$0xff]
  %v49 = vld [vmem:[%s0 + $0xe0] sm:$0xff]
  %v50 = vld [vmem:[%s0 + $0xe8] sm:$0xff]
  %v51 = vld [vmem:[%s0 + $0xf0] sm:$0xff]
  %v52 = vld [vmem:[%s0 + $0xf8] sm:$0xff]
  %v53 = vld [vmem:[%s0 + $0x100] sm:$0xff]
  %v54 = vld [vmem:[%s0 + $0x108] sm:$0xff]
  %v55 = vld [vmem:[%s0 + $0x110] sm:$0xff]
  %v56 = vld [vmem:[%s0 + $0x118] sm:$0xff]
  %v57 = vld [vmem:[%s0 + $0x120] sm:$0xff]
  %v58 = vld [vmem:[%s0 + $0x128] sm:$0xff]
  %v59 = vld [vmem:[%s0 + $0x130] sm:$0xff]
  %v60 = vld [vmem:[%s0 + $0x138] sm:$0xff]
  %v61 = vld [vmem:[%s0 + $0x140] sm:$0xff]
  %v62 = vld [vmem:[%s0 + $0x148] sm:$0xff]
  %v63 = vld [vmem:[%s0 + $0x150] sm:$0xff]
  %v64 = vld [vmem:[%s0 + $0x158] sm:$0xff]
  %v65 = vld [vmem:[%s0 + $0x160] sm:$0xff]
  %v66 = vld [vmem:[%s0 + $0x168] sm:$0xff]
  %v67 = vld [vmem:[%s0 + $0x170] sm:$0xff]
  %v68 = vld [vmem:[%s0 + $0x178] sm:$0xff]
  %v69 = vld [vmem:[%s0 + $0x180] sm:$0xff]
  %v70 = vld [vmem:[%s0 + $0x188] sm:$0xff]
  %v71 = vld [vmem:[%s0 + $0x190] sm:$0xff]
  %v72 = vld [vmem:[%s0 + $0x198] sm:$0xff]
  %v73 = vld [vmem:[%s0 + $0x1a0] sm:$0xff]
  %v74 = vld [vmem:[%s0 + $0x1a8] sm:$0xff]
  %v75 = vld [vmem:[%s0 + $0x1b0] sm:$0xff]
  %v76 = vld [vmem:[%s0 + $0x1b8] sm:$0xff]
  %v77 = vld [vmem:[%s0 + $0x1c0] sm:$0xff]
  %v78 = vld [vmem:[%s0 + $0x1c8] sm:$0xff]
  %v79 = vld [vmem:[%s0 + $0x1d0] sm:$0xff]
  %v80 = vld [vmem:[%s0 + $0x1d8] sm:$0xff]
  %v81 = vld [vmem:[%s0 + $0x1e0] sm:$0xff]
  %v82 = vld [vmem:[%s0 + $0x1e8] sm:$0xff]
  %v83 = vld [vmem:[%s0 + $0x1f0] sm:$0xff]
  %v84 = vld [vmem:[%s0 + $0x1f8] sm:$0xff]
  %v85 = vld [vmem:[%s0 + $0x200] sm:$0xff]
  %v86 = vld [vmem:[%s0 + $0x208] sm:$0xff]
  %v87 = vld [vmem:[%s0 + $0x210] sm:$0xff]
  %v88 = vld [vmem:[%s0 + $0x218] sm:$0xff]
  %v89 = vld [vmem:[%s0 + $0x220] sm:$0xff]
  %v90 = vld [vmem:[%s0 + $0x228] sm:$0xff]
  %v91 = vld [vmem:[%s0 + $0x230] sm:$0xff]
  %v92 = vld [vmem:[%s0 + $0x238] sm:$0xff]
  %v93 = vld [vmem:[%s0 + $0x240] sm:$0xff]
  %v94 = vld [vmem:[%s0 + $0x248] sm:$0xff]
  %v95 = vld [vmem:[%s0 + $0x250] sm:$0xff]
  %v96 = vld [vmem:[%s0 + $0x258] sm:$0xff]
  %v97 = vld [vmem:[%s0 + $0x260] sm:$0xff]
  %v98 = vld [vmem:[%s0 + $0x268] sm:$0xff]
  %v99 = vld [vmem:[%s0 + $0x270] sm:$0xff]
  %v100 = vld [vmem:[%s0 + $0x278] sm:$0xff]
  %v101 = vld [vmem:[%s0 + $0x280] sm:$0xff]
  %v102 = vld [vmem:[%s0 + $0x288] sm:$0xff]
  %v103 = vld [vmem:[%s0 + $0x290] sm:$0xff]
  %v104 = vld [vmem:[%s0 + $0x298] sm:$0xff]
  %v105 = vld [vmem:[%s0 + $0x2a0] sm:$0xff]
  %v106 = vld [vmem:[%s0 + $0x2a8] sm:$0xff]
  %v107 = vld [vmem:[%s0 + $0x2b0] sm:$0xff]
  %v108 = vld [vmem:[%s0 + $0x2b8] sm:$0xff]
  %v109 = vld [vmem:[%s0 + $0x2c0] sm:$0xff]
  %v110 = vld [vmem:[%s0 + $0x2c8] sm:$0xff]
  %v111 = vld [vmem:[%s0 + $0x2d0] sm:$0xff]
  %v112 = vld [vmem:[%s0 + $0x2d8] sm:$0xff]
  %v113 = vld [vmem:[%s0 + $0x2e0] sm:$0xff]
  %v114 = vld [vmem:[%s0 + $0x2e8] sm:$0xff]
  %v115 = vld [vmem:[%s0 + $0x2f0] sm:$0xff]
  %v116 = vld [vmem:[%s0 + $0x2f8] sm:$0xff]
  %v117 = vld [vmem:[%s0 + $0x300] sm:$0xff]
  %v118 = vld [vmem:[%s0 + $0x308] sm:$0xff]
  %v119 = vld [vmem:[%s0 + $0x310] sm:$0xff]
  %v120 = vld [vmem:[%s0 + $0x318] sm:$0xff]
  %v121 = vld [vmem:[%s0 + $0x320] sm:$0xff]
  %v122 = vld [vmem:[%s0 + $0x328] sm:$0xff]
  %v123 = vld [vmem:[%s0 + $0x330] sm:$0xff]
  %v124 = vld [vmem:[%s0 + $0x338] sm:$0xff]
  %v125 = vld [vmem:[%s0 + $0x340] sm:$0xff]
  %v126 = vld [vmem:[%s0 + $0x348] sm:$0xff]
  %v127 = vld [vmem:[%s0 + $0x350] sm:$0xff]
  %v128 = vld [vmem:[%s0 + $0x358] sm:$0xff]
  %v129 = vld [vmem:[%s0 + $0x360] sm:$0xff]
  %v130 = vld [vmem:[%s0 + $0x368] sm:$0xff]
  %v131 = vld [vmem:[%s0 + $0x370] sm:$0xff]
  %v132 = vld [vmem:[%s0 + $0x378] sm:$0xff]
  %v133 = vld [vmem:[%s0 + $0x380] sm:$0xff]
  %v134 = vld [vmem:[%s0 + $0x388] sm:$0xff]
  %v135 = vld [vmem:[%s0 + $0x390] sm:$0xff]
  %v136 = vld [vmem:[%s0 + $0x398] sm:$0xff]
  %v137 = vld [vmem:[%s0 + $0x3a0] sm:$0xff]
  %v138 = vld [vmem:[%s0 + $0x3a8] sm:$0xff]
  %v139 = vld [vmem:[%s0 + $0x3b0] sm:$0xff]
  %v140 = vld [vmem:[%s0 + $0x3b8] sm:$0xff]
  %v141 = vld [vmem:[%s0 + $0x3c0] sm:$0xff]
  %v142 = vld [vmem:[%s0 + $0x3c8] sm:$0xff]
  %v143 = vld [vmem:[%s0 + $0x3d0] sm:$0xff]
  %v144 = vld [vmem:[%s0 + $0x3d8] sm:$0xff]
  %v145 = vld [vmem:[%s0 + $0x3e0] sm:$0xff]
  %v146 = vld [vmem:[%s0 + $0x3e8] sm:$0xff]
  %v147 = vld [vmem:[%s0 + $0x3f0] sm:$0xff]
  %v148 = vld [vmem:[%s0 + $0x3f8] sm:$0xff]
  %v149 = vld [vmem:[%s0 + $0x400] sm:$0xff]
  %v150 = vld [vmem:[%s0 + $0x408] sm:$0xff]
  %v151 = vld [vmem:[%s0 + $0x410] sm:$0xff]
  %v152 = vld [vmem:[%s0 + $0x418] sm:$0xff]
  %v153 = vld [vmem:[%s0 + $0x420] sm:$0xff]
  %v154 = vld [vmem:[%s0 + $0x428] sm:$0xff]
  %v155 = vld [vmem:[%s0 + $0x430] sm:$0xff]
  %v156 = vld [vmem:[%s0 + $0x438] sm:$0xff]
  %v157 = vld [vmem:[%s0 + $0x440] sm:$0xff]
  %v158 = vld [vmem:[%s0 + $0x448] sm:$0xff]
  %v159 = vld [vmem:[%s0 + $0x450] sm:$0xff]
  %v160 = vld [vmem:[%s0 + $0x458] sm:$0xff]
  %v161 = vld [vmem:[%s0 + $0x460] sm:$0xff]
  %v162 = vld [vmem:[%s0 + $0x468] sm:$0xff]
  %v163 = vld [vmem:[%s0 + $0x470] sm:$0xff]
  %v164 = vld [vmem:[%s0 + $0x478] sm:$0xff]
  %v165 = vld [vmem:[%s0 + $0x480] sm:$0xff]
  %v166 = vld [vmem:[%s0 + $0x488] sm:$0xff]
  %v167 = vld [vmem:[%s0 + $0x490] sm:$0xff]
  %v168 = vld [vmem:[%s0 + $0x498] sm:$0xff]
  %v169 = vld [vmem:[%s0 + $0x4a0] sm:$0xff]
  %v170 = vld [vmem:[%s0 + $0x4a8] sm:$0xff]
  %v171 = vld [vmem:[%s0 + $0x4b0] sm:$0xff]
  %v172 = vld [vmem:[%s0 + $0x4b8] sm:$0xff]
  %v173 = vld [vmem:[%s0 + $0x4c0] sm:$0xff]
  %v174 = vld [vmem:[%s0 + $0x4c8] sm:$0xff]
  %v175 = vld [vmem:[%s0 + $0x4d0] sm:$0xff]
  %v176 = vld [vmem:[%s0 + $0x4d8] sm:$0xff]
  %v177 = vld [vmem:[%s0 + $0x4e0] sm:$0xff]
  %v178 = vld [vmem:[%s0 + $0x4e8] sm:$0xff]
  %v179 = vld [vmem:[%s0 + $0x4f0] sm:$0xff]
  %v180 = vld [vmem:[%s0 + $0x4f8] sm:$0xff]
  %v181 = vld [vmem:[%s0 + $0x500] sm:$0xff]
  %v182 = vld [vmem:[%s0 + $0x508] sm:$0xff]
  %v183 = vld [vmem:[%s0 + $0x510] sm:$0xff]
  %v184 = vld [vmem:[%s0 + $0x518] sm:$0xff]
  %v185 = vld [vmem:[%s0 + $0x520] sm:$0xff]
  %v186 = vld [vmem:[%s0 + $0x528] sm:$0xff]
  %v187 = vld [vmem:[%s0 + $0x530] sm:$0xff]
  %v188 = vld [vmem:[%s0 + $0x538] sm:$0xff]
  %v189 = vld [vmem:[%s0 + $0x540] sm:$0xff]
  %v190 = vld [vmem:[%s0 + $0x548] sm:$0xff]
  %v191 = vld [vmem:[%s0 + $0x550] sm:$0xff]
  %v192 = vld [vmem:[%s0 + $0x558] sm:$0xff]
  %v193 = vld [vmem:[%s0 + $0x560] sm:$0xff]
  %v194 = vld [vmem:[%s0 + $0x568] sm:$0xff]
  %v195 = vld [vmem:[%s0 + $0x570] sm:$0xff]
  %v196 = vld [vmem:[%s0 + $0x578] sm:$0xff]
  %v197 = vld [vmem:[%s0 + $0x580] sm:$0xff]
  %v198 = vld [vmem:[%s0 + $0x588] sm:$0xff]
  %v199 = vld [vmem:[%s0 + $0x590] sm:$0xff]
  %v200 = vld [vmem:[%s0 + $0x598] sm:$0xff]
  %v201 = vld [vmem:[%s0 + $0x5a0] sm:$0xff]
  %v202 = vld [vmem:[%s0 + $0x5a8] sm:$0xff]
  %v203 = vld [vmem:[%s0 + $0x5b0] sm:$0xff]
  %v204 = vld [vmem:[%s0 + $0x5b8] sm:$0xff]
  %v205 = vld [vmem:[%s0 + $0x5c0] sm:$0xff]
  %v206 = vld [vmem:[%s0 + $0x5c8] sm:$0xff]
  %v207 = vld [vmem:[%s0 + $0x5d0] sm:$0xff]
  %v208 = vld [vmem:[%s0 + $0x5d8] sm:$0xff]
  %v209 = vld [vmem:[%s0 + $0x5e0] sm:$0xff]
  %v210 = vld [vmem:[%s0 + $0x5e8] sm:$0xff]
  %v211 = vld [vmem:[%s0 + $0x5f0] sm:$0xff]
  %v212 = vld [vmem:[%s0 + $0x5f8] sm:$0xff]
  %v213 = vld [vmem:[%s0 + $0x600] sm:$0xff]
  %v214 = vld [vmem:[%s0 + $0x608] sm:$0xff]
  %v215 = vld [vmem:[%s0 + $0x610] sm:$0xff]
  %v216 = vld [vmem:[%s0 + $0x618] sm:$0xff]
  %v217 = vld [vmem:[%s0 + $0x620] sm:$0xff]
  %v218 = vld [vmem:[%s0 + $0x628] sm:$0xff]
  %v219 = vld [vmem:[%s0 + $0x630] sm:$0xff]
  %v220 = vld [vmem:[%s0 + $0x638] sm:$0xff]
  %v221 = vld [vmem:[%s0 + $0x640] sm:$0xff]
  %v222 = vld [vmem:[%s0 + $0x648] sm:$0xff]
  %v223 = vld [vmem:[%s0 + $0x650] sm:$0xff]
  %v224 = vld [vmem:[%s0 + $0x658] sm:$0xff]
  %v225 = vld [vmem:[%s0 + $0x660] sm:$0xff]
  %v226 = vld [vmem:[%s0 + $0x668] sm:$0xff]
  %v227 = vld [vmem:[%s0 + $0x670] sm:$0xff]
  %v228 = vld [vmem:[%s0 + $0x678] sm:$0xff]
  %v229 = vld [vmem:[%s0 + $0x680] sm:$0xff]
  %v230 = vld [vmem:[%s0 + $0x688] sm:$0xff]
  %v231 = vld [vmem:[%s0 + $0x690] sm:$0xff]
  %v232 = vld [vmem:[%s0 + $0x698] sm:$0xff]
  %v233 = vld [vmem:[%s0 + $0x6a0] sm:$0xff]
  %v234 = vld [vmem:[%s0 + $0x6a8] sm:$0xff]
  %v235 = vld [vmem:[%s0 + $0x6b0] sm:$0xff]
  %v236 = vld [vmem:[%s0 + $0x6b8] sm:$0xff]
  %v237 = vld [vmem:[%s0 + $0x6c0] sm:$0xff]
  %v238 = vld [vmem:[%s0 + $0x6c8] sm:$0xff]
  %v239 = vld [vmem:[%s0 + $0x6d0] sm:$0xff]
  %v240 = vld [vmem:[%s0 + $0x6d8] sm:$0xff]
  %v241 = vld [vmem:[%s0 + $0x6e0] sm:$0xff]
  %v242 = vld [vmem:[%s0 + $0x6e8] sm:$0xff]
  %v243 = vld [vmem:[%s0 + $0x6f0] sm:$0xff]
  %v244 = vld [vmem:[%s0 + $0x6f8] sm:$0xff]
  %v245 = vld [vmem:[%s0 + $0x700] sm:$0xff]
  %v246 = vld [vmem:[%s0 + $0x708] sm:$0xff]
  %v247 = vld [vmem:[%s0 + $0x710] sm:$0xff]
  %v248 = vld [vmem:[%s0 + $0x718] sm:$0xff]
  %v249 = vld [vmem:[%s0 + $0x720] sm:$0xff]
  %v250 = vld [vmem:[%s0 + $0x728] sm:$0xff]
  %v251 = vld [vmem:[%s0 + $0x730] sm:$0xff]
  %v252 = vld [vmem:[%s0 + $0x738] sm:$0xff]
  %v253 = vld [vmem:[%s0 + $0x740] sm:$0xff]
  %v254 = vld [vmem:[%s0 + $0x748] sm:$0xff]
  %v255 = vld [vmem:[%s0 + $0x750] sm:$0xff]
  %v256 = vld [vmem:[%s0 + $0x758] sm:$0xff]
  %v257 = vld [vmem:[%s0 + $0x760] sm:$0xff]
  %v258 = vld [vmem:[%s0 + $0x768] sm:$0xff]
  %v259 = vld [vmem:[%s0 + $0x770] sm:$0xff]
  %v260 = vld [vmem:[%s0 + $0x778] sm:$0xff]
  %v261 = vld [vmem:[%s0 + $0x780] sm:$0xff]
  %v262 = vld [vmem:[%s0 + $0x788] sm:$0xff]
  %v263 = vld [vmem:[%s0 + $0x790] sm:$0xff]
  %v264 = vld [vmem:[%s0 + $0x798] sm:$0xff]
  %v265 = vld [vmem:[%s0 + $0x7a0] sm:$0xff]
  %v266 = vld [vmem:[%s0 + $0x7a8] sm:$0xff]
  %v267 = vld [vmem:[%s0 + $0x7b0] sm:$0xff]
  %v268 = vld [vmem:[%s0 + $0x7b8] sm:$0xff]
  %v269 = vld [vmem:[%s0 + $0x7c0] sm:$0xff]
  %v270 = vld [vmem:[%s0 + $0x7c8] sm:$0xff]
  %v271 = vld [vmem:[%s0 + $0x7d0] sm:$0xff]
  %v272 = vld [vmem:[%s0 + $0x7d8] sm:$0xff]
  %v273 = vld [vmem:[%s0 + $0x7e0] sm:$0xff]
  %v274 = vld [vmem:[%s0 + $0x7e8] sm:$0xff]
  %v275 = vld [vmem:[%s0 + $0x7f0] sm:$0xff]
  %v276 = vld [vmem:[%s0 + $0x7f8] sm:$0xff]
  %v277 = vpack.c.bf16 %v25, %v21
  %v278 = vpack.c.bf16 %v26, %v22
  %v279 = vpack.c.bf16 %v27, %v23
  %v280 = vpack.c.bf16 %v28, %v24
  %v281 = vpack.c.bf16 %v33, %v29
  %v282 = vpack.c.bf16 %v34, %v30
  %v283 = vpack.c.bf16 %v35, %v31
  %v284 = vpack.c.bf16 %v36, %v32
  %v285 = vpack.c.bf16 %v41, %v37
  %v286 = vpack.c.bf16 %v42, %v38
  %v287 = vpack.c.bf16 %v43, %v39
  %v288 = vpack.c.bf16 %v44, %v40
  %v289 = vpack.c.bf16 %v49, %v45
  %v290 = vpack.c.bf16 %v50, %v46
  %v291 = vpack.c.bf16 %v51, %v47
  %v292 = vpack.c.bf16 %v52, %v48
  %v293 = vpack.c.bf16 %v57, %v53
  %v294 = vpack.c.bf16 %v58, %v54
  %v295 = vpack.c.bf16 %v59, %v55
  %v296 = vpack.c.bf16 %v60, %v56
  %v297 = vpack.c.bf16 %v65, %v61
  %v298 = vpack.c.bf16 %v66, %v62
  %v299 = vpack.c.bf16 %v67, %v63
  %v300 = vpack.c.bf16 %v68, %v64
  %v301 = vpack.c.bf16 %v73, %v69
  %v302 = vpack.c.bf16 %v74, %v70
  %v303 = vpack.c.bf16 %v75, %v71
  %v304 = vpack.c.bf16 %v76, %v72
  %v305 = vpack.c.bf16 %v81, %v77
  %v306 = vpack.c.bf16 %v82, %v78
  %v307 = vpack.c.bf16 %v83, %v79
  %v308 = vpack.c.bf16 %v84, %v80
  %v309 = vpack.c.bf16 %v89, %v85
  %v310 = vpack.c.bf16 %v90, %v86
  %v311 = vpack.c.bf16 %v91, %v87
  %v312 = vpack.c.bf16 %v92, %v88
  %v313 = vpack.c.bf16 %v97, %v93
  %v314 = vpack.c.bf16 %v98, %v94
  %v315 = vpack.c.bf16 %v99, %v95
  %v316 = vpack.c.bf16 %v100, %v96
  %v317 = vpack.c.bf16 %v105, %v101
  %v318 = vpack.c.bf16 %v106, %v102
  %v319 = vpack.c.bf16 %v107, %v103
  %v320 = vpack.c.bf16 %v108, %v104
  %v321 = vpack.c.bf16 %v113, %v109
  %v322 = vpack.c.bf16 %v114, %v110
  %v323 = vpack.c.bf16 %v115, %v111
  %v324 = vpack.c.bf16 %v116, %v112
  %v325 = vpack.c.bf16 %v121, %v117
  %v326 = vpack.c.bf16 %v122, %v118
  %v327 = vpack.c.bf16 %v123, %v119
  %v328 = vpack.c.bf16 %v124, %v120
  %v329 = vpack.c.bf16 %v129, %v125
  %v330 = vpack.c.bf16 %v130, %v126
  %v331 = vpack.c.bf16 %v131, %v127
  %v332 = vpack.c.bf16 %v132, %v128
  %v333 = vpack.c.bf16 %v137, %v133
  %v334 = vpack.c.bf16 %v138, %v134
  %v335 = vpack.c.bf16 %v139, %v135
  %v336 = vpack.c.bf16 %v140, %v136
  %v337 = vpack.c.bf16 %v145, %v141
  %v338 = vpack.c.bf16 %v146, %v142
  %v339 = vpack.c.bf16 %v147, %v143
  %v340 = vpack.c.bf16 %v148, %v144
  %v341 = vpack.c.bf16 %v153, %v149
  %v342 = vpack.c.bf16 %v154, %v150
  %v343 = vpack.c.bf16 %v155, %v151
  %v344 = vpack.c.bf16 %v156, %v152
  %v345 = vpack.c.bf16 %v161, %v157
  %v346 = vpack.c.bf16 %v162, %v158
  %v347 = vpack.c.bf16 %v163, %v159
  %v348 = vpack.c.bf16 %v164, %v160
  %v349 = vpack.c.bf16 %v169, %v165
  %v350 = vpack.c.bf16 %v170, %v166
  %v351 = vpack.c.bf16 %v171, %v167
  %v352 = vpack.c.bf16 %v172, %v168
  %v353 = vpack.c.bf16 %v177, %v173
  %v354 = vpack.c.bf16 %v178, %v174
  %v355 = vpack.c.bf16 %v179, %v175
  %v356 = vpack.c.bf16 %v180, %v176
  %v357 = vpack.c.bf16 %v185, %v181
  %v358 = vpack.c.bf16 %v186, %v182
  %v359 = vpack.c.bf16 %v187, %v183
  %v360 = vpack.c.bf16 %v188, %v184
  %v361 = vpack.c.bf16 %v193, %v189
  %v362 = vpack.c.bf16 %v194, %v190
  %v363 = vpack.c.bf16 %v195, %v191
  %v364 = vpack.c.bf16 %v196, %v192
  %v365 = vpack.c.bf16 %v201, %v197
  %v366 = vpack.c.bf16 %v202, %v198
  %v367 = vpack.c.bf16 %v203, %v199
  %v368 = vpack.c.bf16 %v204, %v200
  %v369 = vpack.c.bf16 %v209, %v205
  %v370 = vpack.c.bf16 %v210, %v206
  %v371 = vpack.c.bf16 %v211, %v207
  %v372 = vpack.c.bf16 %v212, %v208
  %v373 = vpack.c.bf16 %v217, %v213
  %v374 = vpack.c.bf16 %v218, %v214
  %v375 = vpack.c.bf16 %v219, %v215
  %v376 = vpack.c.bf16 %v220, %v216
  %v377 = vpack.c.bf16 %v225, %v221
  %v378 = vpack.c.bf16 %v226, %v222
  %v379 = vpack.c.bf16 %v227, %v223
  %v380 = vpack.c.bf16 %v228, %v224
  %v381 = vpack.c.bf16 %v233, %v229
  %v382 = vpack.c.bf16 %v234, %v230
  %v383 = vpack.c.bf16 %v235, %v231
  %v384 = vpack.c.bf16 %v236, %v232
  %v385 = vpack.c.bf16 %v241, %v237
  %v386 = vpack.c.bf16 %v242, %v238
  %v387 = vpack.c.bf16 %v243, %v239
  %v388 = vpack.c.bf16 %v244, %v240
  %v389 = vpack.c.bf16 %v249, %v245
  %v390 = vpack.c.bf16 %v250, %v246
  %v391 = vpack.c.bf16 %v251, %v247
  %v392 = vpack.c.bf16 %v252, %v248
  %v393 = vpack.c.bf16 %v257, %v253
  %v394 = vpack.c.bf16 %v258, %v254
  %v395 = vpack.c.bf16 %v259, %v255
  %v396 = vpack.c.bf16 %v260, %v256
  %v397 = vpack.c.bf16 %v265, %v261
  %v398 = vpack.c.bf16 %v266, %v262
  %v399 = vpack.c.bf16 %v267, %v263
  %v400 = vpack.c.bf16 %v268, %v264
  %v401 = vpack.c.bf16 %v273, %v269
  %v402 = vpack.c.bf16 %v274, %v270
  %v403 = vpack.c.bf16 %v275, %v271
  %v404 = vpack.c.bf16 %v276, %v272
  %v405 = vld [vmem:[%s1] sm:$0xff]
  %v406 = vld [vmem:[%s1 + $0x8] sm:$0xff]
  %v407 = vld [vmem:[%s1 + $0x10] sm:$0xff]
  %v408 = vld [vmem:[%s1 + $0x18] sm:$0xff]
  %v409 = vld [vmem:[%s1 + $0x20] sm:$0xff]
  %v410 = vld [vmem:[%s1 + $0x28] sm:$0xff]
  %v411 = vld [vmem:[%s1 + $0x30] sm:$0xff]
  %v412 = vld [vmem:[%s1 + $0x38] sm:$0xff]
  %v413 = vld [vmem:[%s1 + $0x40] sm:$0xff]
  %v414 = vld [vmem:[%s1 + $0x48] sm:$0xff]
  %v415 = vld [vmem:[%s1 + $0x50] sm:$0xff]
  %v416 = vld [vmem:[%s1 + $0x58] sm:$0xff]
  %v417 = vld [vmem:[%s1 + $0x60] sm:$0xff]
  %v418 = vld [vmem:[%s1 + $0x68] sm:$0xff]
  %v419 = vld [vmem:[%s1 + $0x70] sm:$0xff]
  %v420 = vld [vmem:[%s1 + $0x78] sm:$0xff]
  %v421 = vld [vmem:[%s1 + $0x80] sm:$0xff]
  %v422 = vld [vmem:[%s1 + $0x88] sm:$0xff]
  %v423 = vld [vmem:[%s1 + $0x90] sm:$0xff]
  %v424 = vld [vmem:[%s1 + $0x98] sm:$0xff]
  %v425 = vld [vmem:[%s1 + $0xa0] sm:$0xff]
  %v426 = vld [vmem:[%s1 + $0xa8] sm:$0xff]
  %v427 = vld [vmem:[%s1 + $0xb0] sm:$0xff]
  %v428 = vld [vmem:[%s1 + $0xb8] sm:$0xff]
  %v429 = vld [vmem:[%s1 + $0xc0] sm:$0xff]
  %v430 = vld [vmem:[%s1 + $0xc8] sm:$0xff]
  %v431 = vld [vmem:[%s1 + $0xd0] sm:$0xff]
  %v432 = vld [vmem:[%s1 + $0xd8] sm:$0xff]
  %v433 = vld [vmem:[%s1 + $0xe0] sm:$0xff]
  %v434 = vld [vmem:[%s1 + $0xe8] sm:$0xff]
  %v435 = vld [vmem:[%s1 + $0xf0] sm:$0xff]
  %v436 = vld [vmem:[%s1 + $0xf8] sm:$0xff]
  %v437 = vld [vmem:[%s1 + $0x100] sm:$0xff]
  %v438 = vld [vmem:[%s1 + $0x108] sm:$0xff]
  %v439 = vld [vmem:[%s1 + $0x110] sm:$0xff]
  %v440 = vld [vmem:[%s1 + $0x118] sm:$0xff]
  %v441 = vld [vmem:[%s1 + $0x120] sm:$0xff]
  %v442 = vld [vmem:[%s1 + $0x128] sm:$0xff]
  %v443 = vld [vmem:[%s1 + $0x130] sm:$0xff]
  %v444 = vld [vmem:[%s1 + $0x138] sm:$0xff]
  %v445 = vld [vmem:[%s1 + $0x140] sm:$0xff]
  %v446 = vld [vmem:[%s1 + $0x148] sm:$0xff]
  %v447 = vld [vmem:[%s1 + $0x150] sm:$0xff]
  %v448 = vld [vmem:[%s1 + $0x158] sm:$0xff]
  %v449 = vld [vmem:[%s1 + $0x160] sm:$0xff]
  %v450 = vld [vmem:[%s1 + $0x168] sm:$0xff]
  %v451 = vld [vmem:[%s1 + $0x170] sm:$0xff]
  %v452 = vld [vmem:[%s1 + $0x178] sm:$0xff]
  %v453 = vld [vmem:[%s1 + $0x180] sm:$0xff]
  %v454 = vld [vmem:[%s1 + $0x188] sm:$0xff]
  %v455 = vld [vmem:[%s1 + $0x190] sm:$0xff]
  %v456 = vld [vmem:[%s1 + $0x198] sm:$0xff]
  %v457 = vld [vmem:[%s1 + $0x1a0] sm:$0xff]
  %v458 = vld [vmem:[%s1 + $0x1a8] sm:$0xff]
  %v459 = vld [vmem:[%s1 + $0x1b0] sm:$0xff]
  %v460 = vld [vmem:[%s1 + $0x1b8] sm:$0xff]
  %v461 = vld [vmem:[%s1 + $0x1c0] sm:$0xff]
  %v462 = vld [vmem:[%s1 + $0x1c8] sm:$0xff]
  %v463 = vld [vmem:[%s1 + $0x1d0] sm:$0xff]
  %v464 = vld [vmem:[%s1 + $0x1d8] sm:$0xff]
  %v465 = vld [vmem:[%s1 + $0x1e0] sm:$0xff]
  %v466 = vld [vmem:[%s1 + $0x1e8] sm:$0xff]
  %v467 = vld [vmem:[%s1 + $0x1f0] sm:$0xff]
  %v468 = vld [vmem:[%s1 + $0x1f8] sm:$0xff]
  %v469 = vld [vmem:[%s1 + $0x200] sm:$0xff]
  %v470 = vld [vmem:[%s1 + $0x208] sm:$0xff]
  %v471 = vld [vmem:[%s1 + $0x210] sm:$0xff]
  %v472 = vld [vmem:[%s1 + $0x218] sm:$0xff]
  %v473 = vld [vmem:[%s1 + $0x220] sm:$0xff]
  %v474 = vld [vmem:[%s1 + $0x228] sm:$0xff]
  %v475 = vld [vmem:[%s1 + $0x230] sm:$0xff]
  %v476 = vld [vmem:[%s1 + $0x238] sm:$0xff]
  %v477 = vld [vmem:[%s1 + $0x240] sm:$0xff]
  %v478 = vld [vmem:[%s1 + $0x248] sm:$0xff]
  %v479 = vld [vmem:[%s1 + $0x250] sm:$0xff]
  %v480 = vld [vmem:[%s1 + $0x258] sm:$0xff]
  %v481 = vld [vmem:[%s1 + $0x260] sm:$0xff]
  %v482 = vld [vmem:[%s1 + $0x268] sm:$0xff]
  %v483 = vld [vmem:[%s1 + $0x270] sm:$0xff]
  %v484 = vld [vmem:[%s1 + $0x278] sm:$0xff]
  %v485 = vld [vmem:[%s1 + $0x280] sm:$0xff]
  %v486 = vld [vmem:[%s1 + $0x288] sm:$0xff]
  %v487 = vld [vmem:[%s1 + $0x290] sm:$0xff]
  %v488 = vld [vmem:[%s1 + $0x298] sm:$0xff]
  %v489 = vld [vmem:[%s1 + $0x2a0] sm:$0xff]
  %v490 = vld [vmem:[%s1 + $0x2a8] sm:$0xff]
  %v491 = vld [vmem:[%s1 + $0x2b0] sm:$0xff]
  %v492 = vld [vmem:[%s1 + $0x2b8] sm:$0xff]
  %v493 = vld [vmem:[%s1 + $0x2c0] sm:$0xff]
  %v494 = vld [vmem:[%s1 + $0x2c8] sm:$0xff]
  %v495 = vld [vmem:[%s1 + $0x2d0] sm:$0xff]
  %v496 = vld [vmem:[%s1 + $0x2d8] sm:$0xff]
  %v497 = vld [vmem:[%s1 + $0x2e0] sm:$0xff]
  %v498 = vld [vmem:[%s1 + $0x2e8] sm:$0xff]
  %v499 = vld [vmem:[%s1 + $0x2f0] sm:$0xff]
  %v500 = vld [vmem:[%s1 + $0x2f8] sm:$0xff]
  %v501 = vld [vmem:[%s1 + $0x300] sm:$0xff]
  %v502 = vld [vmem:[%s1 + $0x308] sm:$0xff]
  %v503 = vld [vmem:[%s1 + $0x310] sm:$0xff]
  %v504 = vld [vmem:[%s1 + $0x318] sm:$0xff]
  %v505 = vld [vmem:[%s2] sm:$0xf]
  %v507 = vperm.slane %v505, 0
  %v508 = vperm.slane %v505, 1
  %v509 = vperm.slane %v505, 2
  %v510 = vperm.slane %v505, 3
  %v615 = vunpack.c.l.b16 %v405
  %v616 = vunpack.c.h.b16 %v405
  %v617 = vunpack.c.l.b16 %v406
  %v618 = vunpack.c.h.b16 %v406
  %v619 = vunpack.c.l.b16 %v407
  %v620 = vunpack.c.h.b16 %v407
  %v621 = vunpack.c.l.b16 %v408
  %v622 = vunpack.c.h.b16 %v408
  %v623 = vunpack.c.l.b16 %v409
  %v624 = vunpack.c.h.b16 %v409
  %v625 = vunpack.c.l.b16 %v410
  %v626 = vunpack.c.h.b16 %v410
  %v627 = vunpack.c.l.b16 %v411
  %v628 = vunpack.c.h.b16 %v411
  %v629 = vunpack.c.l.b16 %v412
  %v630 = vunpack.c.h.b16 %v412
  %v631 = vunpack.c.l.b16 %v413
  %v632 = vunpack.c.h.b16 %v413
  %v633 = vunpack.c.l.b16 %v414
  %v634 = vunpack.c.h.b16 %v414
  %v635 = vunpack.c.l.b16 %v415
  %v636 = vunpack.c.h.b16 %v415
  %v637 = vunpack.c.l.b16 %v416
  %v638 = vunpack.c.h.b16 %v416
  %v639 = vunpack.c.l.b16 %v417
  %v640 = vunpack.c.h.b16 %v417
  %v641 = vunpack.c.l.b16 %v418
  %v642 = vunpack.c.h.b16 %v418
  %v643 = vunpack.c.l.b16 %v419
  %v644 = vunpack.c.h.b16 %v419
  %v645 = vunpack.c.l.b16 %v420
  %v646 = vunpack.c.h.b16 %v420
  %v647 = vunpack.c.l.b16 %v421
  %v648 = vunpack.c.h.b16 %v421
  %v649 = vunpack.c.l.b16 %v422
  %v650 = vunpack.c.h.b16 %v422
  %v651 = vunpack.c.l.b16 %v423
  %v652 = vunpack.c.h.b16 %v423
  %v653 = vunpack.c.l.b16 %v424
  %v654 = vunpack.c.h.b16 %v424
  %v655 = vunpack.c.l.b16 %v425
  %v656 = vunpack.c.h.b16 %v425
  %v657 = vunpack.c.l.b16 %v426
  %v658 = vunpack.c.h.b16 %v426
  %v659 = vunpack.c.l.b16 %v427
  %v660 = vunpack.c.h.b16 %v427
  %v661 = vunpack.c.l.b16 %v428
  %v662 = vunpack.c.h.b16 %v428
  %v663 = vunpack.c.l.b16 %v429
  %v664 = vunpack.c.h.b16 %v429
  %v665 = vunpack.c.l.b16 %v430
  %v666 = vunpack.c.h.b16 %v430
  %v667 = vunpack.c.l.b16 %v431
  %v668 = vunpack.c.h.b16 %v431
  %v669 = vunpack.c.l.b16 %v432
  %v670 = vunpack.c.h.b16 %v432
  %v671 = vunpack.c.l.b16 %v433
  %v672 = vunpack.c.h.b16 %v433
  %v673 = vunpack.c.l.b16 %v434
  %v674 = vunpack.c.h.b16 %v434
  %v675 = vunpack.c.l.b16 %v435
  %v676 = vunpack.c.h.b16 %v435
  %v677 = vunpack.c.l.b16 %v436
  %v678 = vunpack.c.h.b16 %v436
  %v679 = vunpack.c.l.b16 %v437
  %v680 = vunpack.c.h.b16 %v437
  %v681 = vunpack.c.l.b16 %v438
  %v682 = vunpack.c.h.b16 %v438
  %v683 = vunpack.c.l.b16 %v439
  %v684 = vunpack.c.h.b16 %v439
  %v685 = vunpack.c.l.b16 %v440
  %v686 = vunpack.c.h.b16 %v440
  %v687 = vunpack.c.l.b16 %v441
  %v688 = vunpack.c.h.b16 %v441
  %v689 = vunpack.c.l.b16 %v442
  %v690 = vunpack.c.h.b16 %v442
  %v691 = vunpack.c.l.b16 %v443
  %v692 = vunpack.c.h.b16 %v443
  %v693 = vunpack.c.l.b16 %v444
  %v694 = vunpack.c.h.b16 %v444
  %v695 = vunpack.c.l.b16 %v445
  %v696 = vunpack.c.h.b16 %v445
  %v697 = vunpack.c.l.b16 %v446
  %v698 = vunpack.c.h.b16 %v446
  %v699 = vunpack.c.l.b16 %v447
  %v700 = vunpack.c.h.b16 %v447
  %v701 = vunpack.c.l.b16 %v448
  %v702 = vunpack.c.h.b16 %v448
  %v703 = vunpack.c.l.b16 %v449
  %v704 = vunpack.c.h.b16 %v449
  %v705 = vunpack.c.l.b16 %v450
  %v706 = vunpack.c.h.b16 %v450
  %v707 = vunpack.c.l.b16 %v451
  %v708 = vunpack.c.h.b16 %v451
  %v709 = vunpack.c.l.b16 %v452
  %v710 = vunpack.c.h.b16 %v452
  %v711 = vunpack.c.l.b16 %v453
  %v712 = vunpack.c.h.b16 %v453
  %v713 = vunpack.c.l.b16 %v454
  %v714 = vunpack.c.h.b16 %v454
  %v715 = vunpack.c.l.b16 %v455
  %v716 = vunpack.c.h.b16 %v455
  %v717 = vunpack.c.l.b16 %v456
  %v718 = vunpack.c.h.b16 %v456
  %v719 = vunpack.c.l.b16 %v457
  %v720 = vunpack.c.h.b16 %v457
  %v721 = vunpack.c.l.b16 %v458
  %v722 = vunpack.c.h.b16 %v458
  %v723 = vunpack.c.l.b16 %v459
  %v724 = vunpack.c.h.b16 %v459
  %v725 = vunpack.c.l.b16 %v460
  %v726 = vunpack.c.h.b16 %v460
  %v727 = vunpack.c.l.b16 %v461
  %v728 = vunpack.c.h.b16 %v461
  %v729 = vunpack.c.l.b16 %v462
  %v730 = vunpack.c.h.b16 %v462
  %v731 = vunpack.c.l.b16 %v463
  %v732 = vunpack.c.h.b16 %v463
  %v733 = vunpack.c.l.b16 %v464
  %v734 = vunpack.c.h.b16 %v464
  %v735 = vunpack.c.l.b16 %v465
  %v736 = vunpack.c.h.b16 %v465
  %v737 = vunpack.c.l.b16 %v466
  %v738 = vunpack.c.h.b16 %v466
  %v739 = vunpack.c.l.b16 %v467
  %v740 = vunpack.c.h.b16 %v467
  %v741 = vunpack.c.l.b16 %v468
  %v742 = vunpack.c.h.b16 %v468
  %v743 = vunpack.c.l.b16 %v469
  %v744 = vunpack.c.h.b16 %v469
  %v745 = vunpack.c.l.b16 %v470
  %v746 = vunpack.c.h.b16 %v470
  %v747 = vunpack.c.l.b16 %v471
  %v748 = vunpack.c.h.b16 %v471
  %v749 = vunpack.c.l.b16 %v472
  %v750 = vunpack.c.h.b16 %v472
  %v751 = vunpack.c.l.b16 %v473
  %v752 = vunpack.c.h.b16 %v473
  %v753 = vunpack.c.l.b16 %v474
  %v754 = vunpack.c.h.b16 %v474
  %v755 = vunpack.c.l.b16 %v475
  %v756 = vunpack.c.h.b16 %v475
  %v757 = vunpack.c.l.b16 %v476
  %v758 = vunpack.c.h.b16 %v476
  %v759 = vunpack.c.l.b16 %v477
  %v760 = vunpack.c.h.b16 %v477
  %v761 = vunpack.c.l.b16 %v478
  %v762 = vunpack.c.h.b16 %v478
  %v763 = vunpack.c.l.b16 %v479
  %v764 = vunpack.c.h.b16 %v479
  %v765 = vunpack.c.l.b16 %v480
  %v766 = vunpack.c.h.b16 %v480
  %v767 = vunpack.c.l.b16 %v481
  %v768 = vunpack.c.h.b16 %v481
  %v769 = vunpack.c.l.b16 %v482
  %v770 = vunpack.c.h.b16 %v482
  %v771 = vunpack.c.l.b16 %v483
  %v772 = vunpack.c.h.b16 %v483
  %v773 = vunpack.c.l.b16 %v484
  %v774 = vunpack.c.h.b16 %v484
  %v775 = vunpack.c.l.b16 %v485
  %v776 = vunpack.c.h.b16 %v485
  %v777 = vunpack.c.l.b16 %v486
  %v778 = vunpack.c.h.b16 %v486
  %v779 = vunpack.c.l.b16 %v487
  %v780 = vunpack.c.h.b16 %v487
  %v781 = vunpack.c.l.b16 %v488
  %v782 = vunpack.c.h.b16 %v488
  %v783 = vunpack.c.l.b16 %v489
  %v784 = vunpack.c.h.b16 %v489
  %v785 = vunpack.c.l.b16 %v490
  %v786 = vunpack.c.h.b16 %v490
  %v787 = vunpack.c.l.b16 %v491
  %v788 = vunpack.c.h.b16 %v491
  %v789 = vunpack.c.l.b16 %v492
  %v790 = vunpack.c.h.b16 %v492
  %v791 = vunpack.c.l.b16 %v493
  %v792 = vunpack.c.h.b16 %v493
  %v793 = vunpack.c.l.b16 %v494
  %v794 = vunpack.c.h.b16 %v494
  %v795 = vunpack.c.l.b16 %v495
  %v796 = vunpack.c.h.b16 %v495
  %v797 = vunpack.c.l.b16 %v496
  %v798 = vunpack.c.h.b16 %v496
  %v799 = vunpack.c.l.b16 %v497
  %v800 = vunpack.c.h.b16 %v497
  %v801 = vunpack.c.l.b16 %v498
  %v802 = vunpack.c.h.b16 %v498
  %v803 = vunpack.c.l.b16 %v499
  %v804 = vunpack.c.h.b16 %v499
  %v805 = vunpack.c.l.b16 %v500
  %v806 = vunpack.c.h.b16 %v500
  %v807 = vunpack.c.l.b16 %v501
  %v808 = vunpack.c.h.b16 %v501
  %v809 = vunpack.c.l.b16 %v502
  %v810 = vunpack.c.h.b16 %v502
  %v811 = vunpack.c.l.b16 %v503
  %v812 = vunpack.c.h.b16 %v503
  %v813 = vunpack.c.l.b16 %v504
  %v814 = vunpack.c.h.b16 %v504
  %v815 = vpack.c.b16 %v619, %v615
  %v816 = vpack.c.b16 %v620, %v616
  %v817 = vpack.c.b16 %v621, %v617
  %v818 = vpack.c.b16 %v622, %v618
  %v819 = vpack.c.b16 %v627, %v623
  %v820 = vpack.c.b16 %v628, %v624
  %v821 = vpack.c.b16 %v629, %v625
  %v822 = vpack.c.b16 %v630, %v626
  %v823 = vpack.c.b16 %v635, %v631
  %v824 = vpack.c.b16 %v636, %v632
  %v825 = vpack.c.b16 %v637, %v633
  %v826 = vpack.c.b16 %v638, %v634
  %v827 = vpack.c.b16 %v643, %v639
  %v828 = vpack.c.b16 %v644, %v640
  %v829 = vpack.c.b16 %v645, %v641
  %v830 = vpack.c.b16 %v646, %v642
  %v831 = vpack.c.b16 %v651, %v647
  %v832 = vpack.c.b16 %v652, %v648
  %v833 = vpack.c.b16 %v653, %v649
  %v834 = vpack.c.b16 %v654, %v650
  %v835 = vpack.c.b16 %v659, %v655
  %v836 = vpack.c.b16 %v660, %v656
  %v837 = vpack.c.b16 %v661, %v657
  %v838 = vpack.c.b16 %v662, %v658
  %v839 = vpack.c.b16 %v667, %v663
  %v840 = vpack.c.b16 %v668, %v664
  %v841 = vpack.c.b16 %v669, %v665
  %v842 = vpack.c.b16 %v670, %v666
  %v843 = vpack.c.b16 %v675, %v671
  %v844 = vpack.c.b16 %v676, %v672
  %v845 = vpack.c.b16 %v677, %v673
  %v846 = vpack.c.b16 %v678, %v674
  %v847 = vpack.c.b16 %v683, %v679
  %v848 = vpack.c.b16 %v684, %v680
  %v849 = vpack.c.b16 %v685, %v681
  %v850 = vpack.c.b16 %v686, %v682
  %v851 = vpack.c.b16 %v691, %v687
  %v852 = vpack.c.b16 %v692, %v688
  %v853 = vpack.c.b16 %v693, %v689
  %v854 = vpack.c.b16 %v694, %v690
  %v855 = vpack.c.b16 %v699, %v695
  %v856 = vpack.c.b16 %v700, %v696
  %v857 = vpack.c.b16 %v701, %v697
  %v858 = vpack.c.b16 %v702, %v698
  %v859 = vpack.c.b16 %v707, %v703
  %v860 = vpack.c.b16 %v708, %v704
  %v861 = vpack.c.b16 %v709, %v705
  %v862 = vpack.c.b16 %v710, %v706
  %v863 = vpack.c.b16 %v715, %v711
  %v864 = vpack.c.b16 %v716, %v712
  %v865 = vpack.c.b16 %v717, %v713
  %v866 = vpack.c.b16 %v718, %v714
  %v867 = vpack.c.b16 %v723, %v719
  %v868 = vpack.c.b16 %v724, %v720
  %v869 = vpack.c.b16 %v725, %v721
  %v870 = vpack.c.b16 %v726, %v722
  %v871 = vpack.c.b16 %v731, %v727
  %v872 = vpack.c.b16 %v732, %v728
  %v873 = vpack.c.b16 %v733, %v729
  %v874 = vpack.c.b16 %v734, %v730
  %v875 = vpack.c.b16 %v739, %v735
  %v876 = vpack.c.b16 %v740, %v736
  %v877 = vpack.c.b16 %v741, %v737
  %v878 = vpack.c.b16 %v742, %v738
  %v879 = vpack.c.b16 %v747, %v743
  %v880 = vpack.c.b16 %v748, %v744
  %v881 = vpack.c.b16 %v749, %v745
  %v882 = vpack.c.b16 %v750, %v746
  %v883 = vpack.c.b16 %v755, %v751
  %v884 = vpack.c.b16 %v756, %v752
  %v885 = vpack.c.b16 %v757, %v753
  %v886 = vpack.c.b16 %v758, %v754
  %v887 = vpack.c.b16 %v763, %v759
  %v888 = vpack.c.b16 %v764, %v760
  %v889 = vpack.c.b16 %v765, %v761
  %v890 = vpack.c.b16 %v766, %v762
  %v891 = vpack.c.b16 %v771, %v767
  %v892 = vpack.c.b16 %v772, %v768
  %v893 = vpack.c.b16 %v773, %v769
  %v894 = vpack.c.b16 %v774, %v770
  %v895 = vpack.c.b16 %v779, %v775
  %v896 = vpack.c.b16 %v780, %v776
  %v897 = vpack.c.b16 %v781, %v777
  %v898 = vpack.c.b16 %v782, %v778
  %v899 = vpack.c.b16 %v787, %v783
  %v900 = vpack.c.b16 %v788, %v784
  %v901 = vpack.c.b16 %v789, %v785
  %v902 = vpack.c.b16 %v790, %v786
  %v903 = vpack.c.b16 %v795, %v791
  %v904 = vpack.c.b16 %v796, %v792
  %v905 = vpack.c.b16 %v797, %v793
  %v906 = vpack.c.b16 %v798, %v794
  %v907 = vpack.c.b16 %v803, %v799
  %v908 = vpack.c.b16 %v804, %v800
  %v909 = vpack.c.b16 %v805, %v801
  %v910 = vpack.c.b16 %v806, %v802
  %v911 = vpack.c.b16 %v811, %v807
  %v912 = vpack.c.b16 %v812, %v808
  %v913 = vpack.c.b16 %v813, %v809
  %v914 = vpack.c.b16 %v814, %v810
  %vm1015 = vcmask 130048
  %v1017 = vsel %vm1015, %v280, 0
  %v1020 = vsel %vm1015, %v284, 0
  %v1023 = vsel %vm1015, %v288, 0
  %v1026 = vsel %vm1015, %v292, 0
  %v1029 = vsel %vm1015, %v296, 0
  %v1032 = vsel %vm1015, %v300, 0
  %v1035 = vsel %vm1015, %v304, 0
  %v1038 = vsel %vm1015, %v308, 0
  %v1041 = vsel %vm1015, %v312, 0
  %v1044 = vsel %vm1015, %v316, 0
  %v1047 = vsel %vm1015, %v320, 0
  %v1050 = vsel %vm1015, %v324, 0
  %v1053 = vsel %vm1015, %v328, 0
  %v1056 = vsel %vm1015, %v332, 0
  %v1059 = vsel %vm1015, %v336, 0
  %v1062 = vsel %vm1015, %v340, 0
  %v1065 = vsel %vm1015, %v344, 0
  %v1068 = vsel %vm1015, %v348, 0
  %v1071 = vsel %vm1015, %v352, 0
  %v1074 = vsel %vm1015, %v356, 0
  %v1077 = vsel %vm1015, %v360, 0
  %v1080 = vsel %vm1015, %v364, 0
  %v1083 = vsel %vm1015, %v368, 0
  %v1086 = vsel %vm1015, %v372, 0
  %v1089 = vsel %vm1015, %v376, 0
  %v1092 = vsel %vm1015, %v380, 0
  %v1095 = vsel %vm1015, %v384, 0
  %v1098 = vsel %vm1015, %v388, 0
  %v1101 = vsel %vm1015, %v392, 0
  %v1104 = vsel %vm1015, %v396, 0
  %v1107 = vsel %vm1015, %v400, 0
  %v1110 = vsel %vm1015, %v404, 0
  %1112 = vmatpush.bf16.msra.mxu0 %v843
  %1113 = vmatpush.bf16.msra.mxu0 %v839
  %1114 = vmatpush.bf16.msra.mxu0 %v835
  %1115 = vmatpush.bf16.msra.mxu0 %v831
  %1116 = vmatpush.bf16.msra.mxu0 %v827
  %1117 = vmatpush.bf16.msra.mxu0 %v823
  %1118 = vmatpush.bf16.msra.mxu0 %v819
  %1119 = vmatpush.bf16.msra.mxu0 %v815
  %1120 = vmatmul.bf16.gmra.mxu0 %v277
  %v1121 = vpop.f32.mrf.mxu0
  %v1122 = vadd.f32 %v507, %v1121
  %v1123 = vpop.f32.mrf.mxu0
  %v1124 = vadd.f32 %v507, %v1123
  %1125 = vmatmul.bf16.gmra.mxu0 %v281
  %v1126 = vpop.f32.mrf.mxu0
  %v1127 = vadd.f32 %v507, %v1126
  %v1128 = vpop.f32.mrf.mxu0
  %v1129 = vadd.f32 %v507, %v1128
  %1130 = vmatmul.bf16.gmra.mxu0 %v285
  %v1131 = vpop.f32.mrf.mxu0
  %v1132 = vadd.f32 %v507, %v1131
  %v1133 = vpop.f32.mrf.mxu0
  %v1134 = vadd.f32 %v507, %v1133
  %1135 = vmatmul.bf16.gmra.mxu0 %v289
  %v1136 = vpop.f32.mrf.mxu0
  %v1137 = vadd.f32 %v507, %v1136
  %v1138 = vpop.f32.mrf.mxu0
  %v1139 = vadd.f32 %v507, %v1138
  %1140 = vmatmul.bf16.gmra.mxu0 %v293
  %v1141 = vpop.f32.mrf.mxu0
  %v1142 = vadd.f32 %v507, %v1141
  %v1143 = vpop.f32.mrf.mxu0
  %v1144 = vadd.f32 %v507, %v1143
  %1145 = vmatmul.bf16.gmra.mxu0 %v297
  %v1146 = vpop.f32.mrf.mxu0
  %v1147 = vadd.f32 %v507, %v1146
  %v1148 = vpop.f32.mrf.mxu0
  %v1149 = vadd.f32 %v507, %v1148
  %1150 = vmatmul.bf16.gmra.mxu0 %v301
  %v1151 = vpop.f32.mrf.mxu0
  %v1152 = vadd.f32 %v507, %v1151
  %v1153 = vpop.f32.mrf.mxu0
  %v1154 = vadd.f32 %v507, %v1153
  %1155 = vmatmul.bf16.gmra.mxu0 %v305
  %v1156 = vpop.f32.mrf.mxu0
  %v1157 = vadd.f32 %v507, %v1156
  %v1158 = vpop.f32.mrf.mxu0
  %v1159 = vadd.f32 %v507, %v1158
  %1160 = vmatmul.bf16.gmra.mxu0 %v309
  %v1161 = vpop.f32.mrf.mxu0
  %v1162 = vadd.f32 %v507, %v1161
  %v1163 = vpop.f32.mrf.mxu0
  %v1164 = vadd.f32 %v507, %v1163
  %1165 = vmatmul.bf16.gmra.mxu0 %v313
  %v1166 = vpop.f32.mrf.mxu0
  %v1167 = vadd.f32 %v507, %v1166
  %v1168 = vpop.f32.mrf.mxu0
  %v1169 = vadd.f32 %v507, %v1168
  %1170 = vmatmul.bf16.gmra.mxu0 %v317
  %v1171 = vpop.f32.mrf.mxu0
  %v1172 = vadd.f32 %v507, %v1171
  %v1173 = vpop.f32.mrf.mxu0
  %v1174 = vadd.f32 %v507, %v1173
  %1175 = vmatmul.bf16.gmra.mxu0 %v321
  %v1176 = vpop.f32.mrf.mxu0
  %v1177 = vadd.f32 %v507, %v1176
  %v1178 = vpop.f32.mrf.mxu0
  %v1179 = vadd.f32 %v507, %v1178
  %1180 = vmatmul.bf16.gmra.mxu0 %v325
  %v1181 = vpop.f32.mrf.mxu0
  %v1182 = vadd.f32 %v507, %v1181
  %v1183 = vpop.f32.mrf.mxu0
  %v1184 = vadd.f32 %v507, %v1183
  %1185 = vmatmul.bf16.gmra.mxu0 %v329
  %v1186 = vpop.f32.mrf.mxu0
  %v1187 = vadd.f32 %v507, %v1186
  %v1188 = vpop.f32.mrf.mxu0
  %v1189 = vadd.f32 %v507, %v1188
  %1190 = vmatmul.bf16.gmra.mxu0 %v333
  %v1191 = vpop.f32.mrf.mxu0
  %v1192 = vadd.f32 %v507, %v1191
  %v1193 = vpop.f32.mrf.mxu0
  %v1194 = vadd.f32 %v507, %v1193
  %1195 = vmatmul.bf16.gmra.mxu0 %v337
  %v1196 = vpop.f32.mrf.mxu0
  %v1197 = vadd.f32 %v507, %v1196
  %v1198 = vpop.f32.mrf.mxu0
  %v1199 = vadd.f32 %v507, %v1198
  %1200 = vmatmul.bf16.gmra.mxu0 %v341
  %v1201 = vpop.f32.mrf.mxu0
  %v1202 = vadd.f32 %v507, %v1201
  %v1203 = vpop.f32.mrf.mxu0
  %v1204 = vadd.f32 %v507, %v1203
  %1205 = vmatmul.bf16.gmra.mxu0 %v345
  %v1206 = vpop.f32.mrf.mxu0
  %v1207 = vadd.f32 %v507, %v1206
  %v1208 = vpop.f32.mrf.mxu0
  %v1209 = vadd.f32 %v507, %v1208
  %1210 = vmatmul.bf16.gmra.mxu0 %v349
  %v1211 = vpop.f32.mrf.mxu0
  %v1212 = vadd.f32 %v507, %v1211
  %v1213 = vpop.f32.mrf.mxu0
  %v1214 = vadd.f32 %v507, %v1213
  %1215 = vmatmul.bf16.gmra.mxu0 %v353
  %v1216 = vpop.f32.mrf.mxu0
  %v1217 = vadd.f32 %v507, %v1216
  %v1218 = vpop.f32.mrf.mxu0
  %v1219 = vadd.f32 %v507, %v1218
  %1220 = vmatmul.bf16.gmra.mxu0 %v357
  %v1221 = vpop.f32.mrf.mxu0
  %v1222 = vadd.f32 %v507, %v1221
  %v1223 = vpop.f32.mrf.mxu0
  %v1224 = vadd.f32 %v507, %v1223
  %1225 = vmatmul.bf16.gmra.mxu0 %v361
  %v1226 = vpop.f32.mrf.mxu0
  %v1227 = vadd.f32 %v507, %v1226
  %v1228 = vpop.f32.mrf.mxu0
  %v1229 = vadd.f32 %v507, %v1228
  %1230 = vmatmul.bf16.gmra.mxu0 %v365
  %v1231 = vpop.f32.mrf.mxu0
  %v1232 = vadd.f32 %v507, %v1231
  %v1233 = vpop.f32.mrf.mxu0
  %v1234 = vadd.f32 %v507, %v1233
  %1235 = vmatmul.bf16.gmra.mxu0 %v369
  %v1236 = vpop.f32.mrf.mxu0
  %v1237 = vadd.f32 %v507, %v1236
  %v1238 = vpop.f32.mrf.mxu0
  %v1239 = vadd.f32 %v507, %v1238
  %1240 = vmatmul.bf16.gmra.mxu0 %v373
  %v1241 = vpop.f32.mrf.mxu0
  %v1242 = vadd.f32 %v507, %v1241
  %v1243 = vpop.f32.mrf.mxu0
  %v1244 = vadd.f32 %v507, %v1243
  %1245 = vmatmul.bf16.gmra.mxu0 %v377
  %v1246 = vpop.f32.mrf.mxu0
  %v1247 = vadd.f32 %v507, %v1246
  %v1248 = vpop.f32.mrf.mxu0
  %v1249 = vadd.f32 %v507, %v1248
  %1250 = vmatmul.bf16.gmra.mxu0 %v381
  %v1251 = vpop.f32.mrf.mxu0
  %v1252 = vadd.f32 %v507, %v1251
  %v1253 = vpop.f32.mrf.mxu0
  %v1254 = vadd.f32 %v507, %v1253
  %1255 = vmatmul.bf16.gmra.mxu0 %v385
  %v1256 = vpop.f32.mrf.mxu0
  %v1257 = vadd.f32 %v507, %v1256
  %v1258 = vpop.f32.mrf.mxu0
  %v1259 = vadd.f32 %v507, %v1258
  %1260 = vmatmul.bf16.gmra.mxu0 %v389
  %v1261 = vpop.f32.mrf.mxu0
  %v1262 = vadd.f32 %v507, %v1261
  %v1263 = vpop.f32.mrf.mxu0
  %v1264 = vadd.f32 %v507, %v1263
  %1265 = vmatmul.bf16.gmra.mxu0 %v393
  %v1266 = vpop.f32.mrf.mxu0
  %v1267 = vadd.f32 %v507, %v1266
  %v1268 = vpop.f32.mrf.mxu0
  %v1269 = vadd.f32 %v507, %v1268
  %1270 = vmatmul.bf16.gmra.mxu0 %v397
  %v1271 = vpop.f32.mrf.mxu0
  %v1272 = vadd.f32 %v507, %v1271
  %v1273 = vpop.f32.mrf.mxu0
  %v1274 = vadd.f32 %v507, %v1273
  %1275 = vmatmul.bf16.gmra.mxu0 %v401
  %v1276 = vpop.f32.mrf.mxu0
  %v1277 = vadd.f32 %v507, %v1276
  %v1278 = vpop.f32.mrf.mxu0
  %v1279 = vadd.f32 %v507, %v1278
  %1280 = vdwg.mxu0
  %1281 = vmatpush.bf16.msra.mxu0 %v875
  %1282 = vmatpush.bf16.msra.mxu0 %v871
  %1283 = vmatpush.bf16.msra.mxu0 %v867
  %1284 = vmatpush.bf16.msra.mxu0 %v863
  %1285 = vmatpush.bf16.msra.mxu0 %v859
  %1286 = vmatpush.bf16.msra.mxu0 %v855
  %1287 = vmatpush.bf16.msra.mxu0 %v851
  %1288 = vmatpush.bf16.msra.mxu0 %v847
  %1289 = vmatmul.bf16.gmra.mxu0 %v278
  %v1290 = vpop.f32.mrf.mxu0
  %v1291 = vadd.f32 %v1122, %v1290
  %v1292 = vpop.f32.mrf.mxu0
  %v1293 = vadd.f32 %v1124, %v1292
  %1294 = vmatmul.bf16.gmra.mxu0 %v282
  %v1295 = vpop.f32.mrf.mxu0
  %v1296 = vadd.f32 %v1127, %v1295
  %v1297 = vpop.f32.mrf.mxu0
  %v1298 = vadd.f32 %v1129, %v1297
  %1299 = vmatmul.bf16.gmra.mxu0 %v286
  %v1300 = vpop.f32.mrf.mxu0
  %v1301 = vadd.f32 %v1132, %v1300
  %v1302 = vpop.f32.mrf.mxu0
  %v1303 = vadd.f32 %v1134, %v1302
  %1304 = vmatmul.bf16.gmra.mxu0 %v290
  %v1305 = vpop.f32.mrf.mxu0
  %v1306 = vadd.f32 %v1137, %v1305
  %v1307 = vpop.f32.mrf.mxu0
  %v1308 = vadd.f32 %v1139, %v1307
  %1309 = vmatmul.bf16.gmra.mxu0 %v294
  %v1310 = vpop.f32.mrf.mxu0
  %v1311 = vadd.f32 %v1142, %v1310
  %v1312 = vpop.f32.mrf.mxu0
  %v1313 = vadd.f32 %v1144, %v1312
  %1314 = vmatmul.bf16.gmra.mxu0 %v298
  %v1315 = vpop.f32.mrf.mxu0
  %v1316 = vadd.f32 %v1147, %v1315
  %v1317 = vpop.f32.mrf.mxu0
  %v1318 = vadd.f32 %v1149, %v1317
  %1319 = vmatmul.bf16.gmra.mxu0 %v302
  %v1320 = vpop.f32.mrf.mxu0
  %v1321 = vadd.f32 %v1152, %v1320
  %v1322 = vpop.f32.mrf.mxu0
  %v1323 = vadd.f32 %v1154, %v1322
  %1324 = vmatmul.bf16.gmra.mxu0 %v306
  %v1325 = vpop.f32.mrf.mxu0
  %v1326 = vadd.f32 %v1157, %v1325
  %v1327 = vpop.f32.mrf.mxu0
  %v1328 = vadd.f32 %v1159, %v1327
  %1329 = vmatmul.bf16.gmra.mxu0 %v310
  %v1330 = vpop.f32.mrf.mxu0
  %v1331 = vadd.f32 %v1162, %v1330
  %v1332 = vpop.f32.mrf.mxu0
  %v1333 = vadd.f32 %v1164, %v1332
  %1334 = vmatmul.bf16.gmra.mxu0 %v314
  %v1335 = vpop.f32.mrf.mxu0
  %v1336 = vadd.f32 %v1167, %v1335
  %v1337 = vpop.f32.mrf.mxu0
  %v1338 = vadd.f32 %v1169, %v1337
  %1339 = vmatmul.bf16.gmra.mxu0 %v318
  %v1340 = vpop.f32.mrf.mxu0
  %v1341 = vadd.f32 %v1172, %v1340
  %v1342 = vpop.f32.mrf.mxu0
  %v1343 = vadd.f32 %v1174, %v1342
  %1344 = vmatmul.bf16.gmra.mxu0 %v322
  %v1345 = vpop.f32.mrf.mxu0
  %v1346 = vadd.f32 %v1177, %v1345
  %v1347 = vpop.f32.mrf.mxu0
  %v1348 = vadd.f32 %v1179, %v1347
  %1349 = vmatmul.bf16.gmra.mxu0 %v326
  %v1350 = vpop.f32.mrf.mxu0
  %v1351 = vadd.f32 %v1182, %v1350
  %v1352 = vpop.f32.mrf.mxu0
  %v1353 = vadd.f32 %v1184, %v1352
  %1354 = vmatmul.bf16.gmra.mxu0 %v330
  %v1355 = vpop.f32.mrf.mxu0
  %v1356 = vadd.f32 %v1187, %v1355
  %v1357 = vpop.f32.mrf.mxu0
  %v1358 = vadd.f32 %v1189, %v1357
  %1359 = vmatmul.bf16.gmra.mxu0 %v334
  %v1360 = vpop.f32.mrf.mxu0
  %v1361 = vadd.f32 %v1192, %v1360
  %v1362 = vpop.f32.mrf.mxu0
  %v1363 = vadd.f32 %v1194, %v1362
  %1364 = vmatmul.bf16.gmra.mxu0 %v338
  %v1365 = vpop.f32.mrf.mxu0
  %v1366 = vadd.f32 %v1197, %v1365
  %v1367 = vpop.f32.mrf.mxu0
  %v1368 = vadd.f32 %v1199, %v1367
  %1369 = vmatmul.bf16.gmra.mxu0 %v342
  %v1370 = vpop.f32.mrf.mxu0
  %v1371 = vadd.f32 %v1202, %v1370
  %v1372 = vpop.f32.mrf.mxu0
  %v1373 = vadd.f32 %v1204, %v1372
  %1374 = vmatmul.bf16.gmra.mxu0 %v346
  %v1375 = vpop.f32.mrf.mxu0
  %v1376 = vadd.f32 %v1207, %v1375
  %v1377 = vpop.f32.mrf.mxu0
  %v1378 = vadd.f32 %v1209, %v1377
  %1379 = vmatmul.bf16.gmra.mxu0 %v350
  %v1380 = vpop.f32.mrf.mxu0
  %v1381 = vadd.f32 %v1212, %v1380
  %v1382 = vpop.f32.mrf.mxu0
  %v1383 = vadd.f32 %v1214, %v1382
  %1384 = vmatmul.bf16.gmra.mxu0 %v354
  %v1385 = vpop.f32.mrf.mxu0
  %v1386 = vadd.f32 %v1217, %v1385
  %v1387 = vpop.f32.mrf.mxu0
  %v1388 = vadd.f32 %v1219, %v1387
  %1389 = vmatmul.bf16.gmra.mxu0 %v358
  %v1390 = vpop.f32.mrf.mxu0
  %v1391 = vadd.f32 %v1222, %v1390
  %v1392 = vpop.f32.mrf.mxu0
  %v1393 = vadd.f32 %v1224, %v1392
  %1394 = vmatmul.bf16.gmra.mxu0 %v362
  %v1395 = vpop.f32.mrf.mxu0
  %v1396 = vadd.f32 %v1227, %v1395
  %v1397 = vpop.f32.mrf.mxu0
  %v1398 = vadd.f32 %v1229, %v1397
  %1399 = vmatmul.bf16.gmra.mxu0 %v366
  %v1400 = vpop.f32.mrf.mxu0
  %v1401 = vadd.f32 %v1232, %v1400
  %v1402 = vpop.f32.mrf.mxu0
  %v1403 = vadd.f32 %v1234, %v1402
  %1404 = vmatmul.bf16.gmra.mxu0 %v370
  %v1405 = vpop.f32.mrf.mxu0
  %v1406 = vadd.f32 %v1237, %v1405
  %v1407 = vpop.f32.mrf.mxu0
  %v1408 = vadd.f32 %v1239, %v1407
  %1409 = vmatmul.bf16.gmra.mxu0 %v374
  %v1410 = vpop.f32.mrf.mxu0
  %v1411 = vadd.f32 %v1242, %v1410
  %v1412 = vpop.f32.mrf.mxu0
  %v1413 = vadd.f32 %v1244, %v1412
  %1414 = vmatmul.bf16.gmra.mxu0 %v378
  %v1415 = vpop.f32.mrf.mxu0
  %v1416 = vadd.f32 %v1247, %v1415
  %v1417 = vpop.f32.mrf.mxu0
  %v1418 = vadd.f32 %v1249, %v1417
  %1419 = vmatmul.bf16.gmra.mxu0 %v382
  %v1420 = vpop.f32.mrf.mxu0
  %v1421 = vadd.f32 %v1252, %v1420
  %v1422 = vpop.f32.mrf.mxu0
  %v1423 = vadd.f32 %v1254, %v1422
  %1424 = vmatmul.bf16.gmra.mxu0 %v386
  %v1425 = vpop.f32.mrf.mxu0
  %v1426 = vadd.f32 %v1257, %v1425
  %v1427 = vpop.f32.mrf.mxu0
  %v1428 = vadd.f32 %v1259, %v1427
  %1429 = vmatmul.bf16.gmra.mxu0 %v390
  %v1430 = vpop.f32.mrf.mxu0
  %v1431 = vadd.f32 %v1262, %v1430
  %v1432 = vpop.f32.mrf.mxu0
  %v1433 = vadd.f32 %v1264, %v1432
  %1434 = vmatmul.bf16.gmra.mxu0 %v394
  %v1435 = vpop.f32.mrf.mxu0
  %v1436 = vadd.f32 %v1267, %v1435
  %v1437 = vpop.f32.mrf.mxu0
  %v1438 = vadd.f32 %v1269, %v1437
  %1439 = vmatmul.bf16.gmra.mxu0 %v398
  %v1440 = vpop.f32.mrf.mxu0
  %v1441 = vadd.f32 %v1272, %v1440
  %v1442 = vpop.f32.mrf.mxu0
  %v1443 = vadd.f32 %v1274, %v1442
  %1444 = vmatmul.bf16.gmra.mxu0 %v402
  %v1445 = vpop.f32.mrf.mxu0
  %v1446 = vadd.f32 %v1277, %v1445
  %v1447 = vpop.f32.mrf.mxu0
  %v1448 = vadd.f32 %v1279, %v1447
  %1449 = vdwg.mxu0
  %1450 = vmatpush.bf16.msra.mxu0 %v907
  %1451 = vmatpush.bf16.msra.mxu0 %v903
  %1452 = vmatpush.bf16.msra.mxu0 %v899
  %1453 = vmatpush.bf16.msra.mxu0 %v895
  %1454 = vmatpush.bf16.msra.mxu0 %v891
  %1455 = vmatpush.bf16.msra.mxu0 %v887
  %1456 = vmatpush.bf16.msra.mxu0 %v883
  %1457 = vmatpush.bf16.msra.mxu0 %v879
  %1458 = vmatmul.bf16.gmra.mxu0 %v279
  %v1459 = vpop.f32.mrf.mxu0
  %v1460 = vadd.f32 %v1291, %v1459
  %v1461 = vpop.f32.mrf.mxu0
  %v1462 = vadd.f32 %v1293, %v1461
  %1463 = vmatmul.bf16.gmra.mxu0 %v283
  %v1464 = vpop.f32.mrf.mxu0
  %v1465 = vadd.f32 %v1296, %v1464
  %v1466 = vpop.f32.mrf.mxu0
  %v1467 = vadd.f32 %v1298, %v1466
  %1468 = vmatmul.bf16.gmra.mxu0 %v287
  %v1469 = vpop.f32.mrf.mxu0
  %v1470 = vadd.f32 %v1301, %v1469
  %v1471 = vpop.f32.mrf.mxu0
  %v1472 = vadd.f32 %v1303, %v1471
  %1473 = vmatmul.bf16.gmra.mxu0 %v291
  %v1474 = vpop.f32.mrf.mxu0
  %v1475 = vadd.f32 %v1306, %v1474
  %v1476 = vpop.f32.mrf.mxu0
  %v1477 = vadd.f32 %v1308, %v1476
  %1478 = vmatmul.bf16.gmra.mxu0 %v295
  %v1479 = vpop.f32.mrf.mxu0
  %v1480 = vadd.f32 %v1311, %v1479
  %v1481 = vpop.f32.mrf.mxu0
  %v1482 = vadd.f32 %v1313, %v1481
  %1483 = vmatmul.bf16.gmra.mxu0 %v299
  %v1484 = vpop.f32.mrf.mxu0
  %v1485 = vadd.f32 %v1316, %v1484
  %v1486 = vpop.f32.mrf.mxu0
  %v1487 = vadd.f32 %v1318, %v1486
  %1488 = vmatmul.bf16.gmra.mxu0 %v303
  %v1489 = vpop.f32.mrf.mxu0
  %v1490 = vadd.f32 %v1321, %v1489
  %v1491 = vpop.f32.mrf.mxu0
  %v1492 = vadd.f32 %v1323, %v1491
  %1493 = vmatmul.bf16.gmra.mxu0 %v307
  %v1494 = vpop.f32.mrf.mxu0
  %v1495 = vadd.f32 %v1326, %v1494
  %v1496 = vpop.f32.mrf.mxu0
  %v1497 = vadd.f32 %v1328, %v1496
  %1498 = vmatmul.bf16.gmra.mxu0 %v311
  %v1499 = vpop.f32.mrf.mxu0
  %v1500 = vadd.f32 %v1331, %v1499
  %v1501 = vpop.f32.mrf.mxu0
  %v1502 = vadd.f32 %v1333, %v1501
  %1503 = vmatmul.bf16.gmra.mxu0 %v315
  %v1504 = vpop.f32.mrf.mxu0
  %v1505 = vadd.f32 %v1336, %v1504
  %v1506 = vpop.f32.mrf.mxu0
  %v1507 = vadd.f32 %v1338, %v1506
  %1508 = vmatmul.bf16.gmra.mxu0 %v319
  %v1509 = vpop.f32.mrf.mxu0
  %v1510 = vadd.f32 %v1341, %v1509
  %v1511 = vpop.f32.mrf.mxu0
  %v1512 = vadd.f32 %v1343, %v1511
  %1513 = vmatmul.bf16.gmra.mxu0 %v323
  %v1514 = vpop.f32.mrf.mxu0
  %v1515 = vadd.f32 %v1346, %v1514
  %v1516 = vpop.f32.mrf.mxu0
  %v1517 = vadd.f32 %v1348, %v1516
  %1518 = vmatmul.bf16.gmra.mxu0 %v327
  %v1519 = vpop.f32.mrf.mxu0
  %v1520 = vadd.f32 %v1351, %v1519
  %v1521 = vpop.f32.mrf.mxu0
  %v1522 = vadd.f32 %v1353, %v1521
  %1523 = vmatmul.bf16.gmra.mxu0 %v331
  %v1524 = vpop.f32.mrf.mxu0
  %v1525 = vadd.f32 %v1356, %v1524
  %v1526 = vpop.f32.mrf.mxu0
  %v1527 = vadd.f32 %v1358, %v1526
  %1528 = vmatmul.bf16.gmra.mxu0 %v335
  %v1529 = vpop.f32.mrf.mxu0
  %v1530 = vadd.f32 %v1361, %v1529
  %v1531 = vpop.f32.mrf.mxu0
  %v1532 = vadd.f32 %v1363, %v1531
  %1533 = vmatmul.bf16.gmra.mxu0 %v339
  %v1534 = vpop.f32.mrf.mxu0
  %v1535 = vadd.f32 %v1366, %v1534
  %v1536 = vpop.f32.mrf.mxu0
  %v1537 = vadd.f32 %v1368, %v1536
  %1538 = vmatmul.bf16.gmra.mxu0 %v343
  %v1539 = vpop.f32.mrf.mxu0
  %v1540 = vadd.f32 %v1371, %v1539
  %v1541 = vpop.f32.mrf.mxu0
  %v1542 = vadd.f32 %v1373, %v1541
  %1543 = vmatmul.bf16.gmra.mxu0 %v347
  %v1544 = vpop.f32.mrf.mxu0
  %v1545 = vadd.f32 %v1376, %v1544
  %v1546 = vpop.f32.mrf.mxu0
  %v1547 = vadd.f32 %v1378, %v1546
  %1548 = vmatmul.bf16.gmra.mxu0 %v351
  %v1549 = vpop.f32.mrf.mxu0
  %v1550 = vadd.f32 %v1381, %v1549
  %v1551 = vpop.f32.mrf.mxu0
  %v1552 = vadd.f32 %v1383, %v1551
  %1553 = vmatmul.bf16.gmra.mxu0 %v355
  %v1554 = vpop.f32.mrf.mxu0
  %v1555 = vadd.f32 %v1386, %v1554
  %v1556 = vpop.f32.mrf.mxu0
  %v1557 = vadd.f32 %v1388, %v1556
  %1558 = vmatmul.bf16.gmra.mxu0 %v359
  %v1559 = vpop.f32.mrf.mxu0
  %v1560 = vadd.f32 %v1391, %v1559
  %v1561 = vpop.f32.mrf.mxu0
  %v1562 = vadd.f32 %v1393, %v1561
  %1563 = vmatmul.bf16.gmra.mxu0 %v363
  %v1564 = vpop.f32.mrf.mxu0
  %v1565 = vadd.f32 %v1396, %v1564
  %v1566 = vpop.f32.mrf.mxu0
  %v1567 = vadd.f32 %v1398, %v1566
  %1568 = vmatmul.bf16.gmra.mxu0 %v367
  %v1569 = vpop.f32.mrf.mxu0
  %v1570 = vadd.f32 %v1401, %v1569
  %v1571 = vpop.f32.mrf.mxu0
  %v1572 = vadd.f32 %v1403, %v1571
  %1573 = vmatmul.bf16.gmra.mxu0 %v371
  %v1574 = vpop.f32.mrf.mxu0
  %v1575 = vadd.f32 %v1406, %v1574
  %v1576 = vpop.f32.mrf.mxu0
  %v1577 = vadd.f32 %v1408, %v1576
  %1578 = vmatmul.bf16.gmra.mxu0 %v375
  %v1579 = vpop.f32.mrf.mxu0
  %v1580 = vadd.f32 %v1411, %v1579
  %v1581 = vpop.f32.mrf.mxu0
  %v1582 = vadd.f32 %v1413, %v1581
  %1583 = vmatmul.bf16.gmra.mxu0 %v379
  %v1584 = vpop.f32.mrf.mxu0
  %v1585 = vadd.f32 %v1416, %v1584
  %v1586 = vpop.f32.mrf.mxu0
  %v1587 = vadd.f32 %v1418, %v1586
  %1588 = vmatmul.bf16.gmra.mxu0 %v383
  %v1589 = vpop.f32.mrf.mxu0
  %v1590 = vadd.f32 %v1421, %v1589
  %v1591 = vpop.f32.mrf.mxu0
  %v1592 = vadd.f32 %v1423, %v1591
  %1593 = vmatmul.bf16.gmra.mxu0 %v387
  %v1594 = vpop.f32.mrf.mxu0
  %v1595 = vadd.f32 %v1426, %v1594
  %v1596 = vpop.f32.mrf.mxu0
  %v1597 = vadd.f32 %v1428, %v1596
  %1598 = vmatmul.bf16.gmra.mxu0 %v391
  %v1599 = vpop.f32.mrf.mxu0
  %v1600 = vadd.f32 %v1431, %v1599
  %v1601 = vpop.f32.mrf.mxu0
  %v1602 = vadd.f32 %v1433, %v1601
  %1603 = vmatmul.bf16.gmra.mxu0 %v395
  %v1604 = vpop.f32.mrf.mxu0
  %v1605 = vadd.f32 %v1436, %v1604
  %v1606 = vpop.f32.mrf.mxu0
  %v1607 = vadd.f32 %v1438, %v1606
  %1608 = vmatmul.bf16.gmra.mxu0 %v399
  %v1609 = vpop.f32.mrf.mxu0
  %v1610 = vadd.f32 %v1441, %v1609
  %v1611 = vpop.f32.mrf.mxu0
  %v1612 = vadd.f32 %v1443, %v1611
  %1613 = vmatmul.bf16.gmra.mxu0 %v403
  %v1614 = vpop.f32.mrf.mxu0
  %v1615 = vadd.f32 %v1446, %v1614
  %v1616 = vpop.f32.mrf.mxu0
  %v1617 = vadd.f32 %v1448, %v1616
  %1618 = vdwg.mxu0
  %1619 = vmatpush.bf16.msra.mxu0 0
  %1620 = vmatpush.bf16.msra.mxu0 0
  %1621 = vmatpush.bf16.msra.mxu0 0
  %1622 = vmatpush.bf16.msra.mxu0 0
  %1623 = vmatpush.bf16.msra.mxu0 0
  %1624 = vmatpush.bf16.msra.mxu0 0
  %1625 = vmatpush.bf16.msra.mxu0 0
  %1626 = vmatpush.bf16.msra.mxu0 %v911
  %1627 = vmatmul.bf16.gmra.mxu0 %v1017
  %v1628 = vpop.f32.mrf.mxu0
  %v1629 = vadd.f32 %v1460, %v1628
  %v1630 = vpop.f32.mrf.mxu0
  %v1631 = vadd.f32 %v1462, %v1630
  %1632 = vmatmul.bf16.gmra.mxu0 %v1020
  %v1633 = vpop.f32.mrf.mxu0
  %v1634 = vadd.f32 %v1465, %v1633
  %v1635 = vpop.f32.mrf.mxu0
  %v1636 = vadd.f32 %v1467, %v1635
  %1637 = vmatmul.bf16.gmra.mxu0 %v1023
  %v1638 = vpop.f32.mrf.mxu0
  %v1639 = vadd.f32 %v1470, %v1638
  %v1640 = vpop.f32.mrf.mxu0
  %v1641 = vadd.f32 %v1472, %v1640
  %1642 = vmatmul.bf16.gmra.mxu0 %v1026
  %v1643 = vpop.f32.mrf.mxu0
  %v1644 = vadd.f32 %v1475, %v1643
  %v1645 = vpop.f32.mrf.mxu0
  %v1646 = vadd.f32 %v1477, %v1645
  %1647 = vmatmul.bf16.gmra.mxu0 %v1029
  %v1648 = vpop.f32.mrf.mxu0
  %v1649 = vadd.f32 %v1480, %v1648
  %v1650 = vpop.f32.mrf.mxu0
  %v1651 = vadd.f32 %v1482, %v1650
  %1652 = vmatmul.bf16.gmra.mxu0 %v1032
  %v1653 = vpop.f32.mrf.mxu0
  %v1654 = vadd.f32 %v1485, %v1653
  %v1655 = vpop.f32.mrf.mxu0
  %v1656 = vadd.f32 %v1487, %v1655
  %1657 = vmatmul.bf16.gmra.mxu0 %v1035
  %v1658 = vpop.f32.mrf.mxu0
  %v1659 = vadd.f32 %v1490, %v1658
  %v1660 = vpop.f32.mrf.mxu0
  %v1661 = vadd.f32 %v1492, %v1660
  %1662 = vmatmul.bf16.gmra.mxu0 %v1038
  %v1663 = vpop.f32.mrf.mxu0
  %v1664 = vadd.f32 %v1495, %v1663
  %v1665 = vpop.f32.mrf.mxu0
  %v1666 = vadd.f32 %v1497, %v1665
  %1667 = vmatmul.bf16.gmra.mxu0 %v1041
  %v1668 = vpop.f32.mrf.mxu0
  %v1669 = vadd.f32 %v1500, %v1668
  %v1670 = vpop.f32.mrf.mxu0
  %v1671 = vadd.f32 %v1502, %v1670
  %1672 = vmatmul.bf16.gmra.mxu0 %v1044
  %v1673 = vpop.f32.mrf.mxu0
  %v1674 = vadd.f32 %v1505, %v1673
  %v1675 = vpop.f32.mrf.mxu0
  %v1676 = vadd.f32 %v1507, %v1675
  %1677 = vmatmul.bf16.gmra.mxu0 %v1047
  %v1678 = vpop.f32.mrf.mxu0
  %v1679 = vadd.f32 %v1510, %v1678
  %v1680 = vpop.f32.mrf.mxu0
  %v1681 = vadd.f32 %v1512, %v1680
  %1682 = vmatmul.bf16.gmra.mxu0 %v1050
  %v1683 = vpop.f32.mrf.mxu0
  %v1684 = vadd.f32 %v1515, %v1683
  %v1685 = vpop.f32.mrf.mxu0
  %v1686 = vadd.f32 %v1517, %v1685
  %1687 = vmatmul.bf16.gmra.mxu0 %v1053
  %v1688 = vpop.f32.mrf.mxu0
  %v1689 = vadd.f32 %v1520, %v1688
  %v1690 = vpop.f32.mrf.mxu0
  %v1691 = vadd.f32 %v1522, %v1690
  %1692 = vmatmul.bf16.gmra.mxu0 %v1056
  %v1693 = vpop.f32.mrf.mxu0
  %v1694 = vadd.f32 %v1525, %v1693
  %v1695 = vpop.f32.mrf.mxu0
  %v1696 = vadd.f32 %v1527, %v1695
  %1697 = vmatmul.bf16.gmra.mxu0 %v1059
  %v1698 = vpop.f32.mrf.mxu0
  %v1699 = vadd.f32 %v1530, %v1698
  %v1700 = vpop.f32.mrf.mxu0
  %v1701 = vadd.f32 %v1532, %v1700
  %1702 = vmatmul.bf16.gmra.mxu0 %v1062
  %v1703 = vpop.f32.mrf.mxu0
  %v1704 = vadd.f32 %v1535, %v1703
  %v1705 = vpop.f32.mrf.mxu0
  %v1706 = vadd.f32 %v1537, %v1705
  %1707 = vmatmul.bf16.gmra.mxu0 %v1065
  %v1708 = vpop.f32.mrf.mxu0
  %v1709 = vadd.f32 %v1540, %v1708
  %v1710 = vpop.f32.mrf.mxu0
  %v1711 = vadd.f32 %v1542, %v1710
  %1712 = vmatmul.bf16.gmra.mxu0 %v1068
  %v1713 = vpop.f32.mrf.mxu0
  %v1714 = vadd.f32 %v1545, %v1713
  %v1715 = vpop.f32.mrf.mxu0
  %v1716 = vadd.f32 %v1547, %v1715
  %1717 = vmatmul.bf16.gmra.mxu0 %v1071
  %v1718 = vpop.f32.mrf.mxu0
  %v1719 = vadd.f32 %v1550, %v1718
  %v1720 = vpop.f32.mrf.mxu0
  %v1721 = vadd.f32 %v1552, %v1720
  %1722 = vmatmul.bf16.gmra.mxu0 %v1074
  %v1723 = vpop.f32.mrf.mxu0
  %v1724 = vadd.f32 %v1555, %v1723
  %v1725 = vpop.f32.mrf.mxu0
  %v1726 = vadd.f32 %v1557, %v1725
  %1727 = vmatmul.bf16.gmra.mxu0 %v1077
  %v1728 = vpop.f32.mrf.mxu0
  %v1729 = vadd.f32 %v1560, %v1728
  %v1730 = vpop.f32.mrf.mxu0
  %v1731 = vadd.f32 %v1562, %v1730
  %1732 = vmatmul.bf16.gmra.mxu0 %v1080
  %v1733 = vpop.f32.mrf.mxu0
  %v1734 = vadd.f32 %v1565, %v1733
  %v1735 = vpop.f32.mrf.mxu0
  %v1736 = vadd.f32 %v1567, %v1735
  %1737 = vmatmul.bf16.gmra.mxu0 %v1083
  %v1738 = vpop.f32.mrf.mxu0
  %v1739 = vadd.f32 %v1570, %v1738
  %v1740 = vpop.f32.mrf.mxu0
  %v1741 = vadd.f32 %v1572, %v1740
  %1742 = vmatmul.bf16.gmra.mxu0 %v1086
  %v1743 = vpop.f32.mrf.mxu0
  %v1744 = vadd.f32 %v1575, %v1743
  %v1745 = vpop.f32.mrf.mxu0
  %v1746 = vadd.f32 %v1577, %v1745
  %1747 = vmatmul.bf16.gmra.mxu0 %v1089
  %v1748 = vpop.f32.mrf.mxu0
  %v1749 = vadd.f32 %v1580, %v1748
  %v1750 = vpop.f32.mrf.mxu0
  %v1751 = vadd.f32 %v1582, %v1750
  %1752 = vmatmul.bf16.gmra.mxu0 %v1092
  %v1753 = vpop.f32.mrf.mxu0
  %v1754 = vadd.f32 %v1585, %v1753
  %v1755 = vpop.f32.mrf.mxu0
  %v1756 = vadd.f32 %v1587, %v1755
  %1757 = vmatmul.bf16.gmra.mxu0 %v1095
  %v1758 = vpop.f32.mrf.mxu0
  %v1759 = vadd.f32 %v1590, %v1758
  %v1760 = vpop.f32.mrf.mxu0
  %v1761 = vadd.f32 %v1592, %v1760
  %1762 = vmatmul.bf16.gmra.mxu0 %v1098
  %v1763 = vpop.f32.mrf.mxu0
  %v1764 = vadd.f32 %v1595, %v1763
  %v1765 = vpop.f32.mrf.mxu0
  %v1766 = vadd.f32 %v1597, %v1765
  %1767 = vmatmul.bf16.gmra.mxu0 %v1101
  %v1768 = vpop.f32.mrf.mxu0
  %v1769 = vadd.f32 %v1600, %v1768
  %v1770 = vpop.f32.mrf.mxu0
  %v1771 = vadd.f32 %v1602, %v1770
  %1772 = vmatmul.bf16.gmra.mxu0 %v1104
  %v1773 = vpop.f32.mrf.mxu0
  %v1774 = vadd.f32 %v1605, %v1773
  %v1775 = vpop.f32.mrf.mxu0
  %v1776 = vadd.f32 %v1607, %v1775
  %1777 = vmatmul.bf16.gmra.mxu0 %v1107
  %v1778 = vpop.f32.mrf.mxu0
  %v1779 = vadd.f32 %v1610, %v1778
  %v1780 = vpop.f32.mrf.mxu0
  %v1781 = vadd.f32 %v1612, %v1780
  %1782 = vmatmul.bf16.gmra.mxu0 %v1110
  %v1783 = vpop.f32.mrf.mxu0
  %v1784 = vadd.f32 %v1615, %v1783
  %v1785 = vpop.f32.mrf.mxu0
  %v1786 = vadd.f32 %v1617, %v1785
  %1787 = vdwg.mxu0
  %1788 = vmatpush.bf16.msra.mxu0 %v844
  %1789 = vmatpush.bf16.msra.mxu0 %v840
  %1790 = vmatpush.bf16.msra.mxu0 %v836
  %1791 = vmatpush.bf16.msra.mxu0 %v832
  %1792 = vmatpush.bf16.msra.mxu0 %v828
  %1793 = vmatpush.bf16.msra.mxu0 %v824
  %1794 = vmatpush.bf16.msra.mxu0 %v820
  %1795 = vmatpush.bf16.msra.mxu0 %v816
  %1796 = vmatmul.bf16.gmra.mxu0 %v277
  %v1797 = vpop.f32.mrf.mxu0
  %v1798 = vadd.f32 %v508, %v1797
  %v1799 = vpop.f32.mrf.mxu0
  %v1800 = vadd.f32 %v508, %v1799
  %1801 = vmatmul.bf16.gmra.mxu0 %v281
  %v1802 = vpop.f32.mrf.mxu0
  %v1803 = vadd.f32 %v508, %v1802
  %v1804 = vpop.f32.mrf.mxu0
  %v1805 = vadd.f32 %v508, %v1804
  %1806 = vmatmul.bf16.gmra.mxu0 %v285
  %v1807 = vpop.f32.mrf.mxu0
  %v1808 = vadd.f32 %v508, %v1807
  %v1809 = vpop.f32.mrf.mxu0
  %v1810 = vadd.f32 %v508, %v1809
  %1811 = vmatmul.bf16.gmra.mxu0 %v289
  %v1812 = vpop.f32.mrf.mxu0
  %v1813 = vadd.f32 %v508, %v1812
  %v1814 = vpop.f32.mrf.mxu0
  %v1815 = vadd.f32 %v508, %v1814
  %1816 = vmatmul.bf16.gmra.mxu0 %v293
  %v1817 = vpop.f32.mrf.mxu0
  %v1818 = vadd.f32 %v508, %v1817
  %v1819 = vpop.f32.mrf.mxu0
  %v1820 = vadd.f32 %v508, %v1819
  %1821 = vmatmul.bf16.gmra.mxu0 %v297
  %v1822 = vpop.f32.mrf.mxu0
  %v1823 = vadd.f32 %v508, %v1822
  %v1824 = vpop.f32.mrf.mxu0
  %v1825 = vadd.f32 %v508, %v1824
  %1826 = vmatmul.bf16.gmra.mxu0 %v301
  %v1827 = vpop.f32.mrf.mxu0
  %v1828 = vadd.f32 %v508, %v1827
  %v1829 = vpop.f32.mrf.mxu0
  %v1830 = vadd.f32 %v508, %v1829
  %1831 = vmatmul.bf16.gmra.mxu0 %v305
  %v1832 = vpop.f32.mrf.mxu0
  %v1833 = vadd.f32 %v508, %v1832
  %v1834 = vpop.f32.mrf.mxu0
  %v1835 = vadd.f32 %v508, %v1834
  %1836 = vmatmul.bf16.gmra.mxu0 %v309
  %v1837 = vpop.f32.mrf.mxu0
  %v1838 = vadd.f32 %v508, %v1837
  %v1839 = vpop.f32.mrf.mxu0
  %v1840 = vadd.f32 %v508, %v1839
  %1841 = vmatmul.bf16.gmra.mxu0 %v313
  %v1842 = vpop.f32.mrf.mxu0
  %v1843 = vadd.f32 %v508, %v1842
  %v1844 = vpop.f32.mrf.mxu0
  %v1845 = vadd.f32 %v508, %v1844
  %1846 = vmatmul.bf16.gmra.mxu0 %v317
  %v1847 = vpop.f32.mrf.mxu0
  %v1848 = vadd.f32 %v508, %v1847
  %v1849 = vpop.f32.mrf.mxu0
  %v1850 = vadd.f32 %v508, %v1849
  %1851 = vmatmul.bf16.gmra.mxu0 %v321
  %v1852 = vpop.f32.mrf.mxu0
  %v1853 = vadd.f32 %v508, %v1852
  %v1854 = vpop.f32.mrf.mxu0
  %v1855 = vadd.f32 %v508, %v1854
  %1856 = vmatmul.bf16.gmra.mxu0 %v325
  %v1857 = vpop.f32.mrf.mxu0
  %v1858 = vadd.f32 %v508, %v1857
  %v1859 = vpop.f32.mrf.mxu0
  %v1860 = vadd.f32 %v508, %v1859
  %1861 = vmatmul.bf16.gmra.mxu0 %v329
  %v1862 = vpop.f32.mrf.mxu0
  %v1863 = vadd.f32 %v508, %v1862
  %v1864 = vpop.f32.mrf.mxu0
  %v1865 = vadd.f32 %v508, %v1864
  %1866 = vmatmul.bf16.gmra.mxu0 %v333
  %v1867 = vpop.f32.mrf.mxu0
  %v1868 = vadd.f32 %v508, %v1867
  %v1869 = vpop.f32.mrf.mxu0
  %v1870 = vadd.f32 %v508, %v1869
  %1871 = vmatmul.bf16.gmra.mxu0 %v337
  %v1872 = vpop.f32.mrf.mxu0
  %v1873 = vadd.f32 %v508, %v1872
  %v1874 = vpop.f32.mrf.mxu0
  %v1875 = vadd.f32 %v508, %v1874
  %1876 = vmatmul.bf16.gmra.mxu0 %v341
  %v1877 = vpop.f32.mrf.mxu0
  %v1878 = vadd.f32 %v508, %v1877
  %v1879 = vpop.f32.mrf.mxu0
  %v1880 = vadd.f32 %v508, %v1879
  %1881 = vmatmul.bf16.gmra.mxu0 %v345
  %v1882 = vpop.f32.mrf.mxu0
  %v1883 = vadd.f32 %v508, %v1882
  %v1884 = vpop.f32.mrf.mxu0
  %v1885 = vadd.f32 %v508, %v1884
  %1886 = vmatmul.bf16.gmra.mxu0 %v349
  %v1887 = vpop.f32.mrf.mxu0
  %v1888 = vadd.f32 %v508, %v1887
  %v1889 = vpop.f32.mrf.mxu0
  %v1890 = vadd.f32 %v508, %v1889
  %1891 = vmatmul.bf16.gmra.mxu0 %v353
  %v1892 = vpop.f32.mrf.mxu0
  %v1893 = vadd.f32 %v508, %v1892
  %v1894 = vpop.f32.mrf.mxu0
  %v1895 = vadd.f32 %v508, %v1894
  %1896 = vmatmul.bf16.gmra.mxu0 %v357
  %v1897 = vpop.f32.mrf.mxu0
  %v1898 = vadd.f32 %v508, %v1897
  %v1899 = vpop.f32.mrf.mxu0
  %v1900 = vadd.f32 %v508, %v1899
  %1901 = vmatmul.bf16.gmra.mxu0 %v361
  %v1902 = vpop.f32.mrf.mxu0
  %v1903 = vadd.f32 %v508, %v1902
  %v1904 = vpop.f32.mrf.mxu0
  %v1905 = vadd.f32 %v508, %v1904
  %1906 = vmatmul.bf16.gmra.mxu0 %v365
  %v1907 = vpop.f32.mrf.mxu0
  %v1908 = vadd.f32 %v508, %v1907
  %v1909 = vpop.f32.mrf.mxu0
  %v1910 = vadd.f32 %v508, %v1909
  %1911 = vmatmul.bf16.gmra.mxu0 %v369
  %v1912 = vpop.f32.mrf.mxu0
  %v1913 = vadd.f32 %v508, %v1912
  %v1914 = vpop.f32.mrf.mxu0
  %v1915 = vadd.f32 %v508, %v1914
  %1916 = vmatmul.bf16.gmra.mxu0 %v373
  %v1917 = vpop.f32.mrf.mxu0
  %v1918 = vadd.f32 %v508, %v1917
  %v1919 = vpop.f32.mrf.mxu0
  %v1920 = vadd.f32 %v508, %v1919
  %1921 = vmatmul.bf16.gmra.mxu0 %v377
  %v1922 = vpop.f32.mrf.mxu0
  %v1923 = vadd.f32 %v508, %v1922
  %v1924 = vpop.f32.mrf.mxu0
  %v1925 = vadd.f32 %v508, %v1924
  %1926 = vmatmul.bf16.gmra.mxu0 %v381
  %v1927 = vpop.f32.mrf.mxu0
  %v1928 = vadd.f32 %v508, %v1927
  %v1929 = vpop.f32.mrf.mxu0
  %v1930 = vadd.f32 %v508, %v1929
  %1931 = vmatmul.bf16.gmra.mxu0 %v385
  %v1932 = vpop.f32.mrf.mxu0
  %v1933 = vadd.f32 %v508, %v1932
  %v1934 = vpop.f32.mrf.mxu0
  %v1935 = vadd.f32 %v508, %v1934
  %1936 = vmatmul.bf16.gmra.mxu0 %v389
  %v1937 = vpop.f32.mrf.mxu0
  %v1938 = vadd.f32 %v508, %v1937
  %v1939 = vpop.f32.mrf.mxu0
  %v1940 = vadd.f32 %v508, %v1939
  %1941 = vmatmul.bf16.gmra.mxu0 %v393
  %v1942 = vpop.f32.mrf.mxu0
  %v1943 = vadd.f32 %v508, %v1942
  %v1944 = vpop.f32.mrf.mxu0
  %v1945 = vadd.f32 %v508, %v1944
  %1946 = vmatmul.bf16.gmra.mxu0 %v397
  %v1947 = vpop.f32.mrf.mxu0
  %v1948 = vadd.f32 %v508, %v1947
  %v1949 = vpop.f32.mrf.mxu0
  %v1950 = vadd.f32 %v508, %v1949
  %1951 = vmatmul.bf16.gmra.mxu0 %v401
  %v1952 = vpop.f32.mrf.mxu0
  %v1953 = vadd.f32 %v508, %v1952
  %v1954 = vpop.f32.mrf.mxu0
  %v1955 = vadd.f32 %v508, %v1954
  %1956 = vdwg.mxu0
  %1957 = vmatpush.bf16.msra.mxu0 %v876
  %1958 = vmatpush.bf16.msra.mxu0 %v872
  %1959 = vmatpush.bf16.msra.mxu0 %v868
  %1960 = vmatpush.bf16.msra.mxu0 %v864
  %1961 = vmatpush.bf16.msra.mxu0 %v860
  %1962 = vmatpush.bf16.msra.mxu0 %v856
  %1963 = vmatpush.bf16.msra.mxu0 %v852
  %1964 = vmatpush.bf16.msra.mxu0 %v848
  %1965 = vmatmul.bf16.gmra.mxu0 %v278
  %v1966 = vpop.f32.mrf.mxu0
  %v1967 = vadd.f32 %v1798, %v1966
  %v1968 = vpop.f32.mrf.mxu0
  %v1969 = vadd.f32 %v1800, %v1968
  %1970 = vmatmul.bf16.gmra.mxu0 %v282
  %v1971 = vpop.f32.mrf.mxu0
  %v1972 = vadd.f32 %v1803, %v1971
  %v1973 = vpop.f32.mrf.mxu0
  %v1974 = vadd.f32 %v1805, %v1973
  %1975 = vmatmul.bf16.gmra.mxu0 %v286
  %v1976 = vpop.f32.mrf.mxu0
  %v1977 = vadd.f32 %v1808, %v1976
  %v1978 = vpop.f32.mrf.mxu0
  %v1979 = vadd.f32 %v1810, %v1978
  %1980 = vmatmul.bf16.gmra.mxu0 %v290
  %v1981 = vpop.f32.mrf.mxu0
  %v1982 = vadd.f32 %v1813, %v1981
  %v1983 = vpop.f32.mrf.mxu0
  %v1984 = vadd.f32 %v1815, %v1983
  %1985 = vmatmul.bf16.gmra.mxu0 %v294
  %v1986 = vpop.f32.mrf.mxu0
  %v1987 = vadd.f32 %v1818, %v1986
  %v1988 = vpop.f32.mrf.mxu0
  %v1989 = vadd.f32 %v1820, %v1988
  %1990 = vmatmul.bf16.gmra.mxu0 %v298
  %v1991 = vpop.f32.mrf.mxu0
  %v1992 = vadd.f32 %v1823, %v1991
  %v1993 = vpop.f32.mrf.mxu0
  %v1994 = vadd.f32 %v1825, %v1993
  %1995 = vmatmul.bf16.gmra.mxu0 %v302
  %v1996 = vpop.f32.mrf.mxu0
  %v1997 = vadd.f32 %v1828, %v1996
  %v1998 = vpop.f32.mrf.mxu0
  %v1999 = vadd.f32 %v1830, %v1998
  %2000 = vmatmul.bf16.gmra.mxu0 %v306
  %v2001 = vpop.f32.mrf.mxu0
  %v2002 = vadd.f32 %v1833, %v2001
  %v2003 = vpop.f32.mrf.mxu0
  %v2004 = vadd.f32 %v1835, %v2003
  %2005 = vmatmul.bf16.gmra.mxu0 %v310
  %v2006 = vpop.f32.mrf.mxu0
  %v2007 = vadd.f32 %v1838, %v2006
  %v2008 = vpop.f32.mrf.mxu0
  %v2009 = vadd.f32 %v1840, %v2008
  %2010 = vmatmul.bf16.gmra.mxu0 %v314
  %v2011 = vpop.f32.mrf.mxu0
  %v2012 = vadd.f32 %v1843, %v2011
  %v2013 = vpop.f32.mrf.mxu0
  %v2014 = vadd.f32 %v1845, %v2013
  %2015 = vmatmul.bf16.gmra.mxu0 %v318
  %v2016 = vpop.f32.mrf.mxu0
  %v2017 = vadd.f32 %v1848, %v2016
  %v2018 = vpop.f32.mrf.mxu0
  %v2019 = vadd.f32 %v1850, %v2018
  %2020 = vmatmul.bf16.gmra.mxu0 %v322
  %v2021 = vpop.f32.mrf.mxu0
  %v2022 = vadd.f32 %v1853, %v2021
  %v2023 = vpop.f32.mrf.mxu0
  %v2024 = vadd.f32 %v1855, %v2023
  %2025 = vmatmul.bf16.gmra.mxu0 %v326
  %v2026 = vpop.f32.mrf.mxu0
  %v2027 = vadd.f32 %v1858, %v2026
  %v2028 = vpop.f32.mrf.mxu0
  %v2029 = vadd.f32 %v1860, %v2028
  %2030 = vmatmul.bf16.gmra.mxu0 %v330
  %v2031 = vpop.f32.mrf.mxu0
  %v2032 = vadd.f32 %v1863, %v2031
  %v2033 = vpop.f32.mrf.mxu0
  %v2034 = vadd.f32 %v1865, %v2033
  %2035 = vmatmul.bf16.gmra.mxu0 %v334
  %v2036 = vpop.f32.mrf.mxu0
  %v2037 = vadd.f32 %v1868, %v2036
  %v2038 = vpop.f32.mrf.mxu0
  %v2039 = vadd.f32 %v1870, %v2038
  %2040 = vmatmul.bf16.gmra.mxu0 %v338
  %v2041 = vpop.f32.mrf.mxu0
  %v2042 = vadd.f32 %v1873, %v2041
  %v2043 = vpop.f32.mrf.mxu0
  %v2044 = vadd.f32 %v1875, %v2043
  %2045 = vmatmul.bf16.gmra.mxu0 %v342
  %v2046 = vpop.f32.mrf.mxu0
  %v2047 = vadd.f32 %v1878, %v2046
  %v2048 = vpop.f32.mrf.mxu0
  %v2049 = vadd.f32 %v1880, %v2048
  %2050 = vmatmul.bf16.gmra.mxu0 %v346
  %v2051 = vpop.f32.mrf.mxu0
  %v2052 = vadd.f32 %v1883, %v2051
  %v2053 = vpop.f32.mrf.mxu0
  %v2054 = vadd.f32 %v1885, %v2053
  %2055 = vmatmul.bf16.gmra.mxu0 %v350
  %v2056 = vpop.f32.mrf.mxu0
  %v2057 = vadd.f32 %v1888, %v2056
  %v2058 = vpop.f32.mrf.mxu0
  %v2059 = vadd.f32 %v1890, %v2058
  %2060 = vmatmul.bf16.gmra.mxu0 %v354
  %v2061 = vpop.f32.mrf.mxu0
  %v2062 = vadd.f32 %v1893, %v2061
  %v2063 = vpop.f32.mrf.mxu0
  %v2064 = vadd.f32 %v1895, %v2063
  %2065 = vmatmul.bf16.gmra.mxu0 %v358
  %v2066 = vpop.f32.mrf.mxu0
  %v2067 = vadd.f32 %v1898, %v2066
  %v2068 = vpop.f32.mrf.mxu0
  %v2069 = vadd.f32 %v1900, %v2068
  %2070 = vmatmul.bf16.gmra.mxu0 %v362
  %v2071 = vpop.f32.mrf.mxu0
  %v2072 = vadd.f32 %v1903, %v2071
  %v2073 = vpop.f32.mrf.mxu0
  %v2074 = vadd.f32 %v1905, %v2073
  %2075 = vmatmul.bf16.gmra.mxu0 %v366
  %v2076 = vpop.f32.mrf.mxu0
  %v2077 = vadd.f32 %v1908, %v2076
  %v2078 = vpop.f32.mrf.mxu0
  %v2079 = vadd.f32 %v1910, %v2078
  %2080 = vmatmul.bf16.gmra.mxu0 %v370
  %v2081 = vpop.f32.mrf.mxu0
  %v2082 = vadd.f32 %v1913, %v2081
  %v2083 = vpop.f32.mrf.mxu0
  %v2084 = vadd.f32 %v1915, %v2083
  %2085 = vmatmul.bf16.gmra.mxu0 %v374
  %v2086 = vpop.f32.mrf.mxu0
  %v2087 = vadd.f32 %v1918, %v2086
  %v2088 = vpop.f32.mrf.mxu0
  %v2089 = vadd.f32 %v1920, %v2088
  %2090 = vmatmul.bf16.gmra.mxu0 %v378
  %v2091 = vpop.f32.mrf.mxu0
  %v2092 = vadd.f32 %v1923, %v2091
  %v2093 = vpop.f32.mrf.mxu0
  %v2094 = vadd.f32 %v1925, %v2093
  %2095 = vmatmul.bf16.gmra.mxu0 %v382
  %v2096 = vpop.f32.mrf.mxu0
  %v2097 = vadd.f32 %v1928, %v2096
  %v2098 = vpop.f32.mrf.mxu0
  %v2099 = vadd.f32 %v1930, %v2098
  %2100 = vmatmul.bf16.gmra.mxu0 %v386
  %v2101 = vpop.f32.mrf.mxu0
  %v2102 = vadd.f32 %v1933, %v2101
  %v2103 = vpop.f32.mrf.mxu0
  %v2104 = vadd.f32 %v1935, %v2103
  %2105 = vmatmul.bf16.gmra.mxu0 %v390
  %v2106 = vpop.f32.mrf.mxu0
  %v2107 = vadd.f32 %v1938, %v2106
  %v2108 = vpop.f32.mrf.mxu0
  %v2109 = vadd.f32 %v1940, %v2108
  %2110 = vmatmul.bf16.gmra.mxu0 %v394
  %v2111 = vpop.f32.mrf.mxu0
  %v2112 = vadd.f32 %v1943, %v2111
  %v2113 = vpop.f32.mrf.mxu0
  %v2114 = vadd.f32 %v1945, %v2113
  %2115 = vmatmul.bf16.gmra.mxu0 %v398
  %v2116 = vpop.f32.mrf.mxu0
  %v2117 = vadd.f32 %v1948, %v2116
  %v2118 = vpop.f32.mrf.mxu0
  %v2119 = vadd.f32 %v1950, %v2118
  %2120 = vmatmul.bf16.gmra.mxu0 %v402
  %v2121 = vpop.f32.mrf.mxu0
  %v2122 = vadd.f32 %v1953, %v2121
  %v2123 = vpop.f32.mrf.mxu0
  %v2124 = vadd.f32 %v1955, %v2123
  %2125 = vdwg.mxu0
  %2126 = vmatpush.bf16.msra.mxu0 %v908
  %2127 = vmatpush.bf16.msra.mxu0 %v904
  %2128 = vmatpush.bf16.msra.mxu0 %v900
  %2129 = vmatpush.bf16.msra.mxu0 %v896
  %2130 = vmatpush.bf16.msra.mxu0 %v892
  %2131 = vmatpush.bf16.msra.mxu0 %v888
  %2132 = vmatpush.bf16.msra.mxu0 %v884
  %2133 = vmatpush.bf16.msra.mxu0 %v880
  %2134 = vmatmul.bf16.gmra.mxu0 %v279
  %v2135 = vpop.f32.mrf.mxu0
  %v2136 = vadd.f32 %v1967, %v2135
  %v2137 = vpop.f32.mrf.mxu0
  %v2138 = vadd.f32 %v1969, %v2137
  %2139 = vmatmul.bf16.gmra.mxu0 %v283
  %v2140 = vpop.f32.mrf.mxu0
  %v2141 = vadd.f32 %v1972, %v2140
  %v2142 = vpop.f32.mrf.mxu0
  %v2143 = vadd.f32 %v1974, %v2142
  %2144 = vmatmul.bf16.gmra.mxu0 %v287
  %v2145 = vpop.f32.mrf.mxu0
  %v2146 = vadd.f32 %v1977, %v2145
  %v2147 = vpop.f32.mrf.mxu0
  %v2148 = vadd.f32 %v1979, %v2147
  %2149 = vmatmul.bf16.gmra.mxu0 %v291
  %v2150 = vpop.f32.mrf.mxu0
  %v2151 = vadd.f32 %v1982, %v2150
  %v2152 = vpop.f32.mrf.mxu0
  %v2153 = vadd.f32 %v1984, %v2152
  %2154 = vmatmul.bf16.gmra.mxu0 %v295
  %v2155 = vpop.f32.mrf.mxu0
  %v2156 = vadd.f32 %v1987, %v2155
  %v2157 = vpop.f32.mrf.mxu0
  %v2158 = vadd.f32 %v1989, %v2157
  %2159 = vmatmul.bf16.gmra.mxu0 %v299
  %v2160 = vpop.f32.mrf.mxu0
  %v2161 = vadd.f32 %v1992, %v2160
  %v2162 = vpop.f32.mrf.mxu0
  %v2163 = vadd.f32 %v1994, %v2162
  %2164 = vmatmul.bf16.gmra.mxu0 %v303
  %v2165 = vpop.f32.mrf.mxu0
  %v2166 = vadd.f32 %v1997, %v2165
  %v2167 = vpop.f32.mrf.mxu0
  %v2168 = vadd.f32 %v1999, %v2167
  %2169 = vmatmul.bf16.gmra.mxu0 %v307
  %v2170 = vpop.f32.mrf.mxu0
  %v2171 = vadd.f32 %v2002, %v2170
  %v2172 = vpop.f32.mrf.mxu0
  %v2173 = vadd.f32 %v2004, %v2172
  %2174 = vmatmul.bf16.gmra.mxu0 %v311
  %v2175 = vpop.f32.mrf.mxu0
  %v2176 = vadd.f32 %v2007, %v2175
  %v2177 = vpop.f32.mrf.mxu0
  %v2178 = vadd.f32 %v2009, %v2177
  %2179 = vmatmul.bf16.gmra.mxu0 %v315
  %v2180 = vpop.f32.mrf.mxu0
  %v2181 = vadd.f32 %v2012, %v2180
  %v2182 = vpop.f32.mrf.mxu0
  %v2183 = vadd.f32 %v2014, %v2182
  %2184 = vmatmul.bf16.gmra.mxu0 %v319
  %v2185 = vpop.f32.mrf.mxu0
  %v2186 = vadd.f32 %v2017, %v2185
  %v2187 = vpop.f32.mrf.mxu0
  %v2188 = vadd.f32 %v2019, %v2187
  %2189 = vmatmul.bf16.gmra.mxu0 %v323
  %v2190 = vpop.f32.mrf.mxu0
  %v2191 = vadd.f32 %v2022, %v2190
  %v2192 = vpop.f32.mrf.mxu0
  %v2193 = vadd.f32 %v2024, %v2192
  %2194 = vmatmul.bf16.gmra.mxu0 %v327
  %v2195 = vpop.f32.mrf.mxu0
  %v2196 = vadd.f32 %v2027, %v2195
  %v2197 = vpop.f32.mrf.mxu0
  %v2198 = vadd.f32 %v2029, %v2197
  %2199 = vmatmul.bf16.gmra.mxu0 %v331
  %v2200 = vpop.f32.mrf.mxu0
  %v2201 = vadd.f32 %v2032, %v2200
  %v2202 = vpop.f32.mrf.mxu0
  %v2203 = vadd.f32 %v2034, %v2202
  %2204 = vmatmul.bf16.gmra.mxu0 %v335
  %v2205 = vpop.f32.mrf.mxu0
  %v2206 = vadd.f32 %v2037, %v2205
  %v2207 = vpop.f32.mrf.mxu0
  %v2208 = vadd.f32 %v2039, %v2207
  %2209 = vmatmul.bf16.gmra.mxu0 %v339
  %v2210 = vpop.f32.mrf.mxu0
  %v2211 = vadd.f32 %v2042, %v2210
  %v2212 = vpop.f32.mrf.mxu0
  %v2213 = vadd.f32 %v2044, %v2212
  %2214 = vmatmul.bf16.gmra.mxu0 %v343
  %v2215 = vpop.f32.mrf.mxu0
  %v2216 = vadd.f32 %v2047, %v2215
  %v2217 = vpop.f32.mrf.mxu0
  %v2218 = vadd.f32 %v2049, %v2217
  %2219 = vmatmul.bf16.gmra.mxu0 %v347
  %v2220 = vpop.f32.mrf.mxu0
  %v2221 = vadd.f32 %v2052, %v2220
  %v2222 = vpop.f32.mrf.mxu0
  %v2223 = vadd.f32 %v2054, %v2222
  %2224 = vmatmul.bf16.gmra.mxu0 %v351
  %v2225 = vpop.f32.mrf.mxu0
  %v2226 = vadd.f32 %v2057, %v2225
  %v2227 = vpop.f32.mrf.mxu0
  %v2228 = vadd.f32 %v2059, %v2227
  %2229 = vmatmul.bf16.gmra.mxu0 %v355
  %v2230 = vpop.f32.mrf.mxu0
  %v2231 = vadd.f32 %v2062, %v2230
  %v2232 = vpop.f32.mrf.mxu0
  %v2233 = vadd.f32 %v2064, %v2232
  %2234 = vmatmul.bf16.gmra.mxu0 %v359
  %v2235 = vpop.f32.mrf.mxu0
  %v2236 = vadd.f32 %v2067, %v2235
  %v2237 = vpop.f32.mrf.mxu0
  %v2238 = vadd.f32 %v2069, %v2237
  %2239 = vmatmul.bf16.gmra.mxu0 %v363
  %v2240 = vpop.f32.mrf.mxu0
  %v2241 = vadd.f32 %v2072, %v2240
  %v2242 = vpop.f32.mrf.mxu0
  %v2243 = vadd.f32 %v2074, %v2242
  %2244 = vmatmul.bf16.gmra.mxu0 %v367
  %v2245 = vpop.f32.mrf.mxu0
  %v2246 = vadd.f32 %v2077, %v2245
  %v2247 = vpop.f32.mrf.mxu0
  %v2248 = vadd.f32 %v2079, %v2247
  %2249 = vmatmul.bf16.gmra.mxu0 %v371
  %v2250 = vpop.f32.mrf.mxu0
  %v2251 = vadd.f32 %v2082, %v2250
  %v2252 = vpop.f32.mrf.mxu0
  %v2253 = vadd.f32 %v2084, %v2252
  %2254 = vmatmul.bf16.gmra.mxu0 %v375
  %v2255 = vpop.f32.mrf.mxu0
  %v2256 = vadd.f32 %v2087, %v2255
  %v2257 = vpop.f32.mrf.mxu0
  %v2258 = vadd.f32 %v2089, %v2257
  %2259 = vmatmul.bf16.gmra.mxu0 %v379
  %v2260 = vpop.f32.mrf.mxu0
  %v2261 = vadd.f32 %v2092, %v2260
  %v2262 = vpop.f32.mrf.mxu0
  %v2263 = vadd.f32 %v2094, %v2262
  %2264 = vmatmul.bf16.gmra.mxu0 %v383
  %v2265 = vpop.f32.mrf.mxu0
  %v2266 = vadd.f32 %v2097, %v2265
  %v2267 = vpop.f32.mrf.mxu0
  %v2268 = vadd.f32 %v2099, %v2267
  %2269 = vmatmul.bf16.gmra.mxu0 %v387
  %v2270 = vpop.f32.mrf.mxu0
  %v2271 = vadd.f32 %v2102, %v2270
  %v2272 = vpop.f32.mrf.mxu0
  %v2273 = vadd.f32 %v2104, %v2272
  %2274 = vmatmul.bf16.gmra.mxu0 %v391
  %v2275 = vpop.f32.mrf.mxu0
  %v2276 = vadd.f32 %v2107, %v2275
  %v2277 = vpop.f32.mrf.mxu0
  %v2278 = vadd.f32 %v2109, %v2277
  %2279 = vmatmul.bf16.gmra.mxu0 %v395
  %v2280 = vpop.f32.mrf.mxu0
  %v2281 = vadd.f32 %v2112, %v2280
  %v2282 = vpop.f32.mrf.mxu0
  %v2283 = vadd.f32 %v2114, %v2282
  %2284 = vmatmul.bf16.gmra.mxu0 %v399
  %v2285 = vpop.f32.mrf.mxu0
  %v2286 = vadd.f32 %v2117, %v2285
  %v2287 = vpop.f32.mrf.mxu0
  %v2288 = vadd.f32 %v2119, %v2287
  %2289 = vmatmul.bf16.gmra.mxu0 %v403
  %v2290 = vpop.f32.mrf.mxu0
  %v2291 = vadd.f32 %v2122, %v2290
  %v2292 = vpop.f32.mrf.mxu0
  %v2293 = vadd.f32 %v2124, %v2292
  %2294 = vdwg.mxu0
  %2295 = vmatpush.bf16.msra.mxu0 0
  %2296 = vmatpush.bf16.msra.mxu0 0
  %2297 = vmatpush.bf16.msra.mxu0 0
  %2298 = vmatpush.bf16.msra.mxu0 0
  %2299 = vmatpush.bf16.msra.mxu0 0
  %2300 = vmatpush.bf16.msra.mxu0 0
  %2301 = vmatpush.bf16.msra.mxu0 0
  %2302 = vmatpush.bf16.msra.mxu0 %v912
  %2303 = vmatmul.bf16.gmra.mxu0 %v1017
  %v2304 = vpop.f32.mrf.mxu0
  %v2305 = vadd.f32 %v2136, %v2304
  %v2306 = vpop.f32.mrf.mxu0
  %v2307 = vadd.f32 %v2138, %v2306
  %2308 = vmatmul.bf16.gmra.mxu0 %v1020
  %v2309 = vpop.f32.mrf.mxu0
  %v2310 = vadd.f32 %v2141, %v2309
  %v2311 = vpop.f32.mrf.mxu0
  %v2312 = vadd.f32 %v2143, %v2311
  %2313 = vmatmul.bf16.gmra.mxu0 %v1023
  %v2314 = vpop.f32.mrf.mxu0
  %v2315 = vadd.f32 %v2146, %v2314
  %v2316 = vpop.f32.mrf.mxu0
  %v2317 = vadd.f32 %v2148, %v2316
  %2318 = vmatmul.bf16.gmra.mxu0 %v1026
  %v2319 = vpop.f32.mrf.mxu0
  %v2320 = vadd.f32 %v2151, %v2319
  %v2321 = vpop.f32.mrf.mxu0
  %v2322 = vadd.f32 %v2153, %v2321
  %2323 = vmatmul.bf16.gmra.mxu0 %v1029
  %v2324 = vpop.f32.mrf.mxu0
  %v2325 = vadd.f32 %v2156, %v2324
  %v2326 = vpop.f32.mrf.mxu0
  %v2327 = vadd.f32 %v2158, %v2326
  %2328 = vmatmul.bf16.gmra.mxu0 %v1032
  %v2329 = vpop.f32.mrf.mxu0
  %v2330 = vadd.f32 %v2161, %v2329
  %v2331 = vpop.f32.mrf.mxu0
  %v2332 = vadd.f32 %v2163, %v2331
  %2333 = vmatmul.bf16.gmra.mxu0 %v1035
  %v2334 = vpop.f32.mrf.mxu0
  %v2335 = vadd.f32 %v2166, %v2334
  %v2336 = vpop.f32.mrf.mxu0
  %v2337 = vadd.f32 %v2168, %v2336
  %2338 = vmatmul.bf16.gmra.mxu0 %v1038
  %v2339 = vpop.f32.mrf.mxu0
  %v2340 = vadd.f32 %v2171, %v2339
  %v2341 = vpop.f32.mrf.mxu0
  %v2342 = vadd.f32 %v2173, %v2341
  %2343 = vmatmul.bf16.gmra.mxu0 %v1041
  %v2344 = vpop.f32.mrf.mxu0
  %v2345 = vadd.f32 %v2176, %v2344
  %v2346 = vpop.f32.mrf.mxu0
  %v2347 = vadd.f32 %v2178, %v2346
  %2348 = vmatmul.bf16.gmra.mxu0 %v1044
  %v2349 = vpop.f32.mrf.mxu0
  %v2350 = vadd.f32 %v2181, %v2349
  %v2351 = vpop.f32.mrf.mxu0
  %v2352 = vadd.f32 %v2183, %v2351
  %2353 = vmatmul.bf16.gmra.mxu0 %v1047
  %v2354 = vpop.f32.mrf.mxu0
  %v2355 = vadd.f32 %v2186, %v2354
  %v2356 = vpop.f32.mrf.mxu0
  %v2357 = vadd.f32 %v2188, %v2356
  %2358 = vmatmul.bf16.gmra.mxu0 %v1050
  %v2359 = vpop.f32.mrf.mxu0
  %v2360 = vadd.f32 %v2191, %v2359
  %v2361 = vpop.f32.mrf.mxu0
  %v2362 = vadd.f32 %v2193, %v2361
  %2363 = vmatmul.bf16.gmra.mxu0 %v1053
  %v2364 = vpop.f32.mrf.mxu0
  %v2365 = vadd.f32 %v2196, %v2364
  %v2366 = vpop.f32.mrf.mxu0
  %v2367 = vadd.f32 %v2198, %v2366
  %2368 = vmatmul.bf16.gmra.mxu0 %v1056
  %v2369 = vpop.f32.mrf.mxu0
  %v2370 = vadd.f32 %v2201, %v2369
  %v2371 = vpop.f32.mrf.mxu0
  %v2372 = vadd.f32 %v2203, %v2371
  %2373 = vmatmul.bf16.gmra.mxu0 %v1059
  %v2374 = vpop.f32.mrf.mxu0
  %v2375 = vadd.f32 %v2206, %v2374
  %v2376 = vpop.f32.mrf.mxu0
  %v2377 = vadd.f32 %v2208, %v2376
  %2378 = vmatmul.bf16.gmra.mxu0 %v1062
  %v2379 = vpop.f32.mrf.mxu0
  %v2380 = vadd.f32 %v2211, %v2379
  %v2381 = vpop.f32.mrf.mxu0
  %v2382 = vadd.f32 %v2213, %v2381
  %2383 = vmatmul.bf16.gmra.mxu0 %v1065
  %v2384 = vpop.f32.mrf.mxu0
  %v2385 = vadd.f32 %v2216, %v2384
  %v2386 = vpop.f32.mrf.mxu0
  %v2387 = vadd.f32 %v2218, %v2386
  %2388 = vmatmul.bf16.gmra.mxu0 %v1068
  %v2389 = vpop.f32.mrf.mxu0
  %v2390 = vadd.f32 %v2221, %v2389
  %v2391 = vpop.f32.mrf.mxu0
  %v2392 = vadd.f32 %v2223, %v2391
  %2393 = vmatmul.bf16.gmra.mxu0 %v1071
  %v2394 = vpop.f32.mrf.mxu0
  %v2395 = vadd.f32 %v2226, %v2394
  %v2396 = vpop.f32.mrf.mxu0
  %v2397 = vadd.f32 %v2228, %v2396
  %2398 = vmatmul.bf16.gmra.mxu0 %v1074
  %v2399 = vpop.f32.mrf.mxu0
  %v2400 = vadd.f32 %v2231, %v2399
  %v2401 = vpop.f32.mrf.mxu0
  %v2402 = vadd.f32 %v2233, %v2401
  %2403 = vmatmul.bf16.gmra.mxu0 %v1077
  %v2404 = vpop.f32.mrf.mxu0
  %v2405 = vadd.f32 %v2236, %v2404
  %v2406 = vpop.f32.mrf.mxu0
  %v2407 = vadd.f32 %v2238, %v2406
  %2408 = vmatmul.bf16.gmra.mxu0 %v1080
  %v2409 = vpop.f32.mrf.mxu0
  %v2410 = vadd.f32 %v2241, %v2409
  %v2411 = vpop.f32.mrf.mxu0
  %v2412 = vadd.f32 %v2243, %v2411
  %2413 = vmatmul.bf16.gmra.mxu0 %v1083
  %v2414 = vpop.f32.mrf.mxu0
  %v2415 = vadd.f32 %v2246, %v2414
  %v2416 = vpop.f32.mrf.mxu0
  %v2417 = vadd.f32 %v2248, %v2416
  %2418 = vmatmul.bf16.gmra.mxu0 %v1086
  %v2419 = vpop.f32.mrf.mxu0
  %v2420 = vadd.f32 %v2251, %v2419
  %v2421 = vpop.f32.mrf.mxu0
  %v2422 = vadd.f32 %v2253, %v2421
  %2423 = vmatmul.bf16.gmra.mxu0 %v1089
  %v2424 = vpop.f32.mrf.mxu0
  %v2425 = vadd.f32 %v2256, %v2424
  %v2426 = vpop.f32.mrf.mxu0
  %v2427 = vadd.f32 %v2258, %v2426
  %2428 = vmatmul.bf16.gmra.mxu0 %v1092
  %v2429 = vpop.f32.mrf.mxu0
  %v2430 = vadd.f32 %v2261, %v2429
  %v2431 = vpop.f32.mrf.mxu0
  %v2432 = vadd.f32 %v2263, %v2431
  %2433 = vmatmul.bf16.gmra.mxu0 %v1095
  %v2434 = vpop.f32.mrf.mxu0
  %v2435 = vadd.f32 %v2266, %v2434
  %v2436 = vpop.f32.mrf.mxu0
  %v2437 = vadd.f32 %v2268, %v2436
  %2438 = vmatmul.bf16.gmra.mxu0 %v1098
  %v2439 = vpop.f32.mrf.mxu0
  %v2440 = vadd.f32 %v2271, %v2439
  %v2441 = vpop.f32.mrf.mxu0
  %v2442 = vadd.f32 %v2273, %v2441
  %2443 = vmatmul.bf16.gmra.mxu0 %v1101
  %v2444 = vpop.f32.mrf.mxu0
  %v2445 = vadd.f32 %v2276, %v2444
  %v2446 = vpop.f32.mrf.mxu0
  %v2447 = vadd.f32 %v2278, %v2446
  %2448 = vmatmul.bf16.gmra.mxu0 %v1104
  %v2449 = vpop.f32.mrf.mxu0
  %v2450 = vadd.f32 %v2281, %v2449
  %v2451 = vpop.f32.mrf.mxu0
  %v2452 = vadd.f32 %v2283, %v2451
  %2453 = vmatmul.bf16.gmra.mxu0 %v1107
  %v2454 = vpop.f32.mrf.mxu0
  %v2455 = vadd.f32 %v2286, %v2454
  %v2456 = vpop.f32.mrf.mxu0
  %v2457 = vadd.f32 %v2288, %v2456
  %2458 = vmatmul.bf16.gmra.mxu0 %v1110
  %v2459 = vpop.f32.mrf.mxu0
  %v2460 = vadd.f32 %v2291, %v2459
  %v2461 = vpop.f32.mrf.mxu0
  %v2462 = vadd.f32 %v2293, %v2461
  %2463 = vdwg.mxu0
  %2464 = vmatpush.bf16.msra.mxu0 %v845
  %2465 = vmatpush.bf16.msra.mxu0 %v841
  %2466 = vmatpush.bf16.msra.mxu0 %v837
  %2467 = vmatpush.bf16.msra.mxu0 %v833
  %2468 = vmatpush.bf16.msra.mxu0 %v829
  %2469 = vmatpush.bf16.msra.mxu0 %v825
  %2470 = vmatpush.bf16.msra.mxu0 %v821
  %2471 = vmatpush.bf16.msra.mxu0 %v817
  %2472 = vmatmul.bf16.gmra.mxu0 %v277
  %v2473 = vpop.f32.mrf.mxu0
  %v2474 = vadd.f32 %v509, %v2473
  %v2475 = vpop.f32.mrf.mxu0
  %v2476 = vadd.f32 %v509, %v2475
  %2477 = vmatmul.bf16.gmra.mxu0 %v281
  %v2478 = vpop.f32.mrf.mxu0
  %v2479 = vadd.f32 %v509, %v2478
  %v2480 = vpop.f32.mrf.mxu0
  %v2481 = vadd.f32 %v509, %v2480
  %2482 = vmatmul.bf16.gmra.mxu0 %v285
  %v2483 = vpop.f32.mrf.mxu0
  %v2484 = vadd.f32 %v509, %v2483
  %v2485 = vpop.f32.mrf.mxu0
  %v2486 = vadd.f32 %v509, %v2485
  %2487 = vmatmul.bf16.gmra.mxu0 %v289
  %v2488 = vpop.f32.mrf.mxu0
  %v2489 = vadd.f32 %v509, %v2488
  %v2490 = vpop.f32.mrf.mxu0
  %v2491 = vadd.f32 %v509, %v2490
  %2492 = vmatmul.bf16.gmra.mxu0 %v293
  %v2493 = vpop.f32.mrf.mxu0
  %v2494 = vadd.f32 %v509, %v2493
  %v2495 = vpop.f32.mrf.mxu0
  %v2496 = vadd.f32 %v509, %v2495
  %2497 = vmatmul.bf16.gmra.mxu0 %v297
  %v2498 = vpop.f32.mrf.mxu0
  %v2499 = vadd.f32 %v509, %v2498
  %v2500 = vpop.f32.mrf.mxu0
  %v2501 = vadd.f32 %v509, %v2500
  %2502 = vmatmul.bf16.gmra.mxu0 %v301
  %v2503 = vpop.f32.mrf.mxu0
  %v2504 = vadd.f32 %v509, %v2503
  %v2505 = vpop.f32.mrf.mxu0
  %v2506 = vadd.f32 %v509, %v2505
  %2507 = vmatmul.bf16.gmra.mxu0 %v305
  %v2508 = vpop.f32.mrf.mxu0
  %v2509 = vadd.f32 %v509, %v2508
  %v2510 = vpop.f32.mrf.mxu0
  %v2511 = vadd.f32 %v509, %v2510
  %2512 = vmatmul.bf16.gmra.mxu0 %v309
  %v2513 = vpop.f32.mrf.mxu0
  %v2514 = vadd.f32 %v509, %v2513
  %v2515 = vpop.f32.mrf.mxu0
  %v2516 = vadd.f32 %v509, %v2515
  %2517 = vmatmul.bf16.gmra.mxu0 %v313
  %v2518 = vpop.f32.mrf.mxu0
  %v2519 = vadd.f32 %v509, %v2518
  %v2520 = vpop.f32.mrf.mxu0
  %v2521 = vadd.f32 %v509, %v2520
  %2522 = vmatmul.bf16.gmra.mxu0 %v317
  %v2523 = vpop.f32.mrf.mxu0
  %v2524 = vadd.f32 %v509, %v2523
  %v2525 = vpop.f32.mrf.mxu0
  %v2526 = vadd.f32 %v509, %v2525
  %2527 = vmatmul.bf16.gmra.mxu0 %v321
  %v2528 = vpop.f32.mrf.mxu0
  %v2529 = vadd.f32 %v509, %v2528
  %v2530 = vpop.f32.mrf.mxu0
  %v2531 = vadd.f32 %v509, %v2530
  %2532 = vmatmul.bf16.gmra.mxu0 %v325
  %v2533 = vpop.f32.mrf.mxu0
  %v2534 = vadd.f32 %v509, %v2533
  %v2535 = vpop.f32.mrf.mxu0
  %v2536 = vadd.f32 %v509, %v2535
  %2537 = vmatmul.bf16.gmra.mxu0 %v329
  %v2538 = vpop.f32.mrf.mxu0
  %v2539 = vadd.f32 %v509, %v2538
  %v2540 = vpop.f32.mrf.mxu0
  %v2541 = vadd.f32 %v509, %v2540
  %2542 = vmatmul.bf16.gmra.mxu0 %v333
  %v2543 = vpop.f32.mrf.mxu0
  %v2544 = vadd.f32 %v509, %v2543
  %v2545 = vpop.f32.mrf.mxu0
  %v2546 = vadd.f32 %v509, %v2545
  %2547 = vmatmul.bf16.gmra.mxu0 %v337
  %v2548 = vpop.f32.mrf.mxu0
  %v2549 = vadd.f32 %v509, %v2548
  %v2550 = vpop.f32.mrf.mxu0
  %v2551 = vadd.f32 %v509, %v2550
  %2552 = vmatmul.bf16.gmra.mxu0 %v341
  %v2553 = vpop.f32.mrf.mxu0
  %v2554 = vadd.f32 %v509, %v2553
  %v2555 = vpop.f32.mrf.mxu0
  %v2556 = vadd.f32 %v509, %v2555
  %2557 = vmatmul.bf16.gmra.mxu0 %v345
  %v2558 = vpop.f32.mrf.mxu0
  %v2559 = vadd.f32 %v509, %v2558
  %v2560 = vpop.f32.mrf.mxu0
  %v2561 = vadd.f32 %v509, %v2560
  %2562 = vmatmul.bf16.gmra.mxu0 %v349
  %v2563 = vpop.f32.mrf.mxu0
  %v2564 = vadd.f32 %v509, %v2563
  %v2565 = vpop.f32.mrf.mxu0
  %v2566 = vadd.f32 %v509, %v2565
  %2567 = vmatmul.bf16.gmra.mxu0 %v353
  %v2568 = vpop.f32.mrf.mxu0
  %v2569 = vadd.f32 %v509, %v2568
  %v2570 = vpop.f32.mrf.mxu0
  %v2571 = vadd.f32 %v509, %v2570
  %2572 = vmatmul.bf16.gmra.mxu0 %v357
  %v2573 = vpop.f32.mrf.mxu0
  %v2574 = vadd.f32 %v509, %v2573
  %v2575 = vpop.f32.mrf.mxu0
  %v2576 = vadd.f32 %v509, %v2575
  %2577 = vmatmul.bf16.gmra.mxu0 %v361
  %v2578 = vpop.f32.mrf.mxu0
  %v2579 = vadd.f32 %v509, %v2578
  %v2580 = vpop.f32.mrf.mxu0
  %v2581 = vadd.f32 %v509, %v2580
  %2582 = vmatmul.bf16.gmra.mxu0 %v365
  %v2583 = vpop.f32.mrf.mxu0
  %v2584 = vadd.f32 %v509, %v2583
  %v2585 = vpop.f32.mrf.mxu0
  %v2586 = vadd.f32 %v509, %v2585
  %2587 = vmatmul.bf16.gmra.mxu0 %v369
  %v2588 = vpop.f32.mrf.mxu0
  %v2589 = vadd.f32 %v509, %v2588
  %v2590 = vpop.f32.mrf.mxu0
  %v2591 = vadd.f32 %v509, %v2590
  %2592 = vmatmul.bf16.gmra.mxu0 %v373
  %v2593 = vpop.f32.mrf.mxu0
  %v2594 = vadd.f32 %v509, %v2593
  %v2595 = vpop.f32.mrf.mxu0
  %v2596 = vadd.f32 %v509, %v2595
  %2597 = vmatmul.bf16.gmra.mxu0 %v377
  %v2598 = vpop.f32.mrf.mxu0
  %v2599 = vadd.f32 %v509, %v2598
  %v2600 = vpop.f32.mrf.mxu0
  %v2601 = vadd.f32 %v509, %v2600
  %2602 = vmatmul.bf16.gmra.mxu0 %v381
  %v2603 = vpop.f32.mrf.mxu0
  %v2604 = vadd.f32 %v509, %v2603
  %v2605 = vpop.f32.mrf.mxu0
  %v2606 = vadd.f32 %v509, %v2605
  %2607 = vmatmul.bf16.gmra.mxu0 %v385
  %v2608 = vpop.f32.mrf.mxu0
  %v2609 = vadd.f32 %v509, %v2608
  %v2610 = vpop.f32.mrf.mxu0
  %v2611 = vadd.f32 %v509, %v2610
  %2612 = vmatmul.bf16.gmra.mxu0 %v389
  %v2613 = vpop.f32.mrf.mxu0
  %v2614 = vadd.f32 %v509, %v2613
  %v2615 = vpop.f32.mrf.mxu0
  %v2616 = vadd.f32 %v509, %v2615
  %2617 = vmatmul.bf16.gmra.mxu0 %v393
  %v2618 = vpop.f32.mrf.mxu0
  %v2619 = vadd.f32 %v509, %v2618
  %v2620 = vpop.f32.mrf.mxu0
  %v2621 = vadd.f32 %v509, %v2620
  %2622 = vmatmul.bf16.gmra.mxu0 %v397
  %v2623 = vpop.f32.mrf.mxu0
  %v2624 = vadd.f32 %v509, %v2623
  %v2625 = vpop.f32.mrf.mxu0
  %v2626 = vadd.f32 %v509, %v2625
  %2627 = vmatmul.bf16.gmra.mxu0 %v401
  %v2628 = vpop.f32.mrf.mxu0
  %v2629 = vadd.f32 %v509, %v2628
  %v2630 = vpop.f32.mrf.mxu0
  %v2631 = vadd.f32 %v509, %v2630
  %2632 = vdwg.mxu0
  %2633 = vmatpush.bf16.msra.mxu0 %v877
  %2634 = vmatpush.bf16.msra.mxu0 %v873
  %2635 = vmatpush.bf16.msra.mxu0 %v869
  %2636 = vmatpush.bf16.msra.mxu0 %v865
  %2637 = vmatpush.bf16.msra.mxu0 %v861
  %2638 = vmatpush.bf16.msra.mxu0 %v857
  %2639 = vmatpush.bf16.msra.mxu0 %v853
  %2640 = vmatpush.bf16.msra.mxu0 %v849
  %2641 = vmatmul.bf16.gmra.mxu0 %v278
  %v2642 = vpop.f32.mrf.mxu0
  %v2643 = vadd.f32 %v2474, %v2642
  %v2644 = vpop.f32.mrf.mxu0
  %v2645 = vadd.f32 %v2476, %v2644
  %2646 = vmatmul.bf16.gmra.mxu0 %v282
  %v2647 = vpop.f32.mrf.mxu0
  %v2648 = vadd.f32 %v2479, %v2647
  %v2649 = vpop.f32.mrf.mxu0
  %v2650 = vadd.f32 %v2481, %v2649
  %2651 = vmatmul.bf16.gmra.mxu0 %v286
  %v2652 = vpop.f32.mrf.mxu0
  %v2653 = vadd.f32 %v2484, %v2652
  %v2654 = vpop.f32.mrf.mxu0
  %v2655 = vadd.f32 %v2486, %v2654
  %2656 = vmatmul.bf16.gmra.mxu0 %v290
  %v2657 = vpop.f32.mrf.mxu0
  %v2658 = vadd.f32 %v2489, %v2657
  %v2659 = vpop.f32.mrf.mxu0
  %v2660 = vadd.f32 %v2491, %v2659
  %2661 = vmatmul.bf16.gmra.mxu0 %v294
  %v2662 = vpop.f32.mrf.mxu0
  %v2663 = vadd.f32 %v2494, %v2662
  %v2664 = vpop.f32.mrf.mxu0
  %v2665 = vadd.f32 %v2496, %v2664
  %2666 = vmatmul.bf16.gmra.mxu0 %v298
  %v2667 = vpop.f32.mrf.mxu0
  %v2668 = vadd.f32 %v2499, %v2667
  %v2669 = vpop.f32.mrf.mxu0
  %v2670 = vadd.f32 %v2501, %v2669
  %2671 = vmatmul.bf16.gmra.mxu0 %v302
  %v2672 = vpop.f32.mrf.mxu0
  %v2673 = vadd.f32 %v2504, %v2672
  %v2674 = vpop.f32.mrf.mxu0
  %v2675 = vadd.f32 %v2506, %v2674
  %2676 = vmatmul.bf16.gmra.mxu0 %v306
  %v2677 = vpop.f32.mrf.mxu0
  %v2678 = vadd.f32 %v2509, %v2677
  %v2679 = vpop.f32.mrf.mxu0
  %v2680 = vadd.f32 %v2511, %v2679
  %2681 = vmatmul.bf16.gmra.mxu0 %v310
  %v2682 = vpop.f32.mrf.mxu0
  %v2683 = vadd.f32 %v2514, %v2682
  %v2684 = vpop.f32.mrf.mxu0
  %v2685 = vadd.f32 %v2516, %v2684
  %2686 = vmatmul.bf16.gmra.mxu0 %v314
  %v2687 = vpop.f32.mrf.mxu0
  %v2688 = vadd.f32 %v2519, %v2687
  %v2689 = vpop.f32.mrf.mxu0
  %v2690 = vadd.f32 %v2521, %v2689
  %2691 = vmatmul.bf16.gmra.mxu0 %v318
  %v2692 = vpop.f32.mrf.mxu0
  %v2693 = vadd.f32 %v2524, %v2692
  %v2694 = vpop.f32.mrf.mxu0
  %v2695 = vadd.f32 %v2526, %v2694
  %2696 = vmatmul.bf16.gmra.mxu0 %v322
  %v2697 = vpop.f32.mrf.mxu0
  %v2698 = vadd.f32 %v2529, %v2697
  %v2699 = vpop.f32.mrf.mxu0
  %v2700 = vadd.f32 %v2531, %v2699
  %2701 = vmatmul.bf16.gmra.mxu0 %v326
  %v2702 = vpop.f32.mrf.mxu0
  %v2703 = vadd.f32 %v2534, %v2702
  %v2704 = vpop.f32.mrf.mxu0
  %v2705 = vadd.f32 %v2536, %v2704
  %2706 = vmatmul.bf16.gmra.mxu0 %v330
  %v2707 = vpop.f32.mrf.mxu0
  %v2708 = vadd.f32 %v2539, %v2707
  %v2709 = vpop.f32.mrf.mxu0
  %v2710 = vadd.f32 %v2541, %v2709
  %2711 = vmatmul.bf16.gmra.mxu0 %v334
  %v2712 = vpop.f32.mrf.mxu0
  %v2713 = vadd.f32 %v2544, %v2712
  %v2714 = vpop.f32.mrf.mxu0
  %v2715 = vadd.f32 %v2546, %v2714
  %2716 = vmatmul.bf16.gmra.mxu0 %v338
  %v2717 = vpop.f32.mrf.mxu0
  %v2718 = vadd.f32 %v2549, %v2717
  %v2719 = vpop.f32.mrf.mxu0
  %v2720 = vadd.f32 %v2551, %v2719
  %2721 = vmatmul.bf16.gmra.mxu0 %v342
  %v2722 = vpop.f32.mrf.mxu0
  %v2723 = vadd.f32 %v2554, %v2722
  %v2724 = vpop.f32.mrf.mxu0
  %v2725 = vadd.f32 %v2556, %v2724
  %2726 = vmatmul.bf16.gmra.mxu0 %v346
  %v2727 = vpop.f32.mrf.mxu0
  %v2728 = vadd.f32 %v2559, %v2727
  %v2729 = vpop.f32.mrf.mxu0
  %v2730 = vadd.f32 %v2561, %v2729
  %2731 = vmatmul.bf16.gmra.mxu0 %v350
  %v2732 = vpop.f32.mrf.mxu0
  %v2733 = vadd.f32 %v2564, %v2732
  %v2734 = vpop.f32.mrf.mxu0
  %v2735 = vadd.f32 %v2566, %v2734
  %2736 = vmatmul.bf16.gmra.mxu0 %v354
  %v2737 = vpop.f32.mrf.mxu0
  %v2738 = vadd.f32 %v2569, %v2737
  %v2739 = vpop.f32.mrf.mxu0
  %v2740 = vadd.f32 %v2571, %v2739
  %2741 = vmatmul.bf16.gmra.mxu0 %v358
  %v2742 = vpop.f32.mrf.mxu0
  %v2743 = vadd.f32 %v2574, %v2742
  %v2744 = vpop.f32.mrf.mxu0
  %v2745 = vadd.f32 %v2576, %v2744
  %2746 = vmatmul.bf16.gmra.mxu0 %v362
  %v2747 = vpop.f32.mrf.mxu0
  %v2748 = vadd.f32 %v2579, %v2747
  %v2749 = vpop.f32.mrf.mxu0
  %v2750 = vadd.f32 %v2581, %v2749
  %2751 = vmatmul.bf16.gmra.mxu0 %v366
  %v2752 = vpop.f32.mrf.mxu0
  %v2753 = vadd.f32 %v2584, %v2752
  %v2754 = vpop.f32.mrf.mxu0
  %v2755 = vadd.f32 %v2586, %v2754
  %2756 = vmatmul.bf16.gmra.mxu0 %v370
  %v2757 = vpop.f32.mrf.mxu0
  %v2758 = vadd.f32 %v2589, %v2757
  %v2759 = vpop.f32.mrf.mxu0
  %v2760 = vadd.f32 %v2591, %v2759
  %2761 = vmatmul.bf16.gmra.mxu0 %v374
  %v2762 = vpop.f32.mrf.mxu0
  %v2763 = vadd.f32 %v2594, %v2762
  %v2764 = vpop.f32.mrf.mxu0
  %v2765 = vadd.f32 %v2596, %v2764
  %2766 = vmatmul.bf16.gmra.mxu0 %v378
  %v2767 = vpop.f32.mrf.mxu0
  %v2768 = vadd.f32 %v2599, %v2767
  %v2769 = vpop.f32.mrf.mxu0
  %v2770 = vadd.f32 %v2601, %v2769
  %2771 = vmatmul.bf16.gmra.mxu0 %v382
  %v2772 = vpop.f32.mrf.mxu0
  %v2773 = vadd.f32 %v2604, %v2772
  %v2774 = vpop.f32.mrf.mxu0
  %v2775 = vadd.f32 %v2606, %v2774
  %2776 = vmatmul.bf16.gmra.mxu0 %v386
  %v2777 = vpop.f32.mrf.mxu0
  %v2778 = vadd.f32 %v2609, %v2777
  %v2779 = vpop.f32.mrf.mxu0
  %v2780 = vadd.f32 %v2611, %v2779
  %2781 = vmatmul.bf16.gmra.mxu0 %v390
  %v2782 = vpop.f32.mrf.mxu0
  %v2783 = vadd.f32 %v2614, %v2782
  %v2784 = vpop.f32.mrf.mxu0
  %v2785 = vadd.f32 %v2616, %v2784
  %2786 = vmatmul.bf16.gmra.mxu0 %v394
  %v2787 = vpop.f32.mrf.mxu0
  %v2788 = vadd.f32 %v2619, %v2787
  %v2789 = vpop.f32.mrf.mxu0
  %v2790 = vadd.f32 %v2621, %v2789
  %2791 = vmatmul.bf16.gmra.mxu0 %v398
  %v2792 = vpop.f32.mrf.mxu0
  %v2793 = vadd.f32 %v2624, %v2792
  %v2794 = vpop.f32.mrf.mxu0
  %v2795 = vadd.f32 %v2626, %v2794
  %2796 = vmatmul.bf16.gmra.mxu0 %v402
  %v2797 = vpop.f32.mrf.mxu0
  %v2798 = vadd.f32 %v2629, %v2797
  %v2799 = vpop.f32.mrf.mxu0
  %v2800 = vadd.f32 %v2631, %v2799
  %2801 = vdwg.mxu0
  %2802 = vmatpush.bf16.msra.mxu0 %v909
  %2803 = vmatpush.bf16.msra.mxu0 %v905
  %2804 = vmatpush.bf16.msra.mxu0 %v901
  %2805 = vmatpush.bf16.msra.mxu0 %v897
  %2806 = vmatpush.bf16.msra.mxu0 %v893
  %2807 = vmatpush.bf16.msra.mxu0 %v889
  %2808 = vmatpush.bf16.msra.mxu0 %v885
  %2809 = vmatpush.bf16.msra.mxu0 %v881
  %2810 = vmatmul.bf16.gmra.mxu0 %v279
  %v2811 = vpop.f32.mrf.mxu0
  %v2812 = vadd.f32 %v2643, %v2811
  %v2813 = vpop.f32.mrf.mxu0
  %v2814 = vadd.f32 %v2645, %v2813
  %2815 = vmatmul.bf16.gmra.mxu0 %v283
  %v2816 = vpop.f32.mrf.mxu0
  %v2817 = vadd.f32 %v2648, %v2816
  %v2818 = vpop.f32.mrf.mxu0
  %v2819 = vadd.f32 %v2650, %v2818
  %2820 = vmatmul.bf16.gmra.mxu0 %v287
  %v2821 = vpop.f32.mrf.mxu0
  %v2822 = vadd.f32 %v2653, %v2821
  %v2823 = vpop.f32.mrf.mxu0
  %v2824 = vadd.f32 %v2655, %v2823
  %2825 = vmatmul.bf16.gmra.mxu0 %v291
  %v2826 = vpop.f32.mrf.mxu0
  %v2827 = vadd.f32 %v2658, %v2826
  %v2828 = vpop.f32.mrf.mxu0
  %v2829 = vadd.f32 %v2660, %v2828
  %2830 = vmatmul.bf16.gmra.mxu0 %v295
  %v2831 = vpop.f32.mrf.mxu0
  %v2832 = vadd.f32 %v2663, %v2831
  %v2833 = vpop.f32.mrf.mxu0
  %v2834 = vadd.f32 %v2665, %v2833
  %2835 = vmatmul.bf16.gmra.mxu0 %v299
  %v2836 = vpop.f32.mrf.mxu0
  %v2837 = vadd.f32 %v2668, %v2836
  %v2838 = vpop.f32.mrf.mxu0
  %v2839 = vadd.f32 %v2670, %v2838
  %2840 = vmatmul.bf16.gmra.mxu0 %v303
  %v2841 = vpop.f32.mrf.mxu0
  %v2842 = vadd.f32 %v2673, %v2841
  %v2843 = vpop.f32.mrf.mxu0
  %v2844 = vadd.f32 %v2675, %v2843
  %2845 = vmatmul.bf16.gmra.mxu0 %v307
  %v2846 = vpop.f32.mrf.mxu0
  %v2847 = vadd.f32 %v2678, %v2846
  %v2848 = vpop.f32.mrf.mxu0
  %v2849 = vadd.f32 %v2680, %v2848
  %2850 = vmatmul.bf16.gmra.mxu0 %v311
  %v2851 = vpop.f32.mrf.mxu0
  %v2852 = vadd.f32 %v2683, %v2851
  %v2853 = vpop.f32.mrf.mxu0
  %v2854 = vadd.f32 %v2685, %v2853
  %2855 = vmatmul.bf16.gmra.mxu0 %v315
  %v2856 = vpop.f32.mrf.mxu0
  %v2857 = vadd.f32 %v2688, %v2856
  %v2858 = vpop.f32.mrf.mxu0
  %v2859 = vadd.f32 %v2690, %v2858
  %2860 = vmatmul.bf16.gmra.mxu0 %v319
  %v2861 = vpop.f32.mrf.mxu0
  %v2862 = vadd.f32 %v2693, %v2861
  %v2863 = vpop.f32.mrf.mxu0
  %v2864 = vadd.f32 %v2695, %v2863
  %2865 = vmatmul.bf16.gmra.mxu0 %v323
  %v2866 = vpop.f32.mrf.mxu0
  %v2867 = vadd.f32 %v2698, %v2866
  %v2868 = vpop.f32.mrf.mxu0
  %v2869 = vadd.f32 %v2700, %v2868
  %2870 = vmatmul.bf16.gmra.mxu0 %v327
  %v2871 = vpop.f32.mrf.mxu0
  %v2872 = vadd.f32 %v2703, %v2871
  %v2873 = vpop.f32.mrf.mxu0
  %v2874 = vadd.f32 %v2705, %v2873
  %2875 = vmatmul.bf16.gmra.mxu0 %v331
  %v2876 = vpop.f32.mrf.mxu0
  %v2877 = vadd.f32 %v2708, %v2876
  %v2878 = vpop.f32.mrf.mxu0
  %v2879 = vadd.f32 %v2710, %v2878
  %2880 = vmatmul.bf16.gmra.mxu0 %v335
  %v2881 = vpop.f32.mrf.mxu0
  %v2882 = vadd.f32 %v2713, %v2881
  %v2883 = vpop.f32.mrf.mxu0
  %v2884 = vadd.f32 %v2715, %v2883
  %2885 = vmatmul.bf16.gmra.mxu0 %v339
  %v2886 = vpop.f32.mrf.mxu0
  %v2887 = vadd.f32 %v2718, %v2886
  %v2888 = vpop.f32.mrf.mxu0
  %v2889 = vadd.f32 %v2720, %v2888
  %2890 = vmatmul.bf16.gmra.mxu0 %v343
  %v2891 = vpop.f32.mrf.mxu0
  %v2892 = vadd.f32 %v2723, %v2891
  %v2893 = vpop.f32.mrf.mxu0
  %v2894 = vadd.f32 %v2725, %v2893
  %2895 = vmatmul.bf16.gmra.mxu0 %v347
  %v2896 = vpop.f32.mrf.mxu0
  %v2897 = vadd.f32 %v2728, %v2896
  %v2898 = vpop.f32.mrf.mxu0
  %v2899 = vadd.f32 %v2730, %v2898
  %2900 = vmatmul.bf16.gmra.mxu0 %v351
  %v2901 = vpop.f32.mrf.mxu0
  %v2902 = vadd.f32 %v2733, %v2901
  %v2903 = vpop.f32.mrf.mxu0
  %v2904 = vadd.f32 %v2735, %v2903
  %2905 = vmatmul.bf16.gmra.mxu0 %v355
  %v2906 = vpop.f32.mrf.mxu0
  %v2907 = vadd.f32 %v2738, %v2906
  %v2908 = vpop.f32.mrf.mxu0
  %v2909 = vadd.f32 %v2740, %v2908
  %2910 = vmatmul.bf16.gmra.mxu0 %v359
  %v2911 = vpop.f32.mrf.mxu0
  %v2912 = vadd.f32 %v2743, %v2911
  %v2913 = vpop.f32.mrf.mxu0
  %v2914 = vadd.f32 %v2745, %v2913
  %2915 = vmatmul.bf16.gmra.mxu0 %v363
  %v2916 = vpop.f32.mrf.mxu0
  %v2917 = vadd.f32 %v2748, %v2916
  %v2918 = vpop.f32.mrf.mxu0
  %v2919 = vadd.f32 %v2750, %v2918
  %2920 = vmatmul.bf16.gmra.mxu0 %v367
  %v2921 = vpop.f32.mrf.mxu0
  %v2922 = vadd.f32 %v2753, %v2921
  %v2923 = vpop.f32.mrf.mxu0
  %v2924 = vadd.f32 %v2755, %v2923
  %2925 = vmatmul.bf16.gmra.mxu0 %v371
  %v2926 = vpop.f32.mrf.mxu0
  %v2927 = vadd.f32 %v2758, %v2926
  %v2928 = vpop.f32.mrf.mxu0
  %v2929 = vadd.f32 %v2760, %v2928
  %2930 = vmatmul.bf16.gmra.mxu0 %v375
  %v2931 = vpop.f32.mrf.mxu0
  %v2932 = vadd.f32 %v2763, %v2931
  %v2933 = vpop.f32.mrf.mxu0
  %v2934 = vadd.f32 %v2765, %v2933
  %2935 = vmatmul.bf16.gmra.mxu0 %v379
  %v2936 = vpop.f32.mrf.mxu0
  %v2937 = vadd.f32 %v2768, %v2936
  %v2938 = vpop.f32.mrf.mxu0
  %v2939 = vadd.f32 %v2770, %v2938
  %2940 = vmatmul.bf16.gmra.mxu0 %v383
  %v2941 = vpop.f32.mrf.mxu0
  %v2942 = vadd.f32 %v2773, %v2941
  %v2943 = vpop.f32.mrf.mxu0
  %v2944 = vadd.f32 %v2775, %v2943
  %2945 = vmatmul.bf16.gmra.mxu0 %v387
  %v2946 = vpop.f32.mrf.mxu0
  %v2947 = vadd.f32 %v2778, %v2946
  %v2948 = vpop.f32.mrf.mxu0
  %v2949 = vadd.f32 %v2780, %v2948
  %2950 = vmatmul.bf16.gmra.mxu0 %v391
  %v2951 = vpop.f32.mrf.mxu0
  %v2952 = vadd.f32 %v2783, %v2951
  %v2953 = vpop.f32.mrf.mxu0
  %v2954 = vadd.f32 %v2785, %v2953
  %2955 = vmatmul.bf16.gmra.mxu0 %v395
  %v2956 = vpop.f32.mrf.mxu0
  %v2957 = vadd.f32 %v2788, %v2956
  %v2958 = vpop.f32.mrf.mxu0
  %v2959 = vadd.f32 %v2790, %v2958
  %2960 = vmatmul.bf16.gmra.mxu0 %v399
  %v2961 = vpop.f32.mrf.mxu0
  %v2962 = vadd.f32 %v2793, %v2961
  %v2963 = vpop.f32.mrf.mxu0
  %v2964 = vadd.f32 %v2795, %v2963
  %2965 = vmatmul.bf16.gmra.mxu0 %v403
  %v2966 = vpop.f32.mrf.mxu0
  %v2967 = vadd.f32 %v2798, %v2966
  %v2968 = vpop.f32.mrf.mxu0
  %v2969 = vadd.f32 %v2800, %v2968
  %2970 = vdwg.mxu0
  %2971 = vmatpush.bf16.msra.mxu0 0
  %2972 = vmatpush.bf16.msra.mxu0 0
  %2973 = vmatpush.bf16.msra.mxu0 0
  %2974 = vmatpush.bf16.msra.mxu0 0
  %2975 = vmatpush.bf16.msra.mxu0 0
  %2976 = vmatpush.bf16.msra.mxu0 0
  %2977 = vmatpush.bf16.msra.mxu0 0
  %2978 = vmatpush.bf16.msra.mxu0 %v913
  %2979 = vmatmul.bf16.gmra.mxu0 %v1017
  %v2980 = vpop.f32.mrf.mxu0
  %v2981 = vadd.f32 %v2812, %v2980
  %v2982 = vpop.f32.mrf.mxu0
  %v2983 = vadd.f32 %v2814, %v2982
  %2984 = vmatmul.bf16.gmra.mxu0 %v1020
  %v2985 = vpop.f32.mrf.mxu0
  %v2986 = vadd.f32 %v2817, %v2985
  %v2987 = vpop.f32.mrf.mxu0
  %v2988 = vadd.f32 %v2819, %v2987
  %2989 = vmatmul.bf16.gmra.mxu0 %v1023
  %v2990 = vpop.f32.mrf.mxu0
  %v2991 = vadd.f32 %v2822, %v2990
  %v2992 = vpop.f32.mrf.mxu0
  %v2993 = vadd.f32 %v2824, %v2992
  %2994 = vmatmul.bf16.gmra.mxu0 %v1026
  %v2995 = vpop.f32.mrf.mxu0
  %v2996 = vadd.f32 %v2827, %v2995
  %v2997 = vpop.f32.mrf.mxu0
  %v2998 = vadd.f32 %v2829, %v2997
  %2999 = vmatmul.bf16.gmra.mxu0 %v1029
  %v3000 = vpop.f32.mrf.mxu0
  %v3001 = vadd.f32 %v2832, %v3000
  %v3002 = vpop.f32.mrf.mxu0
  %v3003 = vadd.f32 %v2834, %v3002
  %3004 = vmatmul.bf16.gmra.mxu0 %v1032
  %v3005 = vpop.f32.mrf.mxu0
  %v3006 = vadd.f32 %v2837, %v3005
  %v3007 = vpop.f32.mrf.mxu0
  %v3008 = vadd.f32 %v2839, %v3007
  %3009 = vmatmul.bf16.gmra.mxu0 %v1035
  %v3010 = vpop.f32.mrf.mxu0
  %v3011 = vadd.f32 %v2842, %v3010
  %v3012 = vpop.f32.mrf.mxu0
  %v3013 = vadd.f32 %v2844, %v3012
  %3014 = vmatmul.bf16.gmra.mxu0 %v1038
  %v3015 = vpop.f32.mrf.mxu0
  %v3016 = vadd.f32 %v2847, %v3015
  %v3017 = vpop.f32.mrf.mxu0
  %v3018 = vadd.f32 %v2849, %v3017
  %3019 = vmatmul.bf16.gmra.mxu0 %v1041
  %v3020 = vpop.f32.mrf.mxu0
  %v3021 = vadd.f32 %v2852, %v3020
  %v3022 = vpop.f32.mrf.mxu0
  %v3023 = vadd.f32 %v2854, %v3022
  %3024 = vmatmul.bf16.gmra.mxu0 %v1044
  %v3025 = vpop.f32.mrf.mxu0
  %v3026 = vadd.f32 %v2857, %v3025
  %v3027 = vpop.f32.mrf.mxu0
  %v3028 = vadd.f32 %v2859, %v3027
  %3029 = vmatmul.bf16.gmra.mxu0 %v1047
  %v3030 = vpop.f32.mrf.mxu0
  %v3031 = vadd.f32 %v2862, %v3030
  %v3032 = vpop.f32.mrf.mxu0
  %v3033 = vadd.f32 %v2864, %v3032
  %3034 = vmatmul.bf16.gmra.mxu0 %v1050
  %v3035 = vpop.f32.mrf.mxu0
  %v3036 = vadd.f32 %v2867, %v3035
  %v3037 = vpop.f32.mrf.mxu0
  %v3038 = vadd.f32 %v2869, %v3037
  %3039 = vmatmul.bf16.gmra.mxu0 %v1053
  %v3040 = vpop.f32.mrf.mxu0
  %v3041 = vadd.f32 %v2872, %v3040
  %v3042 = vpop.f32.mrf.mxu0
  %v3043 = vadd.f32 %v2874, %v3042
  %3044 = vmatmul.bf16.gmra.mxu0 %v1056
  %v3045 = vpop.f32.mrf.mxu0
  %v3046 = vadd.f32 %v2877, %v3045
  %v3047 = vpop.f32.mrf.mxu0
  %v3048 = vadd.f32 %v2879, %v3047
  %3049 = vmatmul.bf16.gmra.mxu0 %v1059
  %v3050 = vpop.f32.mrf.mxu0
  %v3051 = vadd.f32 %v2882, %v3050
  %v3052 = vpop.f32.mrf.mxu0
  %v3053 = vadd.f32 %v2884, %v3052
  %3054 = vmatmul.bf16.gmra.mxu0 %v1062
  %v3055 = vpop.f32.mrf.mxu0
  %v3056 = vadd.f32 %v2887, %v3055
  %v3057 = vpop.f32.mrf.mxu0
  %v3058 = vadd.f32 %v2889, %v3057
  %3059 = vmatmul.bf16.gmra.mxu0 %v1065
  %v3060 = vpop.f32.mrf.mxu0
  %v3061 = vadd.f32 %v2892, %v3060
  %v3062 = vpop.f32.mrf.mxu0
  %v3063 = vadd.f32 %v2894, %v3062
  %3064 = vmatmul.bf16.gmra.mxu0 %v1068
  %v3065 = vpop.f32.mrf.mxu0
  %v3066 = vadd.f32 %v2897, %v3065
  %v3067 = vpop.f32.mrf.mxu0
  %v3068 = vadd.f32 %v2899, %v3067
  %3069 = vmatmul.bf16.gmra.mxu0 %v1071
  %v3070 = vpop.f32.mrf.mxu0
  %v3071 = vadd.f32 %v2902, %v3070
  %v3072 = vpop.f32.mrf.mxu0
  %v3073 = vadd.f32 %v2904, %v3072
  %3074 = vmatmul.bf16.gmra.mxu0 %v1074
  %v3075 = vpop.f32.mrf.mxu0
  %v3076 = vadd.f32 %v2907, %v3075
  %v3077 = vpop.f32.mrf.mxu0
  %v3078 = vadd.f32 %v2909, %v3077
  %3079 = vmatmul.bf16.gmra.mxu0 %v1077
  %v3080 = vpop.f32.mrf.mxu0
  %v3081 = vadd.f32 %v2912, %v3080
  %v3082 = vpop.f32.mrf.mxu0
  %v3083 = vadd.f32 %v2914, %v3082
  %3084 = vmatmul.bf16.gmra.mxu0 %v1080
  %v3085 = vpop.f32.mrf.mxu0
  %v3086 = vadd.f32 %v2917, %v3085
  %v3087 = vpop.f32.mrf.mxu0
  %v3088 = vadd.f32 %v2919, %v3087
  %3089 = vmatmul.bf16.gmra.mxu0 %v1083
  %v3090 = vpop.f32.mrf.mxu0
  %v3091 = vadd.f32 %v2922, %v3090
  %v3092 = vpop.f32.mrf.mxu0
  %v3093 = vadd.f32 %v2924, %v3092
  %3094 = vmatmul.bf16.gmra.mxu0 %v1086
  %v3095 = vpop.f32.mrf.mxu0
  %v3096 = vadd.f32 %v2927, %v3095
  %v3097 = vpop.f32.mrf.mxu0
  %v3098 = vadd.f32 %v2929, %v3097
  %3099 = vmatmul.bf16.gmra.mxu0 %v1089
  %v3100 = vpop.f32.mrf.mxu0
  %v3101 = vadd.f32 %v2932, %v3100
  %v3102 = vpop.f32.mrf.mxu0
  %v3103 = vadd.f32 %v2934, %v3102
  %3104 = vmatmul.bf16.gmra.mxu0 %v1092
  %v3105 = vpop.f32.mrf.mxu0
  %v3106 = vadd.f32 %v2937, %v3105
  %v3107 = vpop.f32.mrf.mxu0
  %v3108 = vadd.f32 %v2939, %v3107
  %3109 = vmatmul.bf16.gmra.mxu0 %v1095
  %v3110 = vpop.f32.mrf.mxu0
  %v3111 = vadd.f32 %v2942, %v3110
  %v3112 = vpop.f32.mrf.mxu0
  %v3113 = vadd.f32 %v2944, %v3112
  %3114 = vmatmul.bf16.gmra.mxu0 %v1098
  %v3115 = vpop.f32.mrf.mxu0
  %v3116 = vadd.f32 %v2947, %v3115
  %v3117 = vpop.f32.mrf.mxu0
  %v3118 = vadd.f32 %v2949, %v3117
  %3119 = vmatmul.bf16.gmra.mxu0 %v1101
  %v3120 = vpop.f32.mrf.mxu0
  %v3121 = vadd.f32 %v2952, %v3120
  %v3122 = vpop.f32.mrf.mxu0
  %v3123 = vadd.f32 %v2954, %v3122
  %3124 = vmatmul.bf16.gmra.mxu0 %v1104
  %v3125 = vpop.f32.mrf.mxu0
  %v3126 = vadd.f32 %v2957, %v3125
  %v3127 = vpop.f32.mrf.mxu0
  %v3128 = vadd.f32 %v2959, %v3127
  %3129 = vmatmul.bf16.gmra.mxu0 %v1107
  %v3130 = vpop.f32.mrf.mxu0
  %v3131 = vadd.f32 %v2962, %v3130
  %v3132 = vpop.f32.mrf.mxu0
  %v3133 = vadd.f32 %v2964, %v3132
  %3134 = vmatmul.bf16.gmra.mxu0 %v1110
  %v3135 = vpop.f32.mrf.mxu0
  %v3136 = vadd.f32 %v2967, %v3135
  %v3137 = vpop.f32.mrf.mxu0
  %v3138 = vadd.f32 %v2969, %v3137
  %3139 = vdwg.mxu0
  %3140 = vmatpush.bf16.msra.mxu0 %v846
  %3141 = vmatpush.bf16.msra.mxu0 %v842
  %3142 = vmatpush.bf16.msra.mxu0 %v838
  %3143 = vmatpush.bf16.msra.mxu0 %v834
  %3144 = vmatpush.bf16.msra.mxu0 %v830
  %3145 = vmatpush.bf16.msra.mxu0 %v826
  %3146 = vmatpush.bf16.msra.mxu0 %v822
  %3147 = vmatpush.bf16.msra.mxu0 %v818
  %3148 = vmatmul.bf16.gmra.mxu0 %v277
  %v3149 = vpop.f32.mrf.mxu0
  %v3150 = vadd.f32 %v510, %v3149
  %v3151 = vpop.f32.mrf.mxu0
  %v3152 = vadd.f32 %v510, %v3151
  %3153 = vmatmul.bf16.gmra.mxu0 %v281
  %v3154 = vpop.f32.mrf.mxu0
  %v3155 = vadd.f32 %v510, %v3154
  %v3156 = vpop.f32.mrf.mxu0
  %v3157 = vadd.f32 %v510, %v3156
  %3158 = vmatmul.bf16.gmra.mxu0 %v285
  %v3159 = vpop.f32.mrf.mxu0
  %v3160 = vadd.f32 %v510, %v3159
  %v3161 = vpop.f32.mrf.mxu0
  %v3162 = vadd.f32 %v510, %v3161
  %3163 = vmatmul.bf16.gmra.mxu0 %v289
  %v3164 = vpop.f32.mrf.mxu0
  %v3165 = vadd.f32 %v510, %v3164
  %v3166 = vpop.f32.mrf.mxu0
  %v3167 = vadd.f32 %v510, %v3166
  %3168 = vmatmul.bf16.gmra.mxu0 %v293
  %v3169 = vpop.f32.mrf.mxu0
  %v3170 = vadd.f32 %v510, %v3169
  %v3171 = vpop.f32.mrf.mxu0
  %v3172 = vadd.f32 %v510, %v3171
  %3173 = vmatmul.bf16.gmra.mxu0 %v297
  %v3174 = vpop.f32.mrf.mxu0
  %v3175 = vadd.f32 %v510, %v3174
  %v3176 = vpop.f32.mrf.mxu0
  %v3177 = vadd.f32 %v510, %v3176
  %3178 = vmatmul.bf16.gmra.mxu0 %v301
  %v3179 = vpop.f32.mrf.mxu0
  %v3180 = vadd.f32 %v510, %v3179
  %v3181 = vpop.f32.mrf.mxu0
  %v3182 = vadd.f32 %v510, %v3181
  %3183 = vmatmul.bf16.gmra.mxu0 %v305
  %v3184 = vpop.f32.mrf.mxu0
  %v3185 = vadd.f32 %v510, %v3184
  %v3186 = vpop.f32.mrf.mxu0
  %v3187 = vadd.f32 %v510, %v3186
  %3188 = vmatmul.bf16.gmra.mxu0 %v309
  %v3189 = vpop.f32.mrf.mxu0
  %v3190 = vadd.f32 %v510, %v3189
  %v3191 = vpop.f32.mrf.mxu0
  %v3192 = vadd.f32 %v510, %v3191
  %3193 = vmatmul.bf16.gmra.mxu0 %v313
  %v3194 = vpop.f32.mrf.mxu0
  %v3195 = vadd.f32 %v510, %v3194
  %v3196 = vpop.f32.mrf.mxu0
  %v3197 = vadd.f32 %v510, %v3196
  %3198 = vmatmul.bf16.gmra.mxu0 %v317
  %v3199 = vpop.f32.mrf.mxu0
  %v3200 = vadd.f32 %v510, %v3199
  %v3201 = vpop.f32.mrf.mxu0
  %v3202 = vadd.f32 %v510, %v3201
  %3203 = vmatmul.bf16.gmra.mxu0 %v321
  %v3204 = vpop.f32.mrf.mxu0
  %v3205 = vadd.f32 %v510, %v3204
  %v3206 = vpop.f32.mrf.mxu0
  %v3207 = vadd.f32 %v510, %v3206
  %3208 = vmatmul.bf16.gmra.mxu0 %v325
  %v3209 = vpop.f32.mrf.mxu0
  %v3210 = vadd.f32 %v510, %v3209
  %v3211 = vpop.f32.mrf.mxu0
  %v3212 = vadd.f32 %v510, %v3211
  %3213 = vmatmul.bf16.gmra.mxu0 %v329
  %v3214 = vpop.f32.mrf.mxu0
  %v3215 = vadd.f32 %v510, %v3214
  %v3216 = vpop.f32.mrf.mxu0
  %v3217 = vadd.f32 %v510, %v3216
  %3218 = vmatmul.bf16.gmra.mxu0 %v333
  %v3219 = vpop.f32.mrf.mxu0
  %v3220 = vadd.f32 %v510, %v3219
  %v3221 = vpop.f32.mrf.mxu0
  %v3222 = vadd.f32 %v510, %v3221
  %3223 = vmatmul.bf16.gmra.mxu0 %v337
  %v3224 = vpop.f32.mrf.mxu0
  %v3225 = vadd.f32 %v510, %v3224
  %v3226 = vpop.f32.mrf.mxu0
  %v3227 = vadd.f32 %v510, %v3226
  %3228 = vmatmul.bf16.gmra.mxu0 %v341
  %v3229 = vpop.f32.mrf.mxu0
  %v3230 = vadd.f32 %v510, %v3229
  %v3231 = vpop.f32.mrf.mxu0
  %v3232 = vadd.f32 %v510, %v3231
  %3233 = vmatmul.bf16.gmra.mxu0 %v345
  %v3234 = vpop.f32.mrf.mxu0
  %v3235 = vadd.f32 %v510, %v3234
  %v3236 = vpop.f32.mrf.mxu0
  %v3237 = vadd.f32 %v510, %v3236
  %3238 = vmatmul.bf16.gmra.mxu0 %v349
  %v3239 = vpop.f32.mrf.mxu0
  %v3240 = vadd.f32 %v510, %v3239
  %v3241 = vpop.f32.mrf.mxu0
  %v3242 = vadd.f32 %v510, %v3241
  %3243 = vmatmul.bf16.gmra.mxu0 %v353
  %v3244 = vpop.f32.mrf.mxu0
  %v3245 = vadd.f32 %v510, %v3244
  %v3246 = vpop.f32.mrf.mxu0
  %v3247 = vadd.f32 %v510, %v3246
  %3248 = vmatmul.bf16.gmra.mxu0 %v357
  %v3249 = vpop.f32.mrf.mxu0
  %v3250 = vadd.f32 %v510, %v3249
  %v3251 = vpop.f32.mrf.mxu0
  %v3252 = vadd.f32 %v510, %v3251
  %3253 = vmatmul.bf16.gmra.mxu0 %v361
  %v3254 = vpop.f32.mrf.mxu0
  %v3255 = vadd.f32 %v510, %v3254
  %v3256 = vpop.f32.mrf.mxu0
  %v3257 = vadd.f32 %v510, %v3256
  %3258 = vmatmul.bf16.gmra.mxu0 %v365
  %v3259 = vpop.f32.mrf.mxu0
  %v3260 = vadd.f32 %v510, %v3259
  %v3261 = vpop.f32.mrf.mxu0
  %v3262 = vadd.f32 %v510, %v3261
  %3263 = vmatmul.bf16.gmra.mxu0 %v369
  %v3264 = vpop.f32.mrf.mxu0
  %v3265 = vadd.f32 %v510, %v3264
  %v3266 = vpop.f32.mrf.mxu0
  %v3267 = vadd.f32 %v510, %v3266
  %3268 = vmatmul.bf16.gmra.mxu0 %v373
  %v3269 = vpop.f32.mrf.mxu0
  %v3270 = vadd.f32 %v510, %v3269
  %v3271 = vpop.f32.mrf.mxu0
  %v3272 = vadd.f32 %v510, %v3271
  %3273 = vmatmul.bf16.gmra.mxu0 %v377
  %v3274 = vpop.f32.mrf.mxu0
  %v3275 = vadd.f32 %v510, %v3274
  %v3276 = vpop.f32.mrf.mxu0
  %v3277 = vadd.f32 %v510, %v3276
  %3278 = vmatmul.bf16.gmra.mxu0 %v381
  %v3279 = vpop.f32.mrf.mxu0
  %v3280 = vadd.f32 %v510, %v3279
  %v3281 = vpop.f32.mrf.mxu0
  %v3282 = vadd.f32 %v510, %v3281
  %3283 = vmatmul.bf16.gmra.mxu0 %v385
  %v3284 = vpop.f32.mrf.mxu0
  %v3285 = vadd.f32 %v510, %v3284
  %v3286 = vpop.f32.mrf.mxu0
  %v3287 = vadd.f32 %v510, %v3286
  %3288 = vmatmul.bf16.gmra.mxu0 %v389
  %v3289 = vpop.f32.mrf.mxu0
  %v3290 = vadd.f32 %v510, %v3289
  %v3291 = vpop.f32.mrf.mxu0
  %v3292 = vadd.f32 %v510, %v3291
  %3293 = vmatmul.bf16.gmra.mxu0 %v393
  %v3294 = vpop.f32.mrf.mxu0
  %v3295 = vadd.f32 %v510, %v3294
  %v3296 = vpop.f32.mrf.mxu0
  %v3297 = vadd.f32 %v510, %v3296
  %3298 = vmatmul.bf16.gmra.mxu0 %v397
  %v3299 = vpop.f32.mrf.mxu0
  %v3300 = vadd.f32 %v510, %v3299
  %v3301 = vpop.f32.mrf.mxu0
  %v3302 = vadd.f32 %v510, %v3301
  %3303 = vmatmul.bf16.gmra.mxu0 %v401
  %v3304 = vpop.f32.mrf.mxu0
  %v3305 = vadd.f32 %v510, %v3304
  %v3306 = vpop.f32.mrf.mxu0
  %v3307 = vadd.f32 %v510, %v3306
  %3308 = vdwg.mxu0
  %3309 = vmatpush.bf16.msra.mxu0 %v878
  %3310 = vmatpush.bf16.msra.mxu0 %v874
  %3311 = vmatpush.bf16.msra.mxu0 %v870
  %3312 = vmatpush.bf16.msra.mxu0 %v866
  %3313 = vmatpush.bf16.msra.mxu0 %v862
  %3314 = vmatpush.bf16.msra.mxu0 %v858
  %3315 = vmatpush.bf16.msra.mxu0 %v854
  %3316 = vmatpush.bf16.msra.mxu0 %v850
  %3317 = vmatmul.bf16.gmra.mxu0 %v278
  %v3318 = vpop.f32.mrf.mxu0
  %v3319 = vadd.f32 %v3150, %v3318
  %v3320 = vpop.f32.mrf.mxu0
  %v3321 = vadd.f32 %v3152, %v3320
  %3322 = vmatmul.bf16.gmra.mxu0 %v282
  %v3323 = vpop.f32.mrf.mxu0
  %v3324 = vadd.f32 %v3155, %v3323
  %v3325 = vpop.f32.mrf.mxu0
  %v3326 = vadd.f32 %v3157, %v3325
  %3327 = vmatmul.bf16.gmra.mxu0 %v286
  %v3328 = vpop.f32.mrf.mxu0
  %v3329 = vadd.f32 %v3160, %v3328
  %v3330 = vpop.f32.mrf.mxu0
  %v3331 = vadd.f32 %v3162, %v3330
  %3332 = vmatmul.bf16.gmra.mxu0 %v290
  %v3333 = vpop.f32.mrf.mxu0
  %v3334 = vadd.f32 %v3165, %v3333
  %v3335 = vpop.f32.mrf.mxu0
  %v3336 = vadd.f32 %v3167, %v3335
  %3337 = vmatmul.bf16.gmra.mxu0 %v294
  %v3338 = vpop.f32.mrf.mxu0
  %v3339 = vadd.f32 %v3170, %v3338
  %v3340 = vpop.f32.mrf.mxu0
  %v3341 = vadd.f32 %v3172, %v3340
  %3342 = vmatmul.bf16.gmra.mxu0 %v298
  %v3343 = vpop.f32.mrf.mxu0
  %v3344 = vadd.f32 %v3175, %v3343
  %v3345 = vpop.f32.mrf.mxu0
  %v3346 = vadd.f32 %v3177, %v3345
  %3347 = vmatmul.bf16.gmra.mxu0 %v302
  %v3348 = vpop.f32.mrf.mxu0
  %v3349 = vadd.f32 %v3180, %v3348
  %v3350 = vpop.f32.mrf.mxu0
  %v3351 = vadd.f32 %v3182, %v3350
  %3352 = vmatmul.bf16.gmra.mxu0 %v306
  %v3353 = vpop.f32.mrf.mxu0
  %v3354 = vadd.f32 %v3185, %v3353
  %v3355 = vpop.f32.mrf.mxu0
  %v3356 = vadd.f32 %v3187, %v3355
  %3357 = vmatmul.bf16.gmra.mxu0 %v310
  %v3358 = vpop.f32.mrf.mxu0
  %v3359 = vadd.f32 %v3190, %v3358
  %v3360 = vpop.f32.mrf.mxu0
  %v3361 = vadd.f32 %v3192, %v3360
  %3362 = vmatmul.bf16.gmra.mxu0 %v314
  %v3363 = vpop.f32.mrf.mxu0
  %v3364 = vadd.f32 %v3195, %v3363
  %v3365 = vpop.f32.mrf.mxu0
  %v3366 = vadd.f32 %v3197, %v3365
  %3367 = vmatmul.bf16.gmra.mxu0 %v318
  %v3368 = vpop.f32.mrf.mxu0
  %v3369 = vadd.f32 %v3200, %v3368
  %v3370 = vpop.f32.mrf.mxu0
  %v3371 = vadd.f32 %v3202, %v3370
  %3372 = vmatmul.bf16.gmra.mxu0 %v322
  %v3373 = vpop.f32.mrf.mxu0
  %v3374 = vadd.f32 %v3205, %v3373
  %v3375 = vpop.f32.mrf.mxu0
  %v3376 = vadd.f32 %v3207, %v3375
  %3377 = vmatmul.bf16.gmra.mxu0 %v326
  %v3378 = vpop.f32.mrf.mxu0
  %v3379 = vadd.f32 %v3210, %v3378
  %v3380 = vpop.f32.mrf.mxu0
  %v3381 = vadd.f32 %v3212, %v3380
  %3382 = vmatmul.bf16.gmra.mxu0 %v330
  %v3383 = vpop.f32.mrf.mxu0
  %v3384 = vadd.f32 %v3215, %v3383
  %v3385 = vpop.f32.mrf.mxu0
  %v3386 = vadd.f32 %v3217, %v3385
  %3387 = vmatmul.bf16.gmra.mxu0 %v334
  %v3388 = vpop.f32.mrf.mxu0
  %v3389 = vadd.f32 %v3220, %v3388
  %v3390 = vpop.f32.mrf.mxu0
  %v3391 = vadd.f32 %v3222, %v3390
  %3392 = vmatmul.bf16.gmra.mxu0 %v338
  %v3393 = vpop.f32.mrf.mxu0
  %v3394 = vadd.f32 %v3225, %v3393
  %v3395 = vpop.f32.mrf.mxu0
  %v3396 = vadd.f32 %v3227, %v3395
  %3397 = vmatmul.bf16.gmra.mxu0 %v342
  %v3398 = vpop.f32.mrf.mxu0
  %v3399 = vadd.f32 %v3230, %v3398
  %v3400 = vpop.f32.mrf.mxu0
  %v3401 = vadd.f32 %v3232, %v3400
  %3402 = vmatmul.bf16.gmra.mxu0 %v346
  %v3403 = vpop.f32.mrf.mxu0
  %v3404 = vadd.f32 %v3235, %v3403
  %v3405 = vpop.f32.mrf.mxu0
  %v3406 = vadd.f32 %v3237, %v3405
  %3407 = vmatmul.bf16.gmra.mxu0 %v350
  %v3408 = vpop.f32.mrf.mxu0
  %v3409 = vadd.f32 %v3240, %v3408
  %v3410 = vpop.f32.mrf.mxu0
  %v3411 = vadd.f32 %v3242, %v3410
  %3412 = vmatmul.bf16.gmra.mxu0 %v354
  %v3413 = vpop.f32.mrf.mxu0
  %v3414 = vadd.f32 %v3245, %v3413
  %v3415 = vpop.f32.mrf.mxu0
  %v3416 = vadd.f32 %v3247, %v3415
  %3417 = vmatmul.bf16.gmra.mxu0 %v358
  %v3418 = vpop.f32.mrf.mxu0
  %v3419 = vadd.f32 %v3250, %v3418
  %v3420 = vpop.f32.mrf.mxu0
  %v3421 = vadd.f32 %v3252, %v3420
  %3422 = vmatmul.bf16.gmra.mxu0 %v362
  %v3423 = vpop.f32.mrf.mxu0
  %v3424 = vadd.f32 %v3255, %v3423
  %v3425 = vpop.f32.mrf.mxu0
  %v3426 = vadd.f32 %v3257, %v3425
  %3427 = vmatmul.bf16.gmra.mxu0 %v366
  %v3428 = vpop.f32.mrf.mxu0
  %v3429 = vadd.f32 %v3260, %v3428
  %v3430 = vpop.f32.mrf.mxu0
  %v3431 = vadd.f32 %v3262, %v3430
  %3432 = vmatmul.bf16.gmra.mxu0 %v370
  %v3433 = vpop.f32.mrf.mxu0
  %v3434 = vadd.f32 %v3265, %v3433
  %v3435 = vpop.f32.mrf.mxu0
  %v3436 = vadd.f32 %v3267, %v3435
  %3437 = vmatmul.bf16.gmra.mxu0 %v374
  %v3438 = vpop.f32.mrf.mxu0
  %v3439 = vadd.f32 %v3270, %v3438
  %v3440 = vpop.f32.mrf.mxu0
  %v3441 = vadd.f32 %v3272, %v3440
  %3442 = vmatmul.bf16.gmra.mxu0 %v378
  %v3443 = vpop.f32.mrf.mxu0
  %v3444 = vadd.f32 %v3275, %v3443
  %v3445 = vpop.f32.mrf.mxu0
  %v3446 = vadd.f32 %v3277, %v3445
  %3447 = vmatmul.bf16.gmra.mxu0 %v382
  %v3448 = vpop.f32.mrf.mxu0
  %v3449 = vadd.f32 %v3280, %v3448
  %v3450 = vpop.f32.mrf.mxu0
  %v3451 = vadd.f32 %v3282, %v3450
  %3452 = vmatmul.bf16.gmra.mxu0 %v386
  %v3453 = vpop.f32.mrf.mxu0
  %v3454 = vadd.f32 %v3285, %v3453
  %v3455 = vpop.f32.mrf.mxu0
  %v3456 = vadd.f32 %v3287, %v3455
  %3457 = vmatmul.bf16.gmra.mxu0 %v390
  %v3458 = vpop.f32.mrf.mxu0
  %v3459 = vadd.f32 %v3290, %v3458
  %v3460 = vpop.f32.mrf.mxu0
  %v3461 = vadd.f32 %v3292, %v3460
  %3462 = vmatmul.bf16.gmra.mxu0 %v394
  %v3463 = vpop.f32.mrf.mxu0
  %v3464 = vadd.f32 %v3295, %v3463
  %v3465 = vpop.f32.mrf.mxu0
  %v3466 = vadd.f32 %v3297, %v3465
  %3467 = vmatmul.bf16.gmra.mxu0 %v398
  %v3468 = vpop.f32.mrf.mxu0
  %v3469 = vadd.f32 %v3300, %v3468
  %v3470 = vpop.f32.mrf.mxu0
  %v3471 = vadd.f32 %v3302, %v3470
  %3472 = vmatmul.bf16.gmra.mxu0 %v402
  %v3473 = vpop.f32.mrf.mxu0
  %v3474 = vadd.f32 %v3305, %v3473
  %v3475 = vpop.f32.mrf.mxu0
  %v3476 = vadd.f32 %v3307, %v3475
  %3477 = vdwg.mxu0
  %3478 = vmatpush.bf16.msra.mxu0 %v910
  %3479 = vmatpush.bf16.msra.mxu0 %v906
  %3480 = vmatpush.bf16.msra.mxu0 %v902
  %3481 = vmatpush.bf16.msra.mxu0 %v898
  %3482 = vmatpush.bf16.msra.mxu0 %v894
  %3483 = vmatpush.bf16.msra.mxu0 %v890
  %3484 = vmatpush.bf16.msra.mxu0 %v886
  %3485 = vmatpush.bf16.msra.mxu0 %v882
  %3486 = vmatmul.bf16.gmra.mxu0 %v279
  %v3487 = vpop.f32.mrf.mxu0
  %v3488 = vadd.f32 %v3319, %v3487
  %v3489 = vpop.f32.mrf.mxu0
  %v3490 = vadd.f32 %v3321, %v3489
  %3491 = vmatmul.bf16.gmra.mxu0 %v283
  %v3492 = vpop.f32.mrf.mxu0
  %v3493 = vadd.f32 %v3324, %v3492
  %v3494 = vpop.f32.mrf.mxu0
  %v3495 = vadd.f32 %v3326, %v3494
  %3496 = vmatmul.bf16.gmra.mxu0 %v287
  %v3497 = vpop.f32.mrf.mxu0
  %v3498 = vadd.f32 %v3329, %v3497
  %v3499 = vpop.f32.mrf.mxu0
  %v3500 = vadd.f32 %v3331, %v3499
  %3501 = vmatmul.bf16.gmra.mxu0 %v291
  %v3502 = vpop.f32.mrf.mxu0
  %v3503 = vadd.f32 %v3334, %v3502
  %v3504 = vpop.f32.mrf.mxu0
  %v3505 = vadd.f32 %v3336, %v3504
  %3506 = vmatmul.bf16.gmra.mxu0 %v295
  %v3507 = vpop.f32.mrf.mxu0
  %v3508 = vadd.f32 %v3339, %v3507
  %v3509 = vpop.f32.mrf.mxu0
  %v3510 = vadd.f32 %v3341, %v3509
  %3511 = vmatmul.bf16.gmra.mxu0 %v299
  %v3512 = vpop.f32.mrf.mxu0
  %v3513 = vadd.f32 %v3344, %v3512
  %v3514 = vpop.f32.mrf.mxu0
  %v3515 = vadd.f32 %v3346, %v3514
  %3516 = vmatmul.bf16.gmra.mxu0 %v303
  %v3517 = vpop.f32.mrf.mxu0
  %v3518 = vadd.f32 %v3349, %v3517
  %v3519 = vpop.f32.mrf.mxu0
  %v3520 = vadd.f32 %v3351, %v3519
  %3521 = vmatmul.bf16.gmra.mxu0 %v307
  %v3522 = vpop.f32.mrf.mxu0
  %v3523 = vadd.f32 %v3354, %v3522
  %v3524 = vpop.f32.mrf.mxu0
  %v3525 = vadd.f32 %v3356, %v3524
  %3526 = vmatmul.bf16.gmra.mxu0 %v311
  %v3527 = vpop.f32.mrf.mxu0
  %v3528 = vadd.f32 %v3359, %v3527
  %v3529 = vpop.f32.mrf.mxu0
  %v3530 = vadd.f32 %v3361, %v3529
  %3531 = vmatmul.bf16.gmra.mxu0 %v315
  %v3532 = vpop.f32.mrf.mxu0
  %v3533 = vadd.f32 %v3364, %v3532
  %v3534 = vpop.f32.mrf.mxu0
  %v3535 = vadd.f32 %v3366, %v3534
  %3536 = vmatmul.bf16.gmra.mxu0 %v319
  %v3537 = vpop.f32.mrf.mxu0
  %v3538 = vadd.f32 %v3369, %v3537
  %v3539 = vpop.f32.mrf.mxu0
  %v3540 = vadd.f32 %v3371, %v3539
  %3541 = vmatmul.bf16.gmra.mxu0 %v323
  %v3542 = vpop.f32.mrf.mxu0
  %v3543 = vadd.f32 %v3374, %v3542
  %v3544 = vpop.f32.mrf.mxu0
  %v3545 = vadd.f32 %v3376, %v3544
  %3546 = vmatmul.bf16.gmra.mxu0 %v327
  %v3547 = vpop.f32.mrf.mxu0
  %v3548 = vadd.f32 %v3379, %v3547
  %v3549 = vpop.f32.mrf.mxu0
  %v3550 = vadd.f32 %v3381, %v3549
  %3551 = vmatmul.bf16.gmra.mxu0 %v331
  %v3552 = vpop.f32.mrf.mxu0
  %v3553 = vadd.f32 %v3384, %v3552
  %v3554 = vpop.f32.mrf.mxu0
  %v3555 = vadd.f32 %v3386, %v3554
  %3556 = vmatmul.bf16.gmra.mxu0 %v335
  %v3557 = vpop.f32.mrf.mxu0
  %v3558 = vadd.f32 %v3389, %v3557
  %v3559 = vpop.f32.mrf.mxu0
  %v3560 = vadd.f32 %v3391, %v3559
  %3561 = vmatmul.bf16.gmra.mxu0 %v339
  %v3562 = vpop.f32.mrf.mxu0
  %v3563 = vadd.f32 %v3394, %v3562
  %v3564 = vpop.f32.mrf.mxu0
  %v3565 = vadd.f32 %v3396, %v3564
  %3566 = vmatmul.bf16.gmra.mxu0 %v343
  %v3567 = vpop.f32.mrf.mxu0
  %v3568 = vadd.f32 %v3399, %v3567
  %v3569 = vpop.f32.mrf.mxu0
  %v3570 = vadd.f32 %v3401, %v3569
  %3571 = vmatmul.bf16.gmra.mxu0 %v347
  %v3572 = vpop.f32.mrf.mxu0
  %v3573 = vadd.f32 %v3404, %v3572
  %v3574 = vpop.f32.mrf.mxu0
  %v3575 = vadd.f32 %v3406, %v3574
  %3576 = vmatmul.bf16.gmra.mxu0 %v351
  %v3577 = vpop.f32.mrf.mxu0
  %v3578 = vadd.f32 %v3409, %v3577
  %v3579 = vpop.f32.mrf.mxu0
  %v3580 = vadd.f32 %v3411, %v3579
  %3581 = vmatmul.bf16.gmra.mxu0 %v355
  %v3582 = vpop.f32.mrf.mxu0
  %v3583 = vadd.f32 %v3414, %v3582
  %v3584 = vpop.f32.mrf.mxu0
  %v3585 = vadd.f32 %v3416, %v3584
  %3586 = vmatmul.bf16.gmra.mxu0 %v359
  %v3587 = vpop.f32.mrf.mxu0
  %v3588 = vadd.f32 %v3419, %v3587
  %v3589 = vpop.f32.mrf.mxu0
  %v3590 = vadd.f32 %v3421, %v3589
  %3591 = vmatmul.bf16.gmra.mxu0 %v363
  %v3592 = vpop.f32.mrf.mxu0
  %v3593 = vadd.f32 %v3424, %v3592
  %v3594 = vpop.f32.mrf.mxu0
  %v3595 = vadd.f32 %v3426, %v3594
  %3596 = vmatmul.bf16.gmra.mxu0 %v367
  %v3597 = vpop.f32.mrf.mxu0
  %v3598 = vadd.f32 %v3429, %v3597
  %v3599 = vpop.f32.mrf.mxu0
  %v3600 = vadd.f32 %v3431, %v3599
  %3601 = vmatmul.bf16.gmra.mxu0 %v371
  %v3602 = vpop.f32.mrf.mxu0
  %v3603 = vadd.f32 %v3434, %v3602
  %v3604 = vpop.f32.mrf.mxu0
  %v3605 = vadd.f32 %v3436, %v3604
  %3606 = vmatmul.bf16.gmra.mxu0 %v375
  %v3607 = vpop.f32.mrf.mxu0
  %v3608 = vadd.f32 %v3439, %v3607
  %v3609 = vpop.f32.mrf.mxu0
  %v3610 = vadd.f32 %v3441, %v3609
  %3611 = vmatmul.bf16.gmra.mxu0 %v379
  %v3612 = vpop.f32.mrf.mxu0
  %v3613 = vadd.f32 %v3444, %v3612
  %v3614 = vpop.f32.mrf.mxu0
  %v3615 = vadd.f32 %v3446, %v3614
  %3616 = vmatmul.bf16.gmra.mxu0 %v383
  %v3617 = vpop.f32.mrf.mxu0
  %v3618 = vadd.f32 %v3449, %v3617
  %v3619 = vpop.f32.mrf.mxu0
  %v3620 = vadd.f32 %v3451, %v3619
  %3621 = vmatmul.bf16.gmra.mxu0 %v387
  %v3622 = vpop.f32.mrf.mxu0
  %v3623 = vadd.f32 %v3454, %v3622
  %v3624 = vpop.f32.mrf.mxu0
  %v3625 = vadd.f32 %v3456, %v3624
  %3626 = vmatmul.bf16.gmra.mxu0 %v391
  %v3627 = vpop.f32.mrf.mxu0
  %v3628 = vadd.f32 %v3459, %v3627
  %v3629 = vpop.f32.mrf.mxu0
  %v3630 = vadd.f32 %v3461, %v3629
  %3631 = vmatmul.bf16.gmra.mxu0 %v395
  %v3632 = vpop.f32.mrf.mxu0
  %v3633 = vadd.f32 %v3464, %v3632
  %v3634 = vpop.f32.mrf.mxu0
  %v3635 = vadd.f32 %v3466, %v3634
  %3636 = vmatmul.bf16.gmra.mxu0 %v399
  %v3637 = vpop.f32.mrf.mxu0
  %v3638 = vadd.f32 %v3469, %v3637
  %v3639 = vpop.f32.mrf.mxu0
  %v3640 = vadd.f32 %v3471, %v3639
  %3641 = vmatmul.bf16.gmra.mxu0 %v403
  %v3642 = vpop.f32.mrf.mxu0
  %v3643 = vadd.f32 %v3474, %v3642
  %v3644 = vpop.f32.mrf.mxu0
  %v3645 = vadd.f32 %v3476, %v3644
  %3646 = vdwg.mxu0
  %3647 = vmatpush.bf16.msra.mxu0 0
  %3648 = vmatpush.bf16.msra.mxu0 0
  %3649 = vmatpush.bf16.msra.mxu0 0
  %3650 = vmatpush.bf16.msra.mxu0 0
  %3651 = vmatpush.bf16.msra.mxu0 0
  %3652 = vmatpush.bf16.msra.mxu0 0
  %3653 = vmatpush.bf16.msra.mxu0 0
  %3654 = vmatpush.bf16.msra.mxu0 %v914
  %3655 = vmatmul.bf16.gmra.mxu0 %v1017
  %v3656 = vpop.f32.mrf.mxu0
  %v3657 = vadd.f32 %v3488, %v3656
  %v3658 = vpop.f32.mrf.mxu0
  %v3659 = vadd.f32 %v3490, %v3658
  %3660 = vmatmul.bf16.gmra.mxu0 %v1020
  %v3661 = vpop.f32.mrf.mxu0
  %v3662 = vadd.f32 %v3493, %v3661
  %v3663 = vpop.f32.mrf.mxu0
  %v3664 = vadd.f32 %v3495, %v3663
  %3665 = vmatmul.bf16.gmra.mxu0 %v1023
  %v3666 = vpop.f32.mrf.mxu0
  %v3667 = vadd.f32 %v3498, %v3666
  %v3668 = vpop.f32.mrf.mxu0
  %v3669 = vadd.f32 %v3500, %v3668
  %3670 = vmatmul.bf16.gmra.mxu0 %v1026
  %v3671 = vpop.f32.mrf.mxu0
  %v3672 = vadd.f32 %v3503, %v3671
  %v3673 = vpop.f32.mrf.mxu0
  %v3674 = vadd.f32 %v3505, %v3673
  %3675 = vmatmul.bf16.gmra.mxu0 %v1029
  %v3676 = vpop.f32.mrf.mxu0
  %v3677 = vadd.f32 %v3508, %v3676
  %v3678 = vpop.f32.mrf.mxu0
  %v3679 = vadd.f32 %v3510, %v3678
  %3680 = vmatmul.bf16.gmra.mxu0 %v1032
  %v3681 = vpop.f32.mrf.mxu0
  %v3682 = vadd.f32 %v3513, %v3681
  %v3683 = vpop.f32.mrf.mxu0
  %v3684 = vadd.f32 %v3515, %v3683
  %3685 = vmatmul.bf16.gmra.mxu0 %v1035
  %v3686 = vpop.f32.mrf.mxu0
  %v3687 = vadd.f32 %v3518, %v3686
  %v3688 = vpop.f32.mrf.mxu0
  %v3689 = vadd.f32 %v3520, %v3688
  %3690 = vmatmul.bf16.gmra.mxu0 %v1038
  %v3691 = vpop.f32.mrf.mxu0
  %v3692 = vadd.f32 %v3523, %v3691
  %v3693 = vpop.f32.mrf.mxu0
  %v3694 = vadd.f32 %v3525, %v3693
  %3695 = vmatmul.bf16.gmra.mxu0 %v1041
  %v3696 = vpop.f32.mrf.mxu0
  %v3697 = vadd.f32 %v3528, %v3696
  %v3698 = vpop.f32.mrf.mxu0
  %v3699 = vadd.f32 %v3530, %v3698
  %3700 = vmatmul.bf16.gmra.mxu0 %v1044
  %v3701 = vpop.f32.mrf.mxu0
  %v3702 = vadd.f32 %v3533, %v3701
  %v3703 = vpop.f32.mrf.mxu0
  %v3704 = vadd.f32 %v3535, %v3703
  %3705 = vmatmul.bf16.gmra.mxu0 %v1047
  %v3706 = vpop.f32.mrf.mxu0
  %v3707 = vadd.f32 %v3538, %v3706
  %v3708 = vpop.f32.mrf.mxu0
  %v3709 = vadd.f32 %v3540, %v3708
  %3710 = vmatmul.bf16.gmra.mxu0 %v1050
  %v3711 = vpop.f32.mrf.mxu0
  %v3712 = vadd.f32 %v3543, %v3711
  %v3713 = vpop.f32.mrf.mxu0
  %v3714 = vadd.f32 %v3545, %v3713
  %3715 = vmatmul.bf16.gmra.mxu0 %v1053
  %v3716 = vpop.f32.mrf.mxu0
  %v3717 = vadd.f32 %v3548, %v3716
  %v3718 = vpop.f32.mrf.mxu0
  %v3719 = vadd.f32 %v3550, %v3718
  %3720 = vmatmul.bf16.gmra.mxu0 %v1056
  %v3721 = vpop.f32.mrf.mxu0
  %v3722 = vadd.f32 %v3553, %v3721
  %v3723 = vpop.f32.mrf.mxu0
  %v3724 = vadd.f32 %v3555, %v3723
  %3725 = vmatmul.bf16.gmra.mxu0 %v1059
  %v3726 = vpop.f32.mrf.mxu0
  %v3727 = vadd.f32 %v3558, %v3726
  %v3728 = vpop.f32.mrf.mxu0
  %v3729 = vadd.f32 %v3560, %v3728
  %3730 = vmatmul.bf16.gmra.mxu0 %v1062
  %v3731 = vpop.f32.mrf.mxu0
  %v3732 = vadd.f32 %v3563, %v3731
  %v3733 = vpop.f32.mrf.mxu0
  %v3734 = vadd.f32 %v3565, %v3733
  %3735 = vmatmul.bf16.gmra.mxu0 %v1065
  %v3736 = vpop.f32.mrf.mxu0
  %v3737 = vadd.f32 %v3568, %v3736
  %v3738 = vpop.f32.mrf.mxu0
  %v3739 = vadd.f32 %v3570, %v3738
  %3740 = vmatmul.bf16.gmra.mxu0 %v1068
  %v3741 = vpop.f32.mrf.mxu0
  %v3742 = vadd.f32 %v3573, %v3741
  %v3743 = vpop.f32.mrf.mxu0
  %v3744 = vadd.f32 %v3575, %v3743
  %3745 = vmatmul.bf16.gmra.mxu0 %v1071
  %v3746 = vpop.f32.mrf.mxu0
  %v3747 = vadd.f32 %v3578, %v3746
  %v3748 = vpop.f32.mrf.mxu0
  %v3749 = vadd.f32 %v3580, %v3748
  %3750 = vmatmul.bf16.gmra.mxu0 %v1074
  %v3751 = vpop.f32.mrf.mxu0
  %v3752 = vadd.f32 %v3583, %v3751
  %v3753 = vpop.f32.mrf.mxu0
  %v3754 = vadd.f32 %v3585, %v3753
  %3755 = vmatmul.bf16.gmra.mxu0 %v1077
  %v3756 = vpop.f32.mrf.mxu0
  %v3757 = vadd.f32 %v3588, %v3756
  %v3758 = vpop.f32.mrf.mxu0
  %v3759 = vadd.f32 %v3590, %v3758
  %3760 = vmatmul.bf16.gmra.mxu0 %v1080
  %v3761 = vpop.f32.mrf.mxu0
  %v3762 = vadd.f32 %v3593, %v3761
  %v3763 = vpop.f32.mrf.mxu0
  %v3764 = vadd.f32 %v3595, %v3763
  %3765 = vmatmul.bf16.gmra.mxu0 %v1083
  %v3766 = vpop.f32.mrf.mxu0
  %v3767 = vadd.f32 %v3598, %v3766
  %v3768 = vpop.f32.mrf.mxu0
  %v3769 = vadd.f32 %v3600, %v3768
  %3770 = vmatmul.bf16.gmra.mxu0 %v1086
  %v3771 = vpop.f32.mrf.mxu0
  %v3772 = vadd.f32 %v3603, %v3771
  %v3773 = vpop.f32.mrf.mxu0
  %v3774 = vadd.f32 %v3605, %v3773
  %3775 = vmatmul.bf16.gmra.mxu0 %v1089
  %v3776 = vpop.f32.mrf.mxu0
  %v3777 = vadd.f32 %v3608, %v3776
  %v3778 = vpop.f32.mrf.mxu0
  %v3779 = vadd.f32 %v3610, %v3778
  %3780 = vmatmul.bf16.gmra.mxu0 %v1092
  %v3781 = vpop.f32.mrf.mxu0
  %v3782 = vadd.f32 %v3613, %v3781
  %v3783 = vpop.f32.mrf.mxu0
  %v3784 = vadd.f32 %v3615, %v3783
  %3785 = vmatmul.bf16.gmra.mxu0 %v1095
  %v3786 = vpop.f32.mrf.mxu0
  %v3787 = vadd.f32 %v3618, %v3786
  %v3788 = vpop.f32.mrf.mxu0
  %v3789 = vadd.f32 %v3620, %v3788
  %3790 = vmatmul.bf16.gmra.mxu0 %v1098
  %v3791 = vpop.f32.mrf.mxu0
  %v3792 = vadd.f32 %v3623, %v3791
  %v3793 = vpop.f32.mrf.mxu0
  %v3794 = vadd.f32 %v3625, %v3793
  %3795 = vmatmul.bf16.gmra.mxu0 %v1101
  %v3796 = vpop.f32.mrf.mxu0
  %v3797 = vadd.f32 %v3628, %v3796
  %v3798 = vpop.f32.mrf.mxu0
  %v3799 = vadd.f32 %v3630, %v3798
  %3800 = vmatmul.bf16.gmra.mxu0 %v1104
  %v3801 = vpop.f32.mrf.mxu0
  %v3802 = vadd.f32 %v3633, %v3801
  %v3803 = vpop.f32.mrf.mxu0
  %v3804 = vadd.f32 %v3635, %v3803
  %3805 = vmatmul.bf16.gmra.mxu0 %v1107
  %v3806 = vpop.f32.mrf.mxu0
  %v3807 = vadd.f32 %v3638, %v3806
  %v3808 = vpop.f32.mrf.mxu0
  %v3809 = vadd.f32 %v3640, %v3808
  %3810 = vmatmul.bf16.gmra.mxu0 %v1110
  %v3811 = vpop.f32.mrf.mxu0
  %v3812 = vadd.f32 %v3643, %v3811
  %v3813 = vpop.f32.mrf.mxu0
  %v3814 = vadd.f32 %v3645, %v3813
  %3815 = vdwg.mxu0
  %v3816 = vmax.f32 %v1629, 0.0
  %v3817 = vmax.f32 %v2305, 0.0
  %v3818 = vmax.f32 %v2981, 0.0
  %v3819 = vmax.f32 %v3657, 0.0
  %v3820 = vmax.f32 %v1631, 0.0
  %v3821 = vmax.f32 %v2307, 0.0
  %v3822 = vmax.f32 %v2983, 0.0
  %v3823 = vmax.f32 %v3659, 0.0
  %v3824 = vmax.f32 %v1634, 0.0
  %v3825 = vmax.f32 %v2310, 0.0
  %v3826 = vmax.f32 %v2986, 0.0
  %v3827 = vmax.f32 %v3662, 0.0
  %v3828 = vmax.f32 %v1636, 0.0
  %v3829 = vmax.f32 %v2312, 0.0
  %v3830 = vmax.f32 %v2988, 0.0
  %v3831 = vmax.f32 %v3664, 0.0
  %v3832 = vmax.f32 %v1639, 0.0
  %v3833 = vmax.f32 %v2315, 0.0
  %v3834 = vmax.f32 %v2991, 0.0
  %v3835 = vmax.f32 %v3667, 0.0
  %v3836 = vmax.f32 %v1641, 0.0
  %v3837 = vmax.f32 %v2317, 0.0
  %v3838 = vmax.f32 %v2993, 0.0
  %v3839 = vmax.f32 %v3669, 0.0
  %v3840 = vmax.f32 %v1644, 0.0
  %v3841 = vmax.f32 %v2320, 0.0
  %v3842 = vmax.f32 %v2996, 0.0
  %v3843 = vmax.f32 %v3672, 0.0
  %v3844 = vmax.f32 %v1646, 0.0
  %v3845 = vmax.f32 %v2322, 0.0
  %v3846 = vmax.f32 %v2998, 0.0
  %v3847 = vmax.f32 %v3674, 0.0
  %v3848 = vmax.f32 %v1649, 0.0
  %v3849 = vmax.f32 %v2325, 0.0
  %v3850 = vmax.f32 %v3001, 0.0
  %v3851 = vmax.f32 %v3677, 0.0
  %v3852 = vmax.f32 %v1651, 0.0
  %v3853 = vmax.f32 %v2327, 0.0
  %v3854 = vmax.f32 %v3003, 0.0
  %v3855 = vmax.f32 %v3679, 0.0
  %v3856 = vmax.f32 %v1654, 0.0
  %v3857 = vmax.f32 %v2330, 0.0
  %v3858 = vmax.f32 %v3006, 0.0
  %v3859 = vmax.f32 %v3682, 0.0
  %v3860 = vmax.f32 %v1656, 0.0
  %v3861 = vmax.f32 %v2332, 0.0
  %v3862 = vmax.f32 %v3008, 0.0
  %v3863 = vmax.f32 %v3684, 0.0
  %v3864 = vmax.f32 %v1659, 0.0
  %v3865 = vmax.f32 %v2335, 0.0
  %v3866 = vmax.f32 %v3011, 0.0
  %v3867 = vmax.f32 %v3687, 0.0
  %v3868 = vmax.f32 %v1661, 0.0
  %v3869 = vmax.f32 %v2337, 0.0
  %v3870 = vmax.f32 %v3013, 0.0
  %v3871 = vmax.f32 %v3689, 0.0
  %v3872 = vmax.f32 %v1664, 0.0
  %v3873 = vmax.f32 %v2340, 0.0
  %v3874 = vmax.f32 %v3016, 0.0
  %v3875 = vmax.f32 %v3692, 0.0
  %v3876 = vmax.f32 %v1666, 0.0
  %v3877 = vmax.f32 %v2342, 0.0
  %v3878 = vmax.f32 %v3018, 0.0
  %v3879 = vmax.f32 %v3694, 0.0
  %v3880 = vmax.f32 %v1669, 0.0
  %v3881 = vmax.f32 %v2345, 0.0
  %v3882 = vmax.f32 %v3021, 0.0
  %v3883 = vmax.f32 %v3697, 0.0
  %v3884 = vmax.f32 %v1671, 0.0
  %v3885 = vmax.f32 %v2347, 0.0
  %v3886 = vmax.f32 %v3023, 0.0
  %v3887 = vmax.f32 %v3699, 0.0
  %v3888 = vmax.f32 %v1674, 0.0
  %v3889 = vmax.f32 %v2350, 0.0
  %v3890 = vmax.f32 %v3026, 0.0
  %v3891 = vmax.f32 %v3702, 0.0
  %v3892 = vmax.f32 %v1676, 0.0
  %v3893 = vmax.f32 %v2352, 0.0
  %v3894 = vmax.f32 %v3028, 0.0
  %v3895 = vmax.f32 %v3704, 0.0
  %v3896 = vmax.f32 %v1679, 0.0
  %v3897 = vmax.f32 %v2355, 0.0
  %v3898 = vmax.f32 %v3031, 0.0
  %v3899 = vmax.f32 %v3707, 0.0
  %v3900 = vmax.f32 %v1681, 0.0
  %v3901 = vmax.f32 %v2357, 0.0
  %v3902 = vmax.f32 %v3033, 0.0
  %v3903 = vmax.f32 %v3709, 0.0
  %v3904 = vmax.f32 %v1684, 0.0
  %v3905 = vmax.f32 %v2360, 0.0
  %v3906 = vmax.f32 %v3036, 0.0
  %v3907 = vmax.f32 %v3712, 0.0
  %v3908 = vmax.f32 %v1686, 0.0
  %v3909 = vmax.f32 %v2362, 0.0
  %v3910 = vmax.f32 %v3038, 0.0
  %v3911 = vmax.f32 %v3714, 0.0
  %v3912 = vmax.f32 %v1689, 0.0
  %v3913 = vmax.f32 %v2365, 0.0
  %v3914 = vmax.f32 %v3041, 0.0
  %v3915 = vmax.f32 %v3717, 0.0
  %v3916 = vmax.f32 %v1691, 0.0
  %v3917 = vmax.f32 %v2367, 0.0
  %v3918 = vmax.f32 %v3043, 0.0
  %v3919 = vmax.f32 %v3719, 0.0
  %v3920 = vmax.f32 %v1694, 0.0
  %v3921 = vmax.f32 %v2370, 0.0
  %v3922 = vmax.f32 %v3046, 0.0
  %v3923 = vmax.f32 %v3722, 0.0
  %v3924 = vmax.f32 %v1696, 0.0
  %v3925 = vmax.f32 %v2372, 0.0
  %v3926 = vmax.f32 %v3048, 0.0
  %v3927 = vmax.f32 %v3724, 0.0
  %v3928 = vmax.f32 %v1699, 0.0
  %v3929 = vmax.f32 %v2375, 0.0
  %v3930 = vmax.f32 %v3051, 0.0
  %v3931 = vmax.f32 %v3727, 0.0
  %v3932 = vmax.f32 %v1701, 0.0
  %v3933 = vmax.f32 %v2377, 0.0
  %v3934 = vmax.f32 %v3053, 0.0
  %v3935 = vmax.f32 %v3729, 0.0
  %v3936 = vmax.f32 %v1704, 0.0
  %v3937 = vmax.f32 %v2380, 0.0
  %v3938 = vmax.f32 %v3056, 0.0
  %v3939 = vmax.f32 %v3732, 0.0
  %v3940 = vmax.f32 %v1706, 0.0
  %v3941 = vmax.f32 %v2382, 0.0
  %v3942 = vmax.f32 %v3058, 0.0
  %v3943 = vmax.f32 %v3734, 0.0
  %v3944 = vmax.f32 %v1709, 0.0
  %v3945 = vmax.f32 %v2385, 0.0
  %v3946 = vmax.f32 %v3061, 0.0
  %v3947 = vmax.f32 %v3737, 0.0
  %v3948 = vmax.f32 %v1711, 0.0
  %v3949 = vmax.f32 %v2387, 0.0
  %v3950 = vmax.f32 %v3063, 0.0
  %v3951 = vmax.f32 %v3739, 0.0
  %v3952 = vmax.f32 %v1714, 0.0
  %v3953 = vmax.f32 %v2390, 0.0
  %v3954 = vmax.f32 %v3066, 0.0
  %v3955 = vmax.f32 %v3742, 0.0
  %v3956 = vmax.f32 %v1716, 0.0
  %v3957 = vmax.f32 %v2392, 0.0
  %v3958 = vmax.f32 %v3068, 0.0
  %v3959 = vmax.f32 %v3744, 0.0
  %v3960 = vmax.f32 %v1719, 0.0
  %v3961 = vmax.f32 %v2395, 0.0
  %v3962 = vmax.f32 %v3071, 0.0
  %v3963 = vmax.f32 %v3747, 0.0
  %v3964 = vmax.f32 %v1721, 0.0
  %v3965 = vmax.f32 %v2397, 0.0
  %v3966 = vmax.f32 %v3073, 0.0
  %v3967 = vmax.f32 %v3749, 0.0
  %v3968 = vmax.f32 %v1724, 0.0
  %v3969 = vmax.f32 %v2400, 0.0
  %v3970 = vmax.f32 %v3076, 0.0
  %v3971 = vmax.f32 %v3752, 0.0
  %v3972 = vmax.f32 %v1726, 0.0
  %v3973 = vmax.f32 %v2402, 0.0
  %v3974 = vmax.f32 %v3078, 0.0
  %v3975 = vmax.f32 %v3754, 0.0
  %v3976 = vmax.f32 %v1729, 0.0
  %v3977 = vmax.f32 %v2405, 0.0
  %v3978 = vmax.f32 %v3081, 0.0
  %v3979 = vmax.f32 %v3757, 0.0
  %v3980 = vmax.f32 %v1731, 0.0
  %v3981 = vmax.f32 %v2407, 0.0
  %v3982 = vmax.f32 %v3083, 0.0
  %v3983 = vmax.f32 %v3759, 0.0
  %v3984 = vmax.f32 %v1734, 0.0
  %v3985 = vmax.f32 %v2410, 0.0
  %v3986 = vmax.f32 %v3086, 0.0
  %v3987 = vmax.f32 %v3762, 0.0
  %v3988 = vmax.f32 %v1736, 0.0
  %v3989 = vmax.f32 %v2412, 0.0
  %v3990 = vmax.f32 %v3088, 0.0
  %v3991 = vmax.f32 %v3764, 0.0
  %v3992 = vmax.f32 %v1739, 0.0
  %v3993 = vmax.f32 %v2415, 0.0
  %v3994 = vmax.f32 %v3091, 0.0
  %v3995 = vmax.f32 %v3767, 0.0
  %v3996 = vmax.f32 %v1741, 0.0
  %v3997 = vmax.f32 %v2417, 0.0
  %v3998 = vmax.f32 %v3093, 0.0
  %v3999 = vmax.f32 %v3769, 0.0
  %v4000 = vmax.f32 %v1744, 0.0
  %v4001 = vmax.f32 %v2420, 0.0
  %v4002 = vmax.f32 %v3096, 0.0
  %v4003 = vmax.f32 %v3772, 0.0
  %v4004 = vmax.f32 %v1746, 0.0
  %v4005 = vmax.f32 %v2422, 0.0
  %v4006 = vmax.f32 %v3098, 0.0
  %v4007 = vmax.f32 %v3774, 0.0
  %v4008 = vmax.f32 %v1749, 0.0
  %v4009 = vmax.f32 %v2425, 0.0
  %v4010 = vmax.f32 %v3101, 0.0
  %v4011 = vmax.f32 %v3777, 0.0
  %v4012 = vmax.f32 %v1751, 0.0
  %v4013 = vmax.f32 %v2427, 0.0
  %v4014 = vmax.f32 %v3103, 0.0
  %v4015 = vmax.f32 %v3779, 0.0
  %v4016 = vmax.f32 %v1754, 0.0
  %v4017 = vmax.f32 %v2430, 0.0
  %v4018 = vmax.f32 %v3106, 0.0
  %v4019 = vmax.f32 %v3782, 0.0
  %v4020 = vmax.f32 %v1756, 0.0
  %v4021 = vmax.f32 %v2432, 0.0
  %v4022 = vmax.f32 %v3108, 0.0
  %v4023 = vmax.f32 %v3784, 0.0
  %v4024 = vmax.f32 %v1759, 0.0
  %v4025 = vmax.f32 %v2435, 0.0
  %v4026 = vmax.f32 %v3111, 0.0
  %v4027 = vmax.f32 %v3787, 0.0
  %v4028 = vmax.f32 %v1761, 0.0
  %v4029 = vmax.f32 %v2437, 0.0
  %v4030 = vmax.f32 %v3113, 0.0
  %v4031 = vmax.f32 %v3789, 0.0
  %v4032 = vmax.f32 %v1764, 0.0
  %v4033 = vmax.f32 %v2440, 0.0
  %v4034 = vmax.f32 %v3116, 0.0
  %v4035 = vmax.f32 %v3792, 0.0
  %v4036 = vmax.f32 %v1766, 0.0
  %v4037 = vmax.f32 %v2442, 0.0
  %v4038 = vmax.f32 %v3118, 0.0
  %v4039 = vmax.f32 %v3794, 0.0
  %v4040 = vmax.f32 %v1769, 0.0
  %v4041 = vmax.f32 %v2445, 0.0
  %v4042 = vmax.f32 %v3121, 0.0
  %v4043 = vmax.f32 %v3797, 0.0
  %v4044 = vmax.f32 %v1771, 0.0
  %v4045 = vmax.f32 %v2447, 0.0
  %v4046 = vmax.f32 %v3123, 0.0
  %v4047 = vmax.f32 %v3799, 0.0
  %v4048 = vmax.f32 %v1774, 0.0
  %v4049 = vmax.f32 %v2450, 0.0
  %v4050 = vmax.f32 %v3126, 0.0
  %v4051 = vmax.f32 %v3802, 0.0
  %v4052 = vmax.f32 %v1776, 0.0
  %v4053 = vmax.f32 %v2452, 0.0
  %v4054 = vmax.f32 %v3128, 0.0
  %v4055 = vmax.f32 %v3804, 0.0
  %v4056 = vmax.f32 %v1779, 0.0
  %v4057 = vmax.f32 %v2455, 0.0
  %v4058 = vmax.f32 %v3131, 0.0
  %v4059 = vmax.f32 %v3807, 0.0
  %v4060 = vmax.f32 %v1781, 0.0
  %v4061 = vmax.f32 %v2457, 0.0
  %v4062 = vmax.f32 %v3133, 0.0
  %v4063 = vmax.f32 %v3809, 0.0
  %v4064 = vmax.f32 %v1784, 0.0
  %v4065 = vmax.f32 %v2460, 0.0
  %v4066 = vmax.f32 %v3136, 0.0
  %v4067 = vmax.f32 %v3812, 0.0
  %v4068 = vmax.f32 %v1786, 0.0
  %v4069 = vmax.f32 %v2462, 0.0
  %v4070 = vmax.f32 %v3138, 0.0
  %v4071 = vmax.f32 %v3814, 0.0
  %v4072 = vpack.c.bf16 %v3820, %v3816
  %v4073 = vpack.c.bf16 %v3821, %v3817
  %v4074 = vpack.c.bf16 %v3822, %v3818
  %v4075 = vpack.c.bf16 %v3823, %v3819
  %v4076 = vpack.c.bf16 %v3828, %v3824
  %v4077 = vpack.c.bf16 %v3829, %v3825
  %v4078 = vpack.c.bf16 %v3830, %v3826
  %v4079 = vpack.c.bf16 %v3831, %v3827
  %v4080 = vpack.c.bf16 %v3836, %v3832
  %v4081 = vpack.c.bf16 %v3837, %v3833
  %v4082 = vpack.c.bf16 %v3838, %v3834
  %v4083 = vpack.c.bf16 %v3839, %v3835
  %v4084 = vpack.c.bf16 %v3844, %v3840
  %v4085 = vpack.c.bf16 %v3845, %v3841
  %v4086 = vpack.c.bf16 %v3846, %v3842
  %v4087 = vpack.c.bf16 %v3847, %v3843
  %v4088 = vpack.c.bf16 %v3852, %v3848
  %v4089 = vpack.c.bf16 %v3853, %v3849
  %v4090 = vpack.c.bf16 %v3854, %v3850
  %v4091 = vpack.c.bf16 %v3855, %v3851
  %v4092 = vpack.c.bf16 %v3860, %v3856
  %v4093 = vpack.c.bf16 %v3861, %v3857
  %v4094 = vpack.c.bf16 %v3862, %v3858
  %v4095 = vpack.c.bf16 %v3863, %v3859
  %v4096 = vpack.c.bf16 %v3868, %v3864
  %v4097 = vpack.c.bf16 %v3869, %v3865
  %v4098 = vpack.c.bf16 %v3870, %v3866
  %v4099 = vpack.c.bf16 %v3871, %v3867
  %v4100 = vpack.c.bf16 %v3876, %v3872
  %v4101 = vpack.c.bf16 %v3877, %v3873
  %v4102 = vpack.c.bf16 %v3878, %v3874
  %v4103 = vpack.c.bf16 %v3879, %v3875
  %v4104 = vpack.c.bf16 %v3884, %v3880
  %v4105 = vpack.c.bf16 %v3885, %v3881
  %v4106 = vpack.c.bf16 %v3886, %v3882
  %v4107 = vpack.c.bf16 %v3887, %v3883
  %v4108 = vpack.c.bf16 %v3892, %v3888
  %v4109 = vpack.c.bf16 %v3893, %v3889
  %v4110 = vpack.c.bf16 %v3894, %v3890
  %v4111 = vpack.c.bf16 %v3895, %v3891
  %v4112 = vpack.c.bf16 %v3900, %v3896
  %v4113 = vpack.c.bf16 %v3901, %v3897
  %v4114 = vpack.c.bf16 %v3902, %v3898
  %v4115 = vpack.c.bf16 %v3903, %v3899
  %v4116 = vpack.c.bf16 %v3908, %v3904
  %v4117 = vpack.c.bf16 %v3909, %v3905
  %v4118 = vpack.c.bf16 %v3910, %v3906
  %v4119 = vpack.c.bf16 %v3911, %v3907
  %v4120 = vpack.c.bf16 %v3916, %v3912
  %v4121 = vpack.c.bf16 %v3917, %v3913
  %v4122 = vpack.c.bf16 %v3918, %v3914
  %v4123 = vpack.c.bf16 %v3919, %v3915
  %v4124 = vpack.c.bf16 %v3924, %v3920
  %v4125 = vpack.c.bf16 %v3925, %v3921
  %v4126 = vpack.c.bf16 %v3926, %v3922
  %v4127 = vpack.c.bf16 %v3927, %v3923
  %v4128 = vpack.c.bf16 %v3932, %v3928
  %v4129 = vpack.c.bf16 %v3933, %v3929
  %v4130 = vpack.c.bf16 %v3934, %v3930
  %v4131 = vpack.c.bf16 %v3935, %v3931
  %v4132 = vpack.c.bf16 %v3940, %v3936
  %v4133 = vpack.c.bf16 %v3941, %v3937
  %v4134 = vpack.c.bf16 %v3942, %v3938
  %v4135 = vpack.c.bf16 %v3943, %v3939
  %v4136 = vpack.c.bf16 %v3948, %v3944
  %v4137 = vpack.c.bf16 %v3949, %v3945
  %v4138 = vpack.c.bf16 %v3950, %v3946
  %v4139 = vpack.c.bf16 %v3951, %v3947
  %v4140 = vpack.c.bf16 %v3956, %v3952
  %v4141 = vpack.c.bf16 %v3957, %v3953
  %v4142 = vpack.c.bf16 %v3958, %v3954
  %v4143 = vpack.c.bf16 %v3959, %v3955
  %v4144 = vpack.c.bf16 %v3964, %v3960
  %v4145 = vpack.c.bf16 %v3965, %v3961
  %v4146 = vpack.c.bf16 %v3966, %v3962
  %v4147 = vpack.c.bf16 %v3967, %v3963
  %v4148 = vpack.c.bf16 %v3972, %v3968
  %v4149 = vpack.c.bf16 %v3973, %v3969
  %v4150 = vpack.c.bf16 %v3974, %v3970
  %v4151 = vpack.c.bf16 %v3975, %v3971
  %v4152 = vpack.c.bf16 %v3980, %v3976
  %v4153 = vpack.c.bf16 %v3981, %v3977
  %v4154 = vpack.c.bf16 %v3982, %v3978
  %v4155 = vpack.c.bf16 %v3983, %v3979
  %v4156 = vpack.c.bf16 %v3988, %v3984
  %v4157 = vpack.c.bf16 %v3989, %v3985
  %v4158 = vpack.c.bf16 %v3990, %v3986
  %v4159 = vpack.c.bf16 %v3991, %v3987
  %v4160 = vpack.c.bf16 %v3996, %v3992
  %v4161 = vpack.c.bf16 %v3997, %v3993
  %v4162 = vpack.c.bf16 %v3998, %v3994
  %v4163 = vpack.c.bf16 %v3999, %v3995
  %v4164 = vpack.c.bf16 %v4004, %v4000
  %v4165 = vpack.c.bf16 %v4005, %v4001
  %v4166 = vpack.c.bf16 %v4006, %v4002
  %v4167 = vpack.c.bf16 %v4007, %v4003
  %v4168 = vpack.c.bf16 %v4012, %v4008
  %v4169 = vpack.c.bf16 %v4013, %v4009
  %v4170 = vpack.c.bf16 %v4014, %v4010
  %v4171 = vpack.c.bf16 %v4015, %v4011
  %v4172 = vpack.c.bf16 %v4020, %v4016
  %v4173 = vpack.c.bf16 %v4021, %v4017
  %v4174 = vpack.c.bf16 %v4022, %v4018
  %v4175 = vpack.c.bf16 %v4023, %v4019
  %v4176 = vpack.c.bf16 %v4028, %v4024
  %v4177 = vpack.c.bf16 %v4029, %v4025
  %v4178 = vpack.c.bf16 %v4030, %v4026
  %v4179 = vpack.c.bf16 %v4031, %v4027
  %v4180 = vpack.c.bf16 %v4036, %v4032
  %v4181 = vpack.c.bf16 %v4037, %v4033
  %v4182 = vpack.c.bf16 %v4038, %v4034
  %v4183 = vpack.c.bf16 %v4039, %v4035
  %v4184 = vpack.c.bf16 %v4044, %v4040
  %v4185 = vpack.c.bf16 %v4045, %v4041
  %v4186 = vpack.c.bf16 %v4046, %v4042
  %v4187 = vpack.c.bf16 %v4047, %v4043
  %v4188 = vpack.c.bf16 %v4052, %v4048
  %v4189 = vpack.c.bf16 %v4053, %v4049
  %v4190 = vpack.c.bf16 %v4054, %v4050
  %v4191 = vpack.c.bf16 %v4055, %v4051
  %v4192 = vpack.c.bf16 %v4060, %v4056
  %v4193 = vpack.c.bf16 %v4061, %v4057
  %v4194 = vpack.c.bf16 %v4062, %v4058
  %v4195 = vpack.c.bf16 %v4063, %v4059
  %v4196 = vpack.c.bf16 %v4068, %v4064
  %v4197 = vpack.c.bf16 %v4069, %v4065
  %v4198 = vpack.c.bf16 %v4070, %v4066
  %v4199 = vpack.c.bf16 %v4071, %v4067
  %v4200 = vld [vmem:[%s3] sm:$0xf]
  %v4201 = vld [vmem:[%s3 + $0x4] sm:$0xf]
  %v4202 = vld [vmem:[%s3 + $0x8] sm:$0xf]
  %v4203 = vld [vmem:[%s3 + $0xc] sm:$0xf]
  %v4204 = vld [vmem:[%s3 + $0x10] sm:$0xf]
  %v4205 = vld [vmem:[%s3 + $0x14] sm:$0xf]
  %v4206 = vld [vmem:[%s3 + $0x18] sm:$0xf]
  %v4207 = vld [vmem:[%s3 + $0x1c] sm:$0xf]
  %v4208 = vld [vmem:[%s3 + $0x20] sm:$0xf]
  %v4209 = vld [vmem:[%s3 + $0x24] sm:$0xf]
  %v4210 = vld [vmem:[%s3 + $0x28] sm:$0xf]
  %v4211 = vld [vmem:[%s3 + $0x2c] sm:$0xf]
  %v4212 = vld [vmem:[%s3 + $0x30] sm:$0xf]
  %v4213 = vld [vmem:[%s3 + $0x34] sm:$0xf]
  %v4214 = vld [vmem:[%s3 + $0x38] sm:$0xf]
  %v4215 = vld [vmem:[%s3 + $0x3c] sm:$0xf]
  %v4216 = vld [vmem:[%s3 + $0x40] sm:$0xf]
  %v4217 = vld [vmem:[%s3 + $0x44] sm:$0xf]
  %v4218 = vld [vmem:[%s3 + $0x48] sm:$0xf]
  %v4219 = vld [vmem:[%s3 + $0x4c] sm:$0xf]
  %v4220 = vld [vmem:[%s3 + $0x50] sm:$0xf]
  %v4221 = vld [vmem:[%s3 + $0x54] sm:$0xf]
  %v4222 = vld [vmem:[%s3 + $0x58] sm:$0xf]
  %v4223 = vld [vmem:[%s3 + $0x5c] sm:$0xf]
  %v4224 = vld [vmem:[%s3 + $0x60] sm:$0xf]
  %v4225 = vld [vmem:[%s3 + $0x64] sm:$0xf]
  %v4226 = vld [vmem:[%s3 + $0x68] sm:$0xf]
  %v4227 = vld [vmem:[%s3 + $0x6c] sm:$0xf]
  %v4228 = vld [vmem:[%s3 + $0x70] sm:$0xf]
  %v4229 = vld [vmem:[%s3 + $0x74] sm:$0xf]
  %v4230 = vld [vmem:[%s3 + $0x78] sm:$0xf]
  %v4231 = vld [vmem:[%s3 + $0x7c] sm:$0xf]
  %v4232 = vld [vmem:[%s3 + $0x80] sm:$0xf]
  %v4233 = vld [vmem:[%s3 + $0x84] sm:$0xf]
  %v4234 = vld [vmem:[%s3 + $0x88] sm:$0xf]
  %v4235 = vld [vmem:[%s3 + $0x8c] sm:$0xf]
  %v4236 = vld [vmem:[%s3 + $0x90] sm:$0xf]
  %v4237 = vld [vmem:[%s3 + $0x94] sm:$0xf]
  %v4238 = vld [vmem:[%s3 + $0x98] sm:$0xf]
  %v4239 = vld [vmem:[%s3 + $0x9c] sm:$0xf]
  %v4240 = vld [vmem:[%s3 + $0xa0] sm:$0xf]
  %v4241 = vld [vmem:[%s3 + $0xa4] sm:$0xf]
  %v4242 = vld [vmem:[%s3 + $0xa8] sm:$0xf]
  %v4243 = vld [vmem:[%s3 + $0xac] sm:$0xf]
  %v4244 = vld [vmem:[%s3 + $0xb0] sm:$0xf]
  %v4245 = vld [vmem:[%s3 + $0xb4] sm:$0xf]
  %v4246 = vld [vmem:[%s3 + $0xb8] sm:$0xf]
  %v4247 = vld [vmem:[%s3 + $0xbc] sm:$0xf]
  %v4248 = vld [vmem:[%s3 + $0xc0] sm:$0xf]
  %v4249 = vld [vmem:[%s3 + $0xc4] sm:$0xf]
  %v4250 = vld [vmem:[%s3 + $0xc8] sm:$0xf]
  %v4251 = vld [vmem:[%s3 + $0xcc] sm:$0xf]
  %v4252 = vld [vmem:[%s3 + $0xd0] sm:$0xf]
  %v4253 = vld [vmem:[%s3 + $0xd4] sm:$0xf]
  %v4254 = vld [vmem:[%s3 + $0xd8] sm:$0xf]
  %v4255 = vld [vmem:[%s3 + $0xdc] sm:$0xf]
  %v4256 = vld [vmem:[%s3 + $0xe0] sm:$0xf]
  %v4257 = vld [vmem:[%s3 + $0xe4] sm:$0xf]
  %v4258 = vld [vmem:[%s3 + $0xe8] sm:$0xf]
  %v4259 = vld [vmem:[%s3 + $0xec] sm:$0xf]
  %v4260 = vld [vmem:[%s3 + $0xf0] sm:$0xf]
  %v4261 = vld [vmem:[%s3 + $0xf4] sm:$0xf]
  %v4262 = vld [vmem:[%s3 + $0xf8] sm:$0xf]
  %v4263 = vld [vmem:[%s3 + $0xfc] sm:$0xf]
  %v4264 = vld [vmem:[%s4] sm:$0x1]
  %v4266 = vperm.slane %v4264, 0
  %v4332 = vunpack.c.l.b16 %v4200
  %v4333 = vunpack.c.l.b16 %v4201
  %v4334 = vunpack.c.l.b16 %v4202
  %v4335 = vunpack.c.l.b16 %v4203
  %v4336 = vunpack.c.l.b16 %v4204
  %v4337 = vunpack.c.l.b16 %v4205
  %v4338 = vunpack.c.l.b16 %v4206
  %v4339 = vunpack.c.l.b16 %v4207
  %v4340 = vunpack.c.l.b16 %v4208
  %v4341 = vunpack.c.l.b16 %v4209
  %v4342 = vunpack.c.l.b16 %v4210
  %v4343 = vunpack.c.l.b16 %v4211
  %v4344 = vunpack.c.l.b16 %v4212
  %v4345 = vunpack.c.l.b16 %v4213
  %v4346 = vunpack.c.l.b16 %v4214
  %v4347 = vunpack.c.l.b16 %v4215
  %v4348 = vunpack.c.l.b16 %v4216
  %v4349 = vunpack.c.l.b16 %v4217
  %v4350 = vunpack.c.l.b16 %v4218
  %v4351 = vunpack.c.l.b16 %v4219
  %v4352 = vunpack.c.l.b16 %v4220
  %v4353 = vunpack.c.l.b16 %v4221
  %v4354 = vunpack.c.l.b16 %v4222
  %v4355 = vunpack.c.l.b16 %v4223
  %v4356 = vunpack.c.l.b16 %v4224
  %v4357 = vunpack.c.l.b16 %v4225
  %v4358 = vunpack.c.l.b16 %v4226
  %v4359 = vunpack.c.l.b16 %v4227
  %v4360 = vunpack.c.l.b16 %v4228
  %v4361 = vunpack.c.l.b16 %v4229
  %v4362 = vunpack.c.l.b16 %v4230
  %v4363 = vunpack.c.l.b16 %v4231
  %v4364 = vunpack.c.l.b16 %v4232
  %v4365 = vunpack.c.l.b16 %v4233
  %v4366 = vunpack.c.l.b16 %v4234
  %v4367 = vunpack.c.l.b16 %v4235
  %v4368 = vunpack.c.l.b16 %v4236
  %v4369 = vunpack.c.l.b16 %v4237
  %v4370 = vunpack.c.l.b16 %v4238
  %v4371 = vunpack.c.l.b16 %v4239
  %v4372 = vunpack.c.l.b16 %v4240
  %v4373 = vunpack.c.l.b16 %v4241
  %v4374 = vunpack.c.l.b16 %v4242
  %v4375 = vunpack.c.l.b16 %v4243
  %v4376 = vunpack.c.l.b16 %v4244
  %v4377 = vunpack.c.l.b16 %v4245
  %v4378 = vunpack.c.l.b16 %v4246
  %v4379 = vunpack.c.l.b16 %v4247
  %v4380 = vunpack.c.l.b16 %v4248
  %v4381 = vunpack.c.l.b16 %v4249
  %v4382 = vunpack.c.l.b16 %v4250
  %v4383 = vunpack.c.l.b16 %v4251
  %v4384 = vunpack.c.l.b16 %v4252
  %v4385 = vunpack.c.l.b16 %v4253
  %v4386 = vunpack.c.l.b16 %v4254
  %v4387 = vunpack.c.l.b16 %v4255
  %v4388 = vunpack.c.l.b16 %v4256
  %v4389 = vunpack.c.l.b16 %v4257
  %v4390 = vunpack.c.l.b16 %v4258
  %v4391 = vunpack.c.l.b16 %v4259
  %v4392 = vunpack.c.l.b16 %v4260
  %v4393 = vunpack.c.l.b16 %v4261
  %v4394 = vunpack.c.l.b16 %v4262
  %v4395 = vunpack.c.l.b16 %v4263
  %v4396 = vpack.c.b16 %v4333, %v4332
  %v4397 = vpack.c.b16 %v4335, %v4334
  %v4398 = vpack.c.b16 %v4337, %v4336
  %v4399 = vpack.c.b16 %v4339, %v4338
  %v4400 = vpack.c.b16 %v4341, %v4340
  %v4401 = vpack.c.b16 %v4343, %v4342
  %v4402 = vpack.c.b16 %v4345, %v4344
  %v4403 = vpack.c.b16 %v4347, %v4346
  %v4404 = vpack.c.b16 %v4349, %v4348
  %v4405 = vpack.c.b16 %v4351, %v4350
  %v4406 = vpack.c.b16 %v4353, %v4352
  %v4407 = vpack.c.b16 %v4355, %v4354
  %v4408 = vpack.c.b16 %v4357, %v4356
  %v4409 = vpack.c.b16 %v4359, %v4358
  %v4410 = vpack.c.b16 %v4361, %v4360
  %v4411 = vpack.c.b16 %v4363, %v4362
  %v4412 = vpack.c.b16 %v4365, %v4364
  %v4413 = vpack.c.b16 %v4367, %v4366
  %v4414 = vpack.c.b16 %v4369, %v4368
  %v4415 = vpack.c.b16 %v4371, %v4370
  %v4416 = vpack.c.b16 %v4373, %v4372
  %v4417 = vpack.c.b16 %v4375, %v4374
  %v4418 = vpack.c.b16 %v4377, %v4376
  %v4419 = vpack.c.b16 %v4379, %v4378
  %v4420 = vpack.c.b16 %v4381, %v4380
  %v4421 = vpack.c.b16 %v4383, %v4382
  %v4422 = vpack.c.b16 %v4385, %v4384
  %v4423 = vpack.c.b16 %v4387, %v4386
  %v4424 = vpack.c.b16 %v4389, %v4388
  %v4425 = vpack.c.b16 %v4391, %v4390
  %v4426 = vpack.c.b16 %v4393, %v4392
  %v4427 = vpack.c.b16 %v4395, %v4394
  %4460 = vmatpush.bf16.msra.mxu0 %v4403
  %4461 = vmatpush.bf16.msra.mxu0 %v4402
  %4462 = vmatpush.bf16.msra.mxu0 %v4401
  %4463 = vmatpush.bf16.msra.mxu0 %v4400
  %4464 = vmatpush.bf16.msra.mxu0 %v4399
  %4465 = vmatpush.bf16.msra.mxu0 %v4398
  %4466 = vmatpush.bf16.msra.mxu0 %v4397
  %4467 = vmatpush.bf16.msra.mxu0 %v4396
  %4468 = vmatmul.bf16.gmra.mxu0 %v4072
  %v4469 = vpop.f32.mrf.mxu0
  %v4470 = vadd.f32 %v4266, %v4469
  %v4471 = vpop.f32.mrf.mxu0
  %v4472 = vadd.f32 %v4266, %v4471
  %4473 = vmatmul.bf16.gmra.mxu0 %v4076
  %v4474 = vpop.f32.mrf.mxu0
  %v4475 = vadd.f32 %v4266, %v4474
  %v4476 = vpop.f32.mrf.mxu0
  %v4477 = vadd.f32 %v4266, %v4476
  %4478 = vmatmul.bf16.gmra.mxu0 %v4080
  %v4479 = vpop.f32.mrf.mxu0
  %v4480 = vadd.f32 %v4266, %v4479
  %v4481 = vpop.f32.mrf.mxu0
  %v4482 = vadd.f32 %v4266, %v4481
  %4483 = vmatmul.bf16.gmra.mxu0 %v4084
  %v4484 = vpop.f32.mrf.mxu0
  %v4485 = vadd.f32 %v4266, %v4484
  %v4486 = vpop.f32.mrf.mxu0
  %v4487 = vadd.f32 %v4266, %v4486
  %4488 = vmatmul.bf16.gmra.mxu0 %v4088
  %v4489 = vpop.f32.mrf.mxu0
  %v4490 = vadd.f32 %v4266, %v4489
  %v4491 = vpop.f32.mrf.mxu0
  %v4492 = vadd.f32 %v4266, %v4491
  %4493 = vmatmul.bf16.gmra.mxu0 %v4092
  %v4494 = vpop.f32.mrf.mxu0
  %v4495 = vadd.f32 %v4266, %v4494
  %v4496 = vpop.f32.mrf.mxu0
  %v4497 = vadd.f32 %v4266, %v4496
  %4498 = vmatmul.bf16.gmra.mxu0 %v4096
  %v4499 = vpop.f32.mrf.mxu0
  %v4500 = vadd.f32 %v4266, %v4499
  %v4501 = vpop.f32.mrf.mxu0
  %v4502 = vadd.f32 %v4266, %v4501
  %4503 = vmatmul.bf16.gmra.mxu0 %v4100
  %v4504 = vpop.f32.mrf.mxu0
  %v4505 = vadd.f32 %v4266, %v4504
  %v4506 = vpop.f32.mrf.mxu0
  %v4507 = vadd.f32 %v4266, %v4506
  %4508 = vmatmul.bf16.gmra.mxu0 %v4104
  %v4509 = vpop.f32.mrf.mxu0
  %v4510 = vadd.f32 %v4266, %v4509
  %v4511 = vpop.f32.mrf.mxu0
  %v4512 = vadd.f32 %v4266, %v4511
  %4513 = vmatmul.bf16.gmra.mxu0 %v4108
  %v4514 = vpop.f32.mrf.mxu0
  %v4515 = vadd.f32 %v4266, %v4514
  %v4516 = vpop.f32.mrf.mxu0
  %v4517 = vadd.f32 %v4266, %v4516
  %4518 = vmatmul.bf16.gmra.mxu0 %v4112
  %v4519 = vpop.f32.mrf.mxu0
  %v4520 = vadd.f32 %v4266, %v4519
  %v4521 = vpop.f32.mrf.mxu0
  %v4522 = vadd.f32 %v4266, %v4521
  %4523 = vmatmul.bf16.gmra.mxu0 %v4116
  %v4524 = vpop.f32.mrf.mxu0
  %v4525 = vadd.f32 %v4266, %v4524
  %v4526 = vpop.f32.mrf.mxu0
  %v4527 = vadd.f32 %v4266, %v4526
  %4528 = vmatmul.bf16.gmra.mxu0 %v4120
  %v4529 = vpop.f32.mrf.mxu0
  %v4530 = vadd.f32 %v4266, %v4529
  %v4531 = vpop.f32.mrf.mxu0
  %v4532 = vadd.f32 %v4266, %v4531
  %4533 = vmatmul.bf16.gmra.mxu0 %v4124
  %v4534 = vpop.f32.mrf.mxu0
  %v4535 = vadd.f32 %v4266, %v4534
  %v4536 = vpop.f32.mrf.mxu0
  %v4537 = vadd.f32 %v4266, %v4536
  %4538 = vmatmul.bf16.gmra.mxu0 %v4128
  %v4539 = vpop.f32.mrf.mxu0
  %v4540 = vadd.f32 %v4266, %v4539
  %v4541 = vpop.f32.mrf.mxu0
  %v4542 = vadd.f32 %v4266, %v4541
  %4543 = vmatmul.bf16.gmra.mxu0 %v4132
  %v4544 = vpop.f32.mrf.mxu0
  %v4545 = vadd.f32 %v4266, %v4544
  %v4546 = vpop.f32.mrf.mxu0
  %v4547 = vadd.f32 %v4266, %v4546
  %4548 = vmatmul.bf16.gmra.mxu0 %v4136
  %v4549 = vpop.f32.mrf.mxu0
  %v4550 = vadd.f32 %v4266, %v4549
  %v4551 = vpop.f32.mrf.mxu0
  %v4552 = vadd.f32 %v4266, %v4551
  %4553 = vmatmul.bf16.gmra.mxu0 %v4140
  %v4554 = vpop.f32.mrf.mxu0
  %v4555 = vadd.f32 %v4266, %v4554
  %v4556 = vpop.f32.mrf.mxu0
  %v4557 = vadd.f32 %v4266, %v4556
  %4558 = vmatmul.bf16.gmra.mxu0 %v4144
  %v4559 = vpop.f32.mrf.mxu0
  %v4560 = vadd.f32 %v4266, %v4559
  %v4561 = vpop.f32.mrf.mxu0
  %v4562 = vadd.f32 %v4266, %v4561
  %4563 = vmatmul.bf16.gmra.mxu0 %v4148
  %v4564 = vpop.f32.mrf.mxu0
  %v4565 = vadd.f32 %v4266, %v4564
  %v4566 = vpop.f32.mrf.mxu0
  %v4567 = vadd.f32 %v4266, %v4566
  %4568 = vmatmul.bf16.gmra.mxu0 %v4152
  %v4569 = vpop.f32.mrf.mxu0
  %v4570 = vadd.f32 %v4266, %v4569
  %v4571 = vpop.f32.mrf.mxu0
  %v4572 = vadd.f32 %v4266, %v4571
  %4573 = vmatmul.bf16.gmra.mxu0 %v4156
  %v4574 = vpop.f32.mrf.mxu0
  %v4575 = vadd.f32 %v4266, %v4574
  %v4576 = vpop.f32.mrf.mxu0
  %v4577 = vadd.f32 %v4266, %v4576
  %4578 = vmatmul.bf16.gmra.mxu0 %v4160
  %v4579 = vpop.f32.mrf.mxu0
  %v4580 = vadd.f32 %v4266, %v4579
  %v4581 = vpop.f32.mrf.mxu0
  %v4582 = vadd.f32 %v4266, %v4581
  %4583 = vmatmul.bf16.gmra.mxu0 %v4164
  %v4584 = vpop.f32.mrf.mxu0
  %v4585 = vadd.f32 %v4266, %v4584
  %v4586 = vpop.f32.mrf.mxu0
  %v4587 = vadd.f32 %v4266, %v4586
  %4588 = vmatmul.bf16.gmra.mxu0 %v4168
  %v4589 = vpop.f32.mrf.mxu0
  %v4590 = vadd.f32 %v4266, %v4589
  %v4591 = vpop.f32.mrf.mxu0
  %v4592 = vadd.f32 %v4266, %v4591
  %4593 = vmatmul.bf16.gmra.mxu0 %v4172
  %v4594 = vpop.f32.mrf.mxu0
  %v4595 = vadd.f32 %v4266, %v4594
  %v4596 = vpop.f32.mrf.mxu0
  %v4597 = vadd.f32 %v4266, %v4596
  %4598 = vmatmul.bf16.gmra.mxu0 %v4176
  %v4599 = vpop.f32.mrf.mxu0
  %v4600 = vadd.f32 %v4266, %v4599
  %v4601 = vpop.f32.mrf.mxu0
  %v4602 = vadd.f32 %v4266, %v4601
  %4603 = vmatmul.bf16.gmra.mxu0 %v4180
  %v4604 = vpop.f32.mrf.mxu0
  %v4605 = vadd.f32 %v4266, %v4604
  %v4606 = vpop.f32.mrf.mxu0
  %v4607 = vadd.f32 %v4266, %v4606
  %4608 = vmatmul.bf16.gmra.mxu0 %v4184
  %v4609 = vpop.f32.mrf.mxu0
  %v4610 = vadd.f32 %v4266, %v4609
  %v4611 = vpop.f32.mrf.mxu0
  %v4612 = vadd.f32 %v4266, %v4611
  %4613 = vmatmul.bf16.gmra.mxu0 %v4188
  %v4614 = vpop.f32.mrf.mxu0
  %v4615 = vadd.f32 %v4266, %v4614
  %v4616 = vpop.f32.mrf.mxu0
  %v4617 = vadd.f32 %v4266, %v4616
  %4618 = vmatmul.bf16.gmra.mxu0 %v4192
  %v4619 = vpop.f32.mrf.mxu0
  %v4620 = vadd.f32 %v4266, %v4619
  %v4621 = vpop.f32.mrf.mxu0
  %v4622 = vadd.f32 %v4266, %v4621
  %4623 = vmatmul.bf16.gmra.mxu0 %v4196
  %v4624 = vpop.f32.mrf.mxu0
  %v4625 = vadd.f32 %v4266, %v4624
  %v4626 = vpop.f32.mrf.mxu0
  %v4627 = vadd.f32 %v4266, %v4626
  %4628 = vdwg.mxu0
  %4629 = vmatpush.bf16.msra.mxu0 %v4411
  %4630 = vmatpush.bf16.msra.mxu0 %v4410
  %4631 = vmatpush.bf16.msra.mxu0 %v4409
  %4632 = vmatpush.bf16.msra.mxu0 %v4408
  %4633 = vmatpush.bf16.msra.mxu0 %v4407
  %4634 = vmatpush.bf16.msra.mxu0 %v4406
  %4635 = vmatpush.bf16.msra.mxu0 %v4405
  %4636 = vmatpush.bf16.msra.mxu0 %v4404
  %4637 = vmatmul.bf16.gmra.mxu0 %v4073
  %v4638 = vpop.f32.mrf.mxu0
  %v4639 = vadd.f32 %v4470, %v4638
  %v4640 = vpop.f32.mrf.mxu0
  %v4641 = vadd.f32 %v4472, %v4640
  %4642 = vmatmul.bf16.gmra.mxu0 %v4077
  %v4643 = vpop.f32.mrf.mxu0
  %v4644 = vadd.f32 %v4475, %v4643
  %v4645 = vpop.f32.mrf.mxu0
  %v4646 = vadd.f32 %v4477, %v4645
  %4647 = vmatmul.bf16.gmra.mxu0 %v4081
  %v4648 = vpop.f32.mrf.mxu0
  %v4649 = vadd.f32 %v4480, %v4648
  %v4650 = vpop.f32.mrf.mxu0
  %v4651 = vadd.f32 %v4482, %v4650
  %4652 = vmatmul.bf16.gmra.mxu0 %v4085
  %v4653 = vpop.f32.mrf.mxu0
  %v4654 = vadd.f32 %v4485, %v4653
  %v4655 = vpop.f32.mrf.mxu0
  %v4656 = vadd.f32 %v4487, %v4655
  %4657 = vmatmul.bf16.gmra.mxu0 %v4089
  %v4658 = vpop.f32.mrf.mxu0
  %v4659 = vadd.f32 %v4490, %v4658
  %v4660 = vpop.f32.mrf.mxu0
  %v4661 = vadd.f32 %v4492, %v4660
  %4662 = vmatmul.bf16.gmra.mxu0 %v4093
  %v4663 = vpop.f32.mrf.mxu0
  %v4664 = vadd.f32 %v4495, %v4663
  %v4665 = vpop.f32.mrf.mxu0
  %v4666 = vadd.f32 %v4497, %v4665
  %4667 = vmatmul.bf16.gmra.mxu0 %v4097
  %v4668 = vpop.f32.mrf.mxu0
  %v4669 = vadd.f32 %v4500, %v4668
  %v4670 = vpop.f32.mrf.mxu0
  %v4671 = vadd.f32 %v4502, %v4670
  %4672 = vmatmul.bf16.gmra.mxu0 %v4101
  %v4673 = vpop.f32.mrf.mxu0
  %v4674 = vadd.f32 %v4505, %v4673
  %v4675 = vpop.f32.mrf.mxu0
  %v4676 = vadd.f32 %v4507, %v4675
  %4677 = vmatmul.bf16.gmra.mxu0 %v4105
  %v4678 = vpop.f32.mrf.mxu0
  %v4679 = vadd.f32 %v4510, %v4678
  %v4680 = vpop.f32.mrf.mxu0
  %v4681 = vadd.f32 %v4512, %v4680
  %4682 = vmatmul.bf16.gmra.mxu0 %v4109
  %v4683 = vpop.f32.mrf.mxu0
  %v4684 = vadd.f32 %v4515, %v4683
  %v4685 = vpop.f32.mrf.mxu0
  %v4686 = vadd.f32 %v4517, %v4685
  %4687 = vmatmul.bf16.gmra.mxu0 %v4113
  %v4688 = vpop.f32.mrf.mxu0
  %v4689 = vadd.f32 %v4520, %v4688
  %v4690 = vpop.f32.mrf.mxu0
  %v4691 = vadd.f32 %v4522, %v4690
  %4692 = vmatmul.bf16.gmra.mxu0 %v4117
  %v4693 = vpop.f32.mrf.mxu0
  %v4694 = vadd.f32 %v4525, %v4693
  %v4695 = vpop.f32.mrf.mxu0
  %v4696 = vadd.f32 %v4527, %v4695
  %4697 = vmatmul.bf16.gmra.mxu0 %v4121
  %v4698 = vpop.f32.mrf.mxu0
  %v4699 = vadd.f32 %v4530, %v4698
  %v4700 = vpop.f32.mrf.mxu0
  %v4701 = vadd.f32 %v4532, %v4700
  %4702 = vmatmul.bf16.gmra.mxu0 %v4125
  %v4703 = vpop.f32.mrf.mxu0
  %v4704 = vadd.f32 %v4535, %v4703
  %v4705 = vpop.f32.mrf.mxu0
  %v4706 = vadd.f32 %v4537, %v4705
  %4707 = vmatmul.bf16.gmra.mxu0 %v4129
  %v4708 = vpop.f32.mrf.mxu0
  %v4709 = vadd.f32 %v4540, %v4708
  %v4710 = vpop.f32.mrf.mxu0
  %v4711 = vadd.f32 %v4542, %v4710
  %4712 = vmatmul.bf16.gmra.mxu0 %v4133
  %v4713 = vpop.f32.mrf.mxu0
  %v4714 = vadd.f32 %v4545, %v4713
  %v4715 = vpop.f32.mrf.mxu0
  %v4716 = vadd.f32 %v4547, %v4715
  %4717 = vmatmul.bf16.gmra.mxu0 %v4137
  %v4718 = vpop.f32.mrf.mxu0
  %v4719 = vadd.f32 %v4550, %v4718
  %v4720 = vpop.f32.mrf.mxu0
  %v4721 = vadd.f32 %v4552, %v4720
  %4722 = vmatmul.bf16.gmra.mxu0 %v4141
  %v4723 = vpop.f32.mrf.mxu0
  %v4724 = vadd.f32 %v4555, %v4723
  %v4725 = vpop.f32.mrf.mxu0
  %v4726 = vadd.f32 %v4557, %v4725
  %4727 = vmatmul.bf16.gmra.mxu0 %v4145
  %v4728 = vpop.f32.mrf.mxu0
  %v4729 = vadd.f32 %v4560, %v4728
  %v4730 = vpop.f32.mrf.mxu0
  %v4731 = vadd.f32 %v4562, %v4730
  %4732 = vmatmul.bf16.gmra.mxu0 %v4149
  %v4733 = vpop.f32.mrf.mxu0
  %v4734 = vadd.f32 %v4565, %v4733
  %v4735 = vpop.f32.mrf.mxu0
  %v4736 = vadd.f32 %v4567, %v4735
  %4737 = vmatmul.bf16.gmra.mxu0 %v4153
  %v4738 = vpop.f32.mrf.mxu0
  %v4739 = vadd.f32 %v4570, %v4738
  %v4740 = vpop.f32.mrf.mxu0
  %v4741 = vadd.f32 %v4572, %v4740
  %4742 = vmatmul.bf16.gmra.mxu0 %v4157
  %v4743 = vpop.f32.mrf.mxu0
  %v4744 = vadd.f32 %v4575, %v4743
  %v4745 = vpop.f32.mrf.mxu0
  %v4746 = vadd.f32 %v4577, %v4745
  %4747 = vmatmul.bf16.gmra.mxu0 %v4161
  %v4748 = vpop.f32.mrf.mxu0
  %v4749 = vadd.f32 %v4580, %v4748
  %v4750 = vpop.f32.mrf.mxu0
  %v4751 = vadd.f32 %v4582, %v4750
  %4752 = vmatmul.bf16.gmra.mxu0 %v4165
  %v4753 = vpop.f32.mrf.mxu0
  %v4754 = vadd.f32 %v4585, %v4753
  %v4755 = vpop.f32.mrf.mxu0
  %v4756 = vadd.f32 %v4587, %v4755
  %4757 = vmatmul.bf16.gmra.mxu0 %v4169
  %v4758 = vpop.f32.mrf.mxu0
  %v4759 = vadd.f32 %v4590, %v4758
  %v4760 = vpop.f32.mrf.mxu0
  %v4761 = vadd.f32 %v4592, %v4760
  %4762 = vmatmul.bf16.gmra.mxu0 %v4173
  %v4763 = vpop.f32.mrf.mxu0
  %v4764 = vadd.f32 %v4595, %v4763
  %v4765 = vpop.f32.mrf.mxu0
  %v4766 = vadd.f32 %v4597, %v4765
  %4767 = vmatmul.bf16.gmra.mxu0 %v4177
  %v4768 = vpop.f32.mrf.mxu0
  %v4769 = vadd.f32 %v4600, %v4768
  %v4770 = vpop.f32.mrf.mxu0
  %v4771 = vadd.f32 %v4602, %v4770
  %4772 = vmatmul.bf16.gmra.mxu0 %v4181
  %v4773 = vpop.f32.mrf.mxu0
  %v4774 = vadd.f32 %v4605, %v4773
  %v4775 = vpop.f32.mrf.mxu0
  %v4776 = vadd.f32 %v4607, %v4775
  %4777 = vmatmul.bf16.gmra.mxu0 %v4185
  %v4778 = vpop.f32.mrf.mxu0
  %v4779 = vadd.f32 %v4610, %v4778
  %v4780 = vpop.f32.mrf.mxu0
  %v4781 = vadd.f32 %v4612, %v4780
  %4782 = vmatmul.bf16.gmra.mxu0 %v4189
  %v4783 = vpop.f32.mrf.mxu0
  %v4784 = vadd.f32 %v4615, %v4783
  %v4785 = vpop.f32.mrf.mxu0
  %v4786 = vadd.f32 %v4617, %v4785
  %4787 = vmatmul.bf16.gmra.mxu0 %v4193
  %v4788 = vpop.f32.mrf.mxu0
  %v4789 = vadd.f32 %v4620, %v4788
  %v4790 = vpop.f32.mrf.mxu0
  %v4791 = vadd.f32 %v4622, %v4790
  %4792 = vmatmul.bf16.gmra.mxu0 %v4197
  %v4793 = vpop.f32.mrf.mxu0
  %v4794 = vadd.f32 %v4625, %v4793
  %v4795 = vpop.f32.mrf.mxu0
  %v4796 = vadd.f32 %v4627, %v4795
  %4797 = vdwg.mxu0
  %4798 = vmatpush.bf16.msra.mxu0 %v4419
  %4799 = vmatpush.bf16.msra.mxu0 %v4418
  %4800 = vmatpush.bf16.msra.mxu0 %v4417
  %4801 = vmatpush.bf16.msra.mxu0 %v4416
  %4802 = vmatpush.bf16.msra.mxu0 %v4415
  %4803 = vmatpush.bf16.msra.mxu0 %v4414
  %4804 = vmatpush.bf16.msra.mxu0 %v4413
  %4805 = vmatpush.bf16.msra.mxu0 %v4412
  %4806 = vmatmul.bf16.gmra.mxu0 %v4074
  %v4807 = vpop.f32.mrf.mxu0
  %v4808 = vadd.f32 %v4639, %v4807
  %v4809 = vpop.f32.mrf.mxu0
  %v4810 = vadd.f32 %v4641, %v4809
  %4811 = vmatmul.bf16.gmra.mxu0 %v4078
  %v4812 = vpop.f32.mrf.mxu0
  %v4813 = vadd.f32 %v4644, %v4812
  %v4814 = vpop.f32.mrf.mxu0
  %v4815 = vadd.f32 %v4646, %v4814
  %4816 = vmatmul.bf16.gmra.mxu0 %v4082
  %v4817 = vpop.f32.mrf.mxu0
  %v4818 = vadd.f32 %v4649, %v4817
  %v4819 = vpop.f32.mrf.mxu0
  %v4820 = vadd.f32 %v4651, %v4819
  %4821 = vmatmul.bf16.gmra.mxu0 %v4086
  %v4822 = vpop.f32.mrf.mxu0
  %v4823 = vadd.f32 %v4654, %v4822
  %v4824 = vpop.f32.mrf.mxu0
  %v4825 = vadd.f32 %v4656, %v4824
  %4826 = vmatmul.bf16.gmra.mxu0 %v4090
  %v4827 = vpop.f32.mrf.mxu0
  %v4828 = vadd.f32 %v4659, %v4827
  %v4829 = vpop.f32.mrf.mxu0
  %v4830 = vadd.f32 %v4661, %v4829
  %4831 = vmatmul.bf16.gmra.mxu0 %v4094
  %v4832 = vpop.f32.mrf.mxu0
  %v4833 = vadd.f32 %v4664, %v4832
  %v4834 = vpop.f32.mrf.mxu0
  %v4835 = vadd.f32 %v4666, %v4834
  %4836 = vmatmul.bf16.gmra.mxu0 %v4098
  %v4837 = vpop.f32.mrf.mxu0
  %v4838 = vadd.f32 %v4669, %v4837
  %v4839 = vpop.f32.mrf.mxu0
  %v4840 = vadd.f32 %v4671, %v4839
  %4841 = vmatmul.bf16.gmra.mxu0 %v4102
  %v4842 = vpop.f32.mrf.mxu0
  %v4843 = vadd.f32 %v4674, %v4842
  %v4844 = vpop.f32.mrf.mxu0
  %v4845 = vadd.f32 %v4676, %v4844
  %4846 = vmatmul.bf16.gmra.mxu0 %v4106
  %v4847 = vpop.f32.mrf.mxu0
  %v4848 = vadd.f32 %v4679, %v4847
  %v4849 = vpop.f32.mrf.mxu0
  %v4850 = vadd.f32 %v4681, %v4849
  %4851 = vmatmul.bf16.gmra.mxu0 %v4110
  %v4852 = vpop.f32.mrf.mxu0
  %v4853 = vadd.f32 %v4684, %v4852
  %v4854 = vpop.f32.mrf.mxu0
  %v4855 = vadd.f32 %v4686, %v4854
  %4856 = vmatmul.bf16.gmra.mxu0 %v4114
  %v4857 = vpop.f32.mrf.mxu0
  %v4858 = vadd.f32 %v4689, %v4857
  %v4859 = vpop.f32.mrf.mxu0
  %v4860 = vadd.f32 %v4691, %v4859
  %4861 = vmatmul.bf16.gmra.mxu0 %v4118
  %v4862 = vpop.f32.mrf.mxu0
  %v4863 = vadd.f32 %v4694, %v4862
  %v4864 = vpop.f32.mrf.mxu0
  %v4865 = vadd.f32 %v4696, %v4864
  %4866 = vmatmul.bf16.gmra.mxu0 %v4122
  %v4867 = vpop.f32.mrf.mxu0
  %v4868 = vadd.f32 %v4699, %v4867
  %v4869 = vpop.f32.mrf.mxu0
  %v4870 = vadd.f32 %v4701, %v4869
  %4871 = vmatmul.bf16.gmra.mxu0 %v4126
  %v4872 = vpop.f32.mrf.mxu0
  %v4873 = vadd.f32 %v4704, %v4872
  %v4874 = vpop.f32.mrf.mxu0
  %v4875 = vadd.f32 %v4706, %v4874
  %4876 = vmatmul.bf16.gmra.mxu0 %v4130
  %v4877 = vpop.f32.mrf.mxu0
  %v4878 = vadd.f32 %v4709, %v4877
  %v4879 = vpop.f32.mrf.mxu0
  %v4880 = vadd.f32 %v4711, %v4879
  %4881 = vmatmul.bf16.gmra.mxu0 %v4134
  %v4882 = vpop.f32.mrf.mxu0
  %v4883 = vadd.f32 %v4714, %v4882
  %v4884 = vpop.f32.mrf.mxu0
  %v4885 = vadd.f32 %v4716, %v4884
  %4886 = vmatmul.bf16.gmra.mxu0 %v4138
  %v4887 = vpop.f32.mrf.mxu0
  %v4888 = vadd.f32 %v4719, %v4887
  %v4889 = vpop.f32.mrf.mxu0
  %v4890 = vadd.f32 %v4721, %v4889
  %4891 = vmatmul.bf16.gmra.mxu0 %v4142
  %v4892 = vpop.f32.mrf.mxu0
  %v4893 = vadd.f32 %v4724, %v4892
  %v4894 = vpop.f32.mrf.mxu0
  %v4895 = vadd.f32 %v4726, %v4894
  %4896 = vmatmul.bf16.gmra.mxu0 %v4146
  %v4897 = vpop.f32.mrf.mxu0
  %v4898 = vadd.f32 %v4729, %v4897
  %v4899 = vpop.f32.mrf.mxu0
  %v4900 = vadd.f32 %v4731, %v4899
  %4901 = vmatmul.bf16.gmra.mxu0 %v4150
  %v4902 = vpop.f32.mrf.mxu0
  %v4903 = vadd.f32 %v4734, %v4902
  %v4904 = vpop.f32.mrf.mxu0
  %v4905 = vadd.f32 %v4736, %v4904
  %4906 = vmatmul.bf16.gmra.mxu0 %v4154
  %v4907 = vpop.f32.mrf.mxu0
  %v4908 = vadd.f32 %v4739, %v4907
  %v4909 = vpop.f32.mrf.mxu0
  %v4910 = vadd.f32 %v4741, %v4909
  %4911 = vmatmul.bf16.gmra.mxu0 %v4158
  %v4912 = vpop.f32.mrf.mxu0
  %v4913 = vadd.f32 %v4744, %v4912
  %v4914 = vpop.f32.mrf.mxu0
  %v4915 = vadd.f32 %v4746, %v4914
  %4916 = vmatmul.bf16.gmra.mxu0 %v4162
  %v4917 = vpop.f32.mrf.mxu0
  %v4918 = vadd.f32 %v4749, %v4917
  %v4919 = vpop.f32.mrf.mxu0
  %v4920 = vadd.f32 %v4751, %v4919
  %4921 = vmatmul.bf16.gmra.mxu0 %v4166
  %v4922 = vpop.f32.mrf.mxu0
  %v4923 = vadd.f32 %v4754, %v4922
  %v4924 = vpop.f32.mrf.mxu0
  %v4925 = vadd.f32 %v4756, %v4924
  %4926 = vmatmul.bf16.gmra.mxu0 %v4170
  %v4927 = vpop.f32.mrf.mxu0
  %v4928 = vadd.f32 %v4759, %v4927
  %v4929 = vpop.f32.mrf.mxu0
  %v4930 = vadd.f32 %v4761, %v4929
  %4931 = vmatmul.bf16.gmra.mxu0 %v4174
  %v4932 = vpop.f32.mrf.mxu0
  %v4933 = vadd.f32 %v4764, %v4932
  %v4934 = vpop.f32.mrf.mxu0
  %v4935 = vadd.f32 %v4766, %v4934
  %4936 = vmatmul.bf16.gmra.mxu0 %v4178
  %v4937 = vpop.f32.mrf.mxu0
  %v4938 = vadd.f32 %v4769, %v4937
  %v4939 = vpop.f32.mrf.mxu0
  %v4940 = vadd.f32 %v4771, %v4939
  %4941 = vmatmul.bf16.gmra.mxu0 %v4182
  %v4942 = vpop.f32.mrf.mxu0
  %v4943 = vadd.f32 %v4774, %v4942
  %v4944 = vpop.f32.mrf.mxu0
  %v4945 = vadd.f32 %v4776, %v4944
  %4946 = vmatmul.bf16.gmra.mxu0 %v4186
  %v4947 = vpop.f32.mrf.mxu0
  %v4948 = vadd.f32 %v4779, %v4947
  %v4949 = vpop.f32.mrf.mxu0
  %v4950 = vadd.f32 %v4781, %v4949
  %4951 = vmatmul.bf16.gmra.mxu0 %v4190
  %v4952 = vpop.f32.mrf.mxu0
  %v4953 = vadd.f32 %v4784, %v4952
  %v4954 = vpop.f32.mrf.mxu0
  %v4955 = vadd.f32 %v4786, %v4954
  %4956 = vmatmul.bf16.gmra.mxu0 %v4194
  %v4957 = vpop.f32.mrf.mxu0
  %v4958 = vadd.f32 %v4789, %v4957
  %v4959 = vpop.f32.mrf.mxu0
  %v4960 = vadd.f32 %v4791, %v4959
  %4961 = vmatmul.bf16.gmra.mxu0 %v4198
  %v4962 = vpop.f32.mrf.mxu0
  %v4963 = vadd.f32 %v4794, %v4962
  %v4964 = vpop.f32.mrf.mxu0
  %v4965 = vadd.f32 %v4796, %v4964
  %4966 = vdwg.mxu0
  %4967 = vmatpush.bf16.msra.mxu0 %v4427
  %4968 = vmatpush.bf16.msra.mxu0 %v4426
  %4969 = vmatpush.bf16.msra.mxu0 %v4425
  %4970 = vmatpush.bf16.msra.mxu0 %v4424
  %4971 = vmatpush.bf16.msra.mxu0 %v4423
  %4972 = vmatpush.bf16.msra.mxu0 %v4422
  %4973 = vmatpush.bf16.msra.mxu0 %v4421
  %4974 = vmatpush.bf16.msra.mxu0 %v4420
  %4975 = vmatmul.bf16.gmra.mxu0 %v4075
  %v4976 = vpop.f32.mrf.mxu0
  %v4977 = vadd.f32 %v4808, %v4976
  %v4978 = vpop.f32.mrf.mxu0
  %v4979 = vadd.f32 %v4810, %v4978
  %4980 = vmatmul.bf16.gmra.mxu0 %v4079
  %v4981 = vpop.f32.mrf.mxu0
  %v4982 = vadd.f32 %v4813, %v4981
  %v4983 = vpop.f32.mrf.mxu0
  %v4984 = vadd.f32 %v4815, %v4983
  %4985 = vmatmul.bf16.gmra.mxu0 %v4083
  %v4986 = vpop.f32.mrf.mxu0
  %v4987 = vadd.f32 %v4818, %v4986
  %v4988 = vpop.f32.mrf.mxu0
  %v4989 = vadd.f32 %v4820, %v4988
  %4990 = vmatmul.bf16.gmra.mxu0 %v4087
  %v4991 = vpop.f32.mrf.mxu0
  %v4992 = vadd.f32 %v4823, %v4991
  %v4993 = vpop.f32.mrf.mxu0
  %v4994 = vadd.f32 %v4825, %v4993
  %4995 = vmatmul.bf16.gmra.mxu0 %v4091
  %v4996 = vpop.f32.mrf.mxu0
  %v4997 = vadd.f32 %v4828, %v4996
  %v4998 = vpop.f32.mrf.mxu0
  %v4999 = vadd.f32 %v4830, %v4998
  %5000 = vmatmul.bf16.gmra.mxu0 %v4095
  %v5001 = vpop.f32.mrf.mxu0
  %v5002 = vadd.f32 %v4833, %v5001
  %v5003 = vpop.f32.mrf.mxu0
  %v5004 = vadd.f32 %v4835, %v5003
  %5005 = vmatmul.bf16.gmra.mxu0 %v4099
  %v5006 = vpop.f32.mrf.mxu0
  %v5007 = vadd.f32 %v4838, %v5006
  %v5008 = vpop.f32.mrf.mxu0
  %v5009 = vadd.f32 %v4840, %v5008
  %5010 = vmatmul.bf16.gmra.mxu0 %v4103
  %v5011 = vpop.f32.mrf.mxu0
  %v5012 = vadd.f32 %v4843, %v5011
  %v5013 = vpop.f32.mrf.mxu0
  %v5014 = vadd.f32 %v4845, %v5013
  %5015 = vmatmul.bf16.gmra.mxu0 %v4107
  %v5016 = vpop.f32.mrf.mxu0
  %v5017 = vadd.f32 %v4848, %v5016
  %v5018 = vpop.f32.mrf.mxu0
  %v5019 = vadd.f32 %v4850, %v5018
  %5020 = vmatmul.bf16.gmra.mxu0 %v4111
  %v5021 = vpop.f32.mrf.mxu0
  %v5022 = vadd.f32 %v4853, %v5021
  %v5023 = vpop.f32.mrf.mxu0
  %v5024 = vadd.f32 %v4855, %v5023
  %5025 = vmatmul.bf16.gmra.mxu0 %v4115
  %v5026 = vpop.f32.mrf.mxu0
  %v5027 = vadd.f32 %v4858, %v5026
  %v5028 = vpop.f32.mrf.mxu0
  %v5029 = vadd.f32 %v4860, %v5028
  %5030 = vmatmul.bf16.gmra.mxu0 %v4119
  %v5031 = vpop.f32.mrf.mxu0
  %v5032 = vadd.f32 %v4863, %v5031
  %v5033 = vpop.f32.mrf.mxu0
  %v5034 = vadd.f32 %v4865, %v5033
  %5035 = vmatmul.bf16.gmra.mxu0 %v4123
  %v5036 = vpop.f32.mrf.mxu0
  %v5037 = vadd.f32 %v4868, %v5036
  %v5038 = vpop.f32.mrf.mxu0
  %v5039 = vadd.f32 %v4870, %v5038
  %5040 = vmatmul.bf16.gmra.mxu0 %v4127
  %v5041 = vpop.f32.mrf.mxu0
  %v5042 = vadd.f32 %v4873, %v5041
  %v5043 = vpop.f32.mrf.mxu0
  %v5044 = vadd.f32 %v4875, %v5043
  %5045 = vmatmul.bf16.gmra.mxu0 %v4131
  %v5046 = vpop.f32.mrf.mxu0
  %v5047 = vadd.f32 %v4878, %v5046
  %v5048 = vpop.f32.mrf.mxu0
  %v5049 = vadd.f32 %v4880, %v5048
  %5050 = vmatmul.bf16.gmra.mxu0 %v4135
  %v5051 = vpop.f32.mrf.mxu0
  %v5052 = vadd.f32 %v4883, %v5051
  %v5053 = vpop.f32.mrf.mxu0
  %v5054 = vadd.f32 %v4885, %v5053
  %5055 = vmatmul.bf16.gmra.mxu0 %v4139
  %v5056 = vpop.f32.mrf.mxu0
  %v5057 = vadd.f32 %v4888, %v5056
  %v5058 = vpop.f32.mrf.mxu0
  %v5059 = vadd.f32 %v4890, %v5058
  %5060 = vmatmul.bf16.gmra.mxu0 %v4143
  %v5061 = vpop.f32.mrf.mxu0
  %v5062 = vadd.f32 %v4893, %v5061
  %v5063 = vpop.f32.mrf.mxu0
  %v5064 = vadd.f32 %v4895, %v5063
  %5065 = vmatmul.bf16.gmra.mxu0 %v4147
  %v5066 = vpop.f32.mrf.mxu0
  %v5067 = vadd.f32 %v4898, %v5066
  %v5068 = vpop.f32.mrf.mxu0
  %v5069 = vadd.f32 %v4900, %v5068
  %5070 = vmatmul.bf16.gmra.mxu0 %v4151
  %v5071 = vpop.f32.mrf.mxu0
  %v5072 = vadd.f32 %v4903, %v5071
  %v5073 = vpop.f32.mrf.mxu0
  %v5074 = vadd.f32 %v4905, %v5073
  %5075 = vmatmul.bf16.gmra.mxu0 %v4155
  %v5076 = vpop.f32.mrf.mxu0
  %v5077 = vadd.f32 %v4908, %v5076
  %v5078 = vpop.f32.mrf.mxu0
  %v5079 = vadd.f32 %v4910, %v5078
  %5080 = vmatmul.bf16.gmra.mxu0 %v4159
  %v5081 = vpop.f32.mrf.mxu0
  %v5082 = vadd.f32 %v4913, %v5081
  %v5083 = vpop.f32.mrf.mxu0
  %v5084 = vadd.f32 %v4915, %v5083
  %5085 = vmatmul.bf16.gmra.mxu0 %v4163
  %v5086 = vpop.f32.mrf.mxu0
  %v5087 = vadd.f32 %v4918, %v5086
  %v5088 = vpop.f32.mrf.mxu0
  %v5089 = vadd.f32 %v4920, %v5088
  %5090 = vmatmul.bf16.gmra.mxu0 %v4167
  %v5091 = vpop.f32.mrf.mxu0
  %v5092 = vadd.f32 %v4923, %v5091
  %v5093 = vpop.f32.mrf.mxu0
  %v5094 = vadd.f32 %v4925, %v5093
  %5095 = vmatmul.bf16.gmra.mxu0 %v4171
  %v5096 = vpop.f32.mrf.mxu0
  %v5097 = vadd.f32 %v4928, %v5096
  %v5098 = vpop.f32.mrf.mxu0
  %v5099 = vadd.f32 %v4930, %v5098
  %5100 = vmatmul.bf16.gmra.mxu0 %v4175
  %v5101 = vpop.f32.mrf.mxu0
  %v5102 = vadd.f32 %v4933, %v5101
  %v5103 = vpop.f32.mrf.mxu0
  %v5104 = vadd.f32 %v4935, %v5103
  %5105 = vmatmul.bf16.gmra.mxu0 %v4179
  %v5106 = vpop.f32.mrf.mxu0
  %v5107 = vadd.f32 %v4938, %v5106
  %v5108 = vpop.f32.mrf.mxu0
  %v5109 = vadd.f32 %v4940, %v5108
  %5110 = vmatmul.bf16.gmra.mxu0 %v4183
  %v5111 = vpop.f32.mrf.mxu0
  %v5112 = vadd.f32 %v4943, %v5111
  %v5113 = vpop.f32.mrf.mxu0
  %v5114 = vadd.f32 %v4945, %v5113
  %5115 = vmatmul.bf16.gmra.mxu0 %v4187
  %v5116 = vpop.f32.mrf.mxu0
  %v5117 = vadd.f32 %v4948, %v5116
  %v5118 = vpop.f32.mrf.mxu0
  %v5119 = vadd.f32 %v4950, %v5118
  %5120 = vmatmul.bf16.gmra.mxu0 %v4191
  %v5121 = vpop.f32.mrf.mxu0
  %v5122 = vadd.f32 %v4953, %v5121
  %v5123 = vpop.f32.mrf.mxu0
  %v5124 = vadd.f32 %v4955, %v5123
  %5125 = vmatmul.bf16.gmra.mxu0 %v4195
  %v5126 = vpop.f32.mrf.mxu0
  %v5127 = vadd.f32 %v4958, %v5126
  %v5128 = vpop.f32.mrf.mxu0
  %v5129 = vadd.f32 %v4960, %v5128
  %5130 = vmatmul.bf16.gmra.mxu0 %v4199
  %v5131 = vpop.f32.mrf.mxu0
  %v5132 = vadd.f32 %v4963, %v5131
  %v5133 = vpop.f32.mrf.mxu0
  %v5134 = vadd.f32 %v4965, %v5133
  %5135 = vdwg.mxu0
  %5136 = vst [vmem:[%s5] sm:$0xff] %v4977
  %5137 = vst [vmem:[%s5 + $0x8] sm:$0xff] %v4979
  %5138 = vst [vmem:[%s5 + $0x10] sm:$0xff] %v4982
  %5139 = vst [vmem:[%s5 + $0x18] sm:$0xff] %v4984
  %5140 = vst [vmem:[%s5 + $0x20] sm:$0xff] %v4987
  %5141 = vst [vmem:[%s5 + $0x28] sm:$0xff] %v4989
  %5142 = vst [vmem:[%s5 + $0x30] sm:$0xff] %v4992
  %5143 = vst [vmem:[%s5 + $0x38] sm:$0xff] %v4994
  %5144 = vst [vmem:[%s5 + $0x40] sm:$0xff] %v4997
  %5145 = vst [vmem:[%s5 + $0x48] sm:$0xff] %v4999
  %5146 = vst [vmem:[%s5 + $0x50] sm:$0xff] %v5002
  %5147 = vst [vmem:[%s5 + $0x58] sm:$0xff] %v5004
  %5148 = vst [vmem:[%s5 + $0x60] sm:$0xff] %v5007
  %5149 = vst [vmem:[%s5 + $0x68] sm:$0xff] %v5009
  %5150 = vst [vmem:[%s5 + $0x70] sm:$0xff] %v5012
  %5151 = vst [vmem:[%s5 + $0x78] sm:$0xff] %v5014
  %5152 = vst [vmem:[%s5 + $0x80] sm:$0xff] %v5017
  %5153 = vst [vmem:[%s5 + $0x88] sm:$0xff] %v5019
  %5154 = vst [vmem:[%s5 + $0x90] sm:$0xff] %v5022
  %5155 = vst [vmem:[%s5 + $0x98] sm:$0xff] %v5024
  %5156 = vst [vmem:[%s5 + $0xa0] sm:$0xff] %v5027
  %5157 = vst [vmem:[%s5 + $0xa8] sm:$0xff] %v5029
  %5158 = vst [vmem:[%s5 + $0xb0] sm:$0xff] %v5032
  %5159 = vst [vmem:[%s5 + $0xb8] sm:$0xff] %v5034
  %5160 = vst [vmem:[%s5 + $0xc0] sm:$0xff] %v5037
  %5161 = vst [vmem:[%s5 + $0xc8] sm:$0xff] %v5039
  %5162 = vst [vmem:[%s5 + $0xd0] sm:$0xff] %v5042
  %5163 = vst [vmem:[%s5 + $0xd8] sm:$0xff] %v5044
  %5164 = vst [vmem:[%s5 + $0xe0] sm:$0xff] %v5047
  %5165 = vst [vmem:[%s5 + $0xe8] sm:$0xff] %v5049
  %5166 = vst [vmem:[%s5 + $0xf0] sm:$0xff] %v5052
  %5167 = vst [vmem:[%s5 + $0xf8] sm:$0xff] %v5054
  %5168 = vst [vmem:[%s5 + $0x100] sm:$0xff] %v5057
  %5169 = vst [vmem:[%s5 + $0x108] sm:$0xff] %v5059
  %5170 = vst [vmem:[%s5 + $0x110] sm:$0xff] %v5062
  %5171 = vst [vmem:[%s5 + $0x118] sm:$0xff] %v5064
  %5172 = vst [vmem:[%s5 + $0x120] sm:$0xff] %v5067
  %5173 = vst [vmem:[%s5 + $0x128] sm:$0xff] %v5069
  %5174 = vst [vmem:[%s5 + $0x130] sm:$0xff] %v5072
  %5175 = vst [vmem:[%s5 + $0x138] sm:$0xff] %v5074
  %5176 = vst [vmem:[%s5 + $0x140] sm:$0xff] %v5077
  %5177 = vst [vmem:[%s5 + $0x148] sm:$0xff] %v5079
  %5178 = vst [vmem:[%s5 + $0x150] sm:$0xff] %v5082
  %5179 = vst [vmem:[%s5 + $0x158] sm:$0xff] %v5084
  %5180 = vst [vmem:[%s5 + $0x160] sm:$0xff] %v5087
  %5181 = vst [vmem:[%s5 + $0x168] sm:$0xff] %v5089
  %5182 = vst [vmem:[%s5 + $0x170] sm:$0xff] %v5092
  %5183 = vst [vmem:[%s5 + $0x178] sm:$0xff] %v5094
  %5184 = vst [vmem:[%s5 + $0x180] sm:$0xff] %v5097
  %5185 = vst [vmem:[%s5 + $0x188] sm:$0xff] %v5099
  %5186 = vst [vmem:[%s5 + $0x190] sm:$0xff] %v5102
  %5187 = vst [vmem:[%s5 + $0x198] sm:$0xff] %v5104
  %5188 = vst [vmem:[%s5 + $0x1a0] sm:$0xff] %v5107
  %5189 = vst [vmem:[%s5 + $0x1a8] sm:$0xff] %v5109
  %5190 = vst [vmem:[%s5 + $0x1b0] sm:$0xff] %v5112
  %5191 = vst [vmem:[%s5 + $0x1b8] sm:$0xff] %v5114
  %5192 = vst [vmem:[%s5 + $0x1c0] sm:$0xff] %v5117
  %5193 = vst [vmem:[%s5 + $0x1c8] sm:$0xff] %v5119
  %5194 = vst [vmem:[%s5 + $0x1d0] sm:$0xff] %v5122
  %5195 = vst [vmem:[%s5 + $0x1d8] sm:$0xff] %v5124
  %5196 = vst [vmem:[%s5 + $0x1e0] sm:$0xff] %v5127
  %5197 = vst [vmem:[%s5 + $0x1e8] sm:$0xff] %v5129
  %5198 = vst [vmem:[%s5 + $0x1f0] sm:$0xff] %v5132
  %5199 = vst [vmem:[%s5 + $0x1f8] sm:$0xff] %v5134
  // Predicated region
  $region22: #{classification_net.1} parent=0 // pred_check
    _
  $region23: #{classification_net.1} parent=0 // pred_check_branch
    %5201 = sbr.rel (0) target = $region25
  $region24: #{classification_net.1} parent=0 // pred_region
    _
  $region25: #{classification_net.1} parent=0 // pred_fallthru
    _
  // Predicated region
  $region26: #{classification_net.1} parent=0 // pred_check
    _
  $region27: #{classification_net.1} parent=0 // pred_check_branch
    %5203 = sbr.rel (0) target = $region29
  $region28: #{classification_net.1} parent=0 // pred_region
    _
  $region29: #{classification_net.1} parent=0 // pred_fallthru
    _

</llo_original>
